<compile_context>
chip_gen: v7x
topology: tpu7x:2x2x1
jax: 0.10.0
libtpu: 0.0.40
codegen_flags: <defaults>
</compile_context>

<pallas_src>
import numpy as np
import jax
import jax.numpy as jnp
from jax import lax
from jax.experimental import pallas as pl
from jax.experimental.pallas import tpu as pltpu


def _make_kernel(T, Bp, D, G, Kp):
    """G = 128 (lane-aligned gate block width), Kp = 128 (lane-dense class dim)."""

    def kernel(lens_ref, e_ref,
               wih_f_ref, gbias_f_ref, wih_b_ref, gbias_b_ref,
               whh_f_ref, bhhn_f_ref, whh_b_ref, bhhn_b_ref,
               wout_f_ref, wout_b_ref, bout_ref,
               out_ref,
               gi_fwd_ref, gi_bwd_ref, h_fwd_ref, h_bwd_ref):
        lens = lens_ref[...]                       # (Bp, 1) int32
        E = e_ref[...]                             # (T*Bp, D) f32, time-major rows

        # ---- hoisted input projections: one batched MXU matmul per direction ----
        # Gate blocks are [r | z | n], each padded to G=128 lanes.  r/z blocks already
        # include bih+bhh, n block bih only (bhh_n stays separate: it is gated by r).
        gi_fwd_ref[...] = (jnp.dot(E, wih_f_ref[...], preferred_element_type=jnp.float32)
                           + gbias_f_ref[...])
        gi_bwd_ref[...] = (jnp.dot(E, wih_b_ref[...], preferred_element_type=jnp.float32)
                           + gbias_b_ref[...])

        bhhn_f = bhhn_f_ref[...]                   # (1, G) zero-padded past D
        bhhn_b = bhhn_b_ref[...]

        # Hidden state kept lane-padded to G=128 (lanes D:G stay exactly 0 through the
        # recurrence: zero-padded weights/biases => n=0, z=0.5 there, h starts at 0).
        h_f = jnp.zeros((Bp, G), jnp.float32)
        h_b = jnp.zeros((Bp, G), jnp.float32)

        # ---- interleaved fwd/bwd recurrence: two independent chains per step ----
        for t in range(T):                         # fully unrolled (T static, small)
            tb = T - 1 - t
            gi_f = gi_fwd_ref[pl.ds(t * Bp, Bp), :]    # (Bp, 3G) aligned tile load
            gi_b = gi_bwd_ref[pl.ds(tb * Bp, Bp), :]
            gh_f = jnp.dot(h_f, whh_f_ref[...], preferred_element_type=jnp.float32)
            gh_b = jnp.dot(h_b, whh_b_ref[...], preferred_element_type=jnp.float32)

            # whole-vreg gate slices (offsets 0 / G / 2G)
            r_f = jax.nn.sigmoid(gi_f[:, 0:G] + gh_f[:, 0:G])
            z_f = jax.nn.sigmoid(gi_f[:, G:2 * G] + gh_f[:, G:2 * G])
            n_f = jnp.tanh(gi_f[:, 2 * G:3 * G] + r_f * (gh_f[:, 2 * G:3 * G] + bhhn_f))
            hn_f = n_f + z_f * (h_f - n_f)         # == (1-z)*n + z*h

            r_b = jax.nn.sigmoid(gi_b[:, 0:G] + gh_b[:, 0:G])
            z_b = jax.nn.sigmoid(gi_b[:, G:2 * G] + gh_b[:, G:2 * G])
            n_b = jnp.tanh(gi_b[:, 2 * G:3 * G] + r_b * (gh_b[:, 2 * G:3 * G] + bhhn_b))
            hn_b = n_b + z_b * (h_b - n_b)

            vf = t < lens                          # (Bp, 1); padded rows (len=0) always False
            vb = tb < lens
            h_f = jnp.where(vf, hn_f, h_f)         # freeze state past length (packed sem.)
            h_b = jnp.where(vb, hn_b, h_b)
            # pad_packed emits zeros; stage per-step outputs to VMEM (bounded live ranges)
            h_fwd_ref[pl.ds(t * Bp, Bp), :] = jnp.where(vf, hn_f, 0.0)
            h_bwd_ref[pl.ds(tb * Bp, Bp), :] = jnp.where(vb, hn_b, 0.0)

        # ---- batched head: two independent dots (no lane concat), lane-dense Kp ----
        logits = (jnp.dot(h_fwd_ref[...], wout_f_ref[...], preferred_element_type=jnp.float32)
                  + jnp.dot(h_bwd_ref[...], wout_b_ref[...], preferred_element_type=jnp.float32)
                  + bout_ref[...])                 # padded class cols are -1e9
        m = jnp.max(logits, axis=-1, keepdims=True)
        shifted = logits - m
        lse = jnp.log(jnp.sum(jnp.exp(shifted), axis=-1, keepdims=True))
        out_ref[...] = shifted - lse               # (T*Bp, Kp)

    return kernel


def rnn_ner_forward(X, X_lens, params):
    B, T = X.shape
    D = params['embedding'].shape[1]
    K = params['b_out'].shape[-1]
    G = 128                                        # lane-aligned gate block width
    Kp = 128                                       # lane-dense padded class dim
    Bp = max(8, ((B + 7) // 8) * 8)                # fill sublanes; pad rows have len=0

    # Embedding gather + layout plumbing is glue; matmuls/recurrence/softmax are in-kernel.
    emb = params['embedding'][X].astype(jnp.float32)           # (B, T, D)
    emb = jnp.pad(emb, ((0, Bp - B), (0, 0), (0, 0)))          # (Bp, T, D)
    E = jnp.transpose(emb, (1, 0, 2)).reshape(T * Bp, D)       # time-major flat (T*Bp, D)
    lens = jnp.pad(X_lens.astype(jnp.int32), (0, Bp - B)).reshape(Bp, 1)

    # --- weight repacking (layout plumbing, done once in the wrapper) ---
    def pad_lanes(w, width):                                   # (..., d) -> (..., width)
        return jnp.pad(w, ((0, 0), (0, width - w.shape[-1])))

    def cat3_lane_padded(w3, rows):                            # (3,r,D) -> (rows, 3G), gate g at [gG, gG+D)
        w = jnp.concatenate([pad_lanes(w3[g], G) for g in range(3)], axis=1)
        return jnp.pad(w, ((0, rows - w.shape[0]), (0, 0)))

    def gate_bias(bih, bhh):                                   # (1, 3G): [bih_r+bhh_r | bih_z+bhh_z | bih_n]
        return jnp.concatenate([pad_lanes(bih[0] + bhh[0], G),
                                pad_lanes(bih[1] + bhh[1], G),
                                pad_lanes(bih[2], G)], axis=1)

    wih_f = cat3_lane_padded(params['wih_f'], D)               # (D, 3G)
    wih_b = cat3_lane_padded(params['wih_b'], D)
    whh_f = cat3_lane_padded(params['whh_f'], G)               # (G, 3G), rows D:G zero
    whh_b = cat3_lane_padded(params['whh_b'], G)
    gbias_f = gate_bias(params['bih_f'], params['bhh_f'])      # (1, 3G)
    gbias_b = gate_bias(params['bih_b'], params['bhh_b'])
    bhhn_f = pad_lanes(params['bhh_f'][2], G)                  # (1, G)
    bhhn_b = pad_lanes(params['bhh_b'][2], G)
    wout_f = jnp.pad(params['w_out_f'], ((0, G - D), (0, Kp - K)))   # (G, Kp), zero pad
    wout_b = jnp.pad(params['w_out_b'], ((0, G - D), (0, Kp - K)))
    bout = jnp.pad(params['b_out'], ((0, 0), (0, Kp - K)),
                   constant_values=-1e9)                       # padded logits can't win max/lse

    kernel = _make_kernel(T, Bp, D, G, Kp)
    vmem = pl.BlockSpec(memory_space=pltpu.MemorySpace.VMEM)

    out_flat = pl.pallas_call(
        kernel,
        out_shape=jax.ShapeDtypeStruct((T * Bp, Kp), jnp.float32),
        in_specs=[vmem] * 13,
        out_specs=vmem,
        scratch_shapes=[pltpu.VMEM((T * Bp, 3 * G), jnp.float32),   # GI fwd
                        pltpu.VMEM((T * Bp, 3 * G), jnp.float32),   # GI bwd
                        pltpu.VMEM((T * Bp, G), jnp.float32),       # fwd hidden outputs
                        pltpu.VMEM((T * Bp, G), jnp.float32)],      # bwd hidden outputs
    )(lens, E, wih_f, gbias_f, wih_b, gbias_b,
      whh_f, bhhn_f, whh_b, bhhn_b, wout_f, wout_b, bout)

    out = out_flat.reshape(T, Bp, Kp)[:, :B, :K]               # drop batch/class padding
    return jnp.transpose(out, (1, 0, 2))                       # back to (B, T, K)


def reference_forward(X, X_lens, params):
    """Pure-JAX reference of the same semantics, for verification."""
    B, T = X.shape
    D = params['embedding'].shape[1]
    emb = params['embedding'][X].astype(jnp.float32)           # (B, T, D)

    def run_dir(wih, whh, bih, bhh, reverse):
        xs = jnp.transpose(emb, (1, 0, 2))                     # (T, B, D)
        ts = jnp.arange(T)
        if reverse:
            xs, ts = xs[::-1], ts[::-1]

        def step(h, inp):
            x, t = inp
            gi_r = x @ wih[0] + bih[0]; gh_r = h @ whh[0] + bhh[0]
            gi_z = x @ wih[1] + bih[1]; gh_z = h @ whh[1] + bhh[1]
            gi_n = x @ wih[2] + bih[2]; gh_n = h @ whh[2] + bhh[2]
            r = jax.nn.sigmoid(gi_r + gh_r)
            z = jax.nn.sigmoid(gi_z + gh_z)
            n = jnp.tanh(gi_n + r * gh_n)
            h_new = (1.0 - z) * n + z * h
            valid = (t < X_lens)[:, None]
            return jnp.where(valid, h_new, h), jnp.where(valid, h_new, 0.0)

        _, ys = lax.scan(step, jnp.zeros((B, D), jnp.float32), (xs, ts))
        if reverse:
            ys = ys[::-1]
        return jnp.transpose(ys, (1, 0, 2))                    # (B, T, D)

    fwd = run_dir(params['wih_f'], params['whh_f'], params['bih_f'], params['bhh_f'], False)
    bwd = run_dir(params['wih_b'], params['whh_b'], params['bih_b'], params['bhh_b'], True)
    logits = fwd @ params['w_out_f'] + bwd @ params['w_out_b'] + params['b_out']
    return jax.nn.log_softmax(logits, axis=-1)


if __name__ == "__main__":
    vocab_size, embed_dim, num_tags = 50, 32, 9
    B, T = 2, 8

    key = jax.random.PRNGKey(0)
    keys = jax.random.split(key, 16)
    kg = 1.0 / np.sqrt(embed_dim)          # GRU init bound (PyTorch-style uniform)
    kl = 1.0 / np.sqrt(2 * embed_dim)      # Linear init bound

    def uni(kk, shape, bound):
        return jax.random.uniform(kk, shape, jnp.float32, -bound, bound)

    params = {
        'embedding': jax.random.normal(keys[0], (vocab_size, embed_dim), jnp.float32),
        'wih_f': uni(keys[1], (3, embed_dim, embed_dim), kg),
        'whh_f': uni(keys[2], (3, embed_dim, embed_dim), kg),
        'bih_f': uni(keys[3], (3, 1, embed_dim), kg),
        'bhh_f': uni(keys[4], (3, 1, embed_dim), kg),
        'wih_b': uni(keys[5], (3, embed_dim, embed_dim), kg),
        'whh_b': uni(keys[6], (3, embed_dim, embed_dim), kg),
        'bih_b': uni(keys[7], (3, 1, embed_dim), kg),
        'bhh_b': uni(keys[8], (3, 1, embed_dim), kg),
        'w_out_f': uni(keys[9], (embed_dim, num_tags), kl),
        'w_out_b': uni(keys[10], (embed_dim, num_tags), kl),
        'b_out': uni(keys[11], (1, num_tags), kl),
    }

    X = jax.random.randint(keys[12], (B, T), 0, vocab_size)
    X_lens = jnp.array([T, 5], dtype=jnp.int32)   # max length == T

    out = rnn_ner_forward(X, X_lens, params)
    out = jax.block_until_ready(out)

    ref = reference_forward(X, X_lens, params)
    np.testing.assert_allclose(np.asarray(out), np.asarray(ref), atol=1e-4, rtol=1e-4)
    assert out.shape == (B, T, num_tags)
    print("KERNEL_OK")
</pallas_src>

<mosaic_0001>
module attributes {stable_mosaic.version = 11 : i64} {
  func.func @kernel(%arg0: memref<8x1xi32, #tpu.memory_space<vmem>>, %arg1: memref<64x32xf32, #tpu.memory_space<vmem>>, %arg2: memref<32x384xf32, #tpu.memory_space<vmem>>, %arg3: memref<1x384xf32, #tpu.memory_space<vmem>>, %arg4: memref<32x384xf32, #tpu.memory_space<vmem>>, %arg5: memref<1x384xf32, #tpu.memory_space<vmem>>, %arg6: memref<128x384xf32, #tpu.memory_space<vmem>>, %arg7: memref<1x128xf32, #tpu.memory_space<vmem>>, %arg8: memref<128x384xf32, #tpu.memory_space<vmem>>, %arg9: memref<1x128xf32, #tpu.memory_space<vmem>>, %arg10: memref<128x128xf32, #tpu.memory_space<vmem>>, %arg11: memref<128x128xf32, #tpu.memory_space<vmem>>, %arg12: memref<1x128xf32, #tpu.memory_space<vmem>>, %arg13: memref<64x128xf32, #tpu.memory_space<vmem>>, %arg14: memref<64x384xf32, #tpu.memory_space<vmem>>, %arg15: memref<64x384xf32, #tpu.memory_space<vmem>>, %arg16: memref<64x128xf32, #tpu.memory_space<vmem>>, %arg17: memref<64x128xf32, #tpu.memory_space<vmem>>) attributes {dimension_semantics = [], scalar_prefetch = 0 : i64, scratch_operands = 4 : i64, tpu.core_type = #tpu.core_type<tc>} {
    %c0 = arith.constant 0 : index
    %c0_0 = arith.constant 0 : index
    %0 = vector.load %arg0[%c0, %c0_0] : memref<8x1xi32, #tpu.memory_space<vmem>>, vector<8x1xi32>
    %c0_1 = arith.constant 0 : index
    %c0_2 = arith.constant 0 : index
    %1 = vector.load %arg1[%c0_1, %c0_2] : memref<64x32xf32, #tpu.memory_space<vmem>>, vector<64x32xf32>
    %c0_3 = arith.constant 0 : index
    %c0_4 = arith.constant 0 : index
    %2 = vector.load %arg2[%c0_3, %c0_4] : memref<32x384xf32, #tpu.memory_space<vmem>>, vector<32x384xf32>
    %cst = arith.constant dense<0.000000e+00> : vector<64x384xf32>
    %3 = tpu.matmul %1, %2, %cst {dimension_numbers = #tpu.dot_dimension_numbers<[1], [0], [0], [1], [0, 0, 1, 1], [], []>} : vector<64x32xf32>, vector<32x384xf32>, vector<64x384xf32> -> vector<64x384xf32>
    %c0_5 = arith.constant 0 : index
    %c0_6 = arith.constant 0 : index
    %4 = vector.load %arg3[%c0_5, %c0_6] : memref<1x384xf32, #tpu.memory_space<vmem>>, vector<1x384xf32>
    %5 = vector.broadcast %4 : vector<1x384xf32> to vector<64x384xf32>
    %6 = arith.addf %3, %5 : vector<64x384xf32>
    %c0_7 = arith.constant 0 : index
    %c0_8 = arith.constant 0 : index
    %7 = vector.load %arg14[%c0_7, %c0_8] : memref<64x384xf32, #tpu.memory_space<vmem>>, vector<64x384xf32>
    tpu.vector_store %arg14[%c0_7, %c0_8], %6 {strides = array<i32>} : memref<64x384xf32, #tpu.memory_space<vmem>>, vector<64x384xf32>,
    %c0_9 = arith.constant 0 : index
    %c0_10 = arith.constant 0 : index
    %8 = vector.load %arg4[%c0_9, %c0_10] : memref<32x384xf32, #tpu.memory_space<vmem>>, vector<32x384xf32>
    %cst_11 = arith.constant dense<0.000000e+00> : vector<64x384xf32>
    %9 = tpu.matmul %1, %8, %cst_11 {dimension_numbers = #tpu.dot_dimension_numbers<[1], [0], [0], [1], [0, 0, 1, 1], [], []>} : vector<64x32xf32>, vector<32x384xf32>, vector<64x384xf32> -> vector<64x384xf32>
    %c0_12 = arith.constant 0 : index
    %c0_13 = arith.constant 0 : index
    %10 = vector.load %arg5[%c0_12, %c0_13] : memref<1x384xf32, #tpu.memory_space<vmem>>, vector<1x384xf32>
    %11 = vector.broadcast %10 : vector<1x384xf32> to vector<64x384xf32>
    %12 = arith.addf %9, %11 : vector<64x384xf32>
    %c0_14 = arith.constant 0 : index
    %c0_15 = arith.constant 0 : index
    %13 = vector.load %arg15[%c0_14, %c0_15] : memref<64x384xf32, #tpu.memory_space<vmem>>, vector<64x384xf32>
    tpu.vector_store %arg15[%c0_14, %c0_15], %12 {strides = array<i32>} : memref<64x384xf32, #tpu.memory_space<vmem>>, vector<64x384xf32>,
    %c0_16 = arith.constant 0 : index
    %c0_17 = arith.constant 0 : index
    %14 = vector.load %arg7[%c0_16, %c0_17] : memref<1x128xf32, #tpu.memory_space<vmem>>, vector<1x128xf32>
    %c0_18 = arith.constant 0 : index
    %c0_19 = arith.constant 0 : index
    %15 = vector.load %arg9[%c0_18, %c0_19] : memref<1x128xf32, #tpu.memory_space<vmem>>, vector<1x128xf32>
    %cst_20 = arith.constant 0.000000e+00 : f32
    %16 = vector.broadcast %cst_20 : f32 to vector<8x128xf32>
    %cst_21 = arith.constant 0.000000e+00 : f32
    %17 = vector.broadcast %cst_21 : f32 to vector<8x128xf32>
    %c0_22 = arith.constant 0 : index
    %c0_23 = arith.constant 0 : index
    %18 = vector.load %arg14[%c0_22, %c0_23] : memref<64x384xf32, #tpu.memory_space<vmem>>, vector<8x384xf32>
    %c56 = arith.constant 56 : index
    %c0_24 = arith.constant 0 : index
    %19 = vector.load %arg15[%c56, %c0_24] : memref<64x384xf32, #tpu.memory_space<vmem>>, vector<8x384xf32>
    %c0_25 = arith.constant 0 : index
    %c0_26 = arith.constant 0 : index
    %20 = vector.load %arg6[%c0_25, %c0_26] : memref<128x384xf32, #tpu.memory_space<vmem>>, vector<128x384xf32>
    %cst_27 = arith.constant dense<0.000000e+00> : vector<8x384xf32>
    %21 = tpu.matmul %16, %20, %cst_27 {dimension_numbers = #tpu.dot_dimension_numbers<[1], [0], [0], [1], [0, 0, 1, 1], [], []>} : vector<8x128xf32>, vector<128x384xf32>, vector<8x384xf32> -> vector<8x384xf32>
    %c0_28 = arith.constant 0 : index
    %c0_29 = arith.constant 0 : index
    %22 = vector.load %arg8[%c0_28, %c0_29] : memref<128x384xf32, #tpu.memory_space<vmem>>, vector<128x384xf32>
    %cst_30 = arith.constant dense<0.000000e+00> : vector<8x384xf32>
    %23 = tpu.matmul %17, %22, %cst_30 {dimension_numbers = #tpu.dot_dimension_numbers<[1], [0], [0], [1], [0, 0, 1, 1], [], []>} : vector<8x128xf32>, vector<128x384xf32>, vector<8x384xf32> -> vector<8x384xf32>
    %24 = vector.extract_strided_slice %18 {offsets = [0, 0], sizes = [8, 128], strides = [1, 1]} : vector<8x384xf32> to vector<8x128xf32>
    %25 = vector.extract_strided_slice %21 {offsets = [0, 0], sizes = [8, 128], strides = [1, 1]} : vector<8x384xf32> to vector<8x128xf32>
    %26 = arith.addf %24, %25 : vector<8x128xf32>
    %27 = arith.negf %26 : vector<8x128xf32>
    %28 = math.exp %27 : vector<8x128xf32>
    %cst_31 = arith.constant 1.000000e+00 : f32
    %29 = vector.broadcast %cst_31 : f32 to vector<8x128xf32>
    %30 = arith.addf %29, %28 : vector<8x128xf32>
    %31 = arith.divf %29, %30 : vector<8x128xf32>
    %32 = vector.extract_strided_slice %18 {offsets = [0, 128], sizes = [8, 128], strides = [1, 1]} : vector<8x384xf32> to vector<8x128xf32>
    %33 = vector.extract_strided_slice %21 {offsets = [0, 128], sizes = [8, 128], strides = [1, 1]} : vector<8x384xf32> to vector<8x128xf32>
    %34 = arith.addf %32, %33 : vector<8x128xf32>
    %35 = arith.negf %34 : vector<8x128xf32>
    %36 = math.exp %35 : vector<8x128xf32>
    %cst_32 = arith.constant 1.000000e+00 : f32
    %37 = vector.broadcast %cst_32 : f32 to vector<8x128xf32>
    %38 = arith.addf %37, %36 : vector<8x128xf32>
    %39 = arith.divf %37, %38 : vector<8x128xf32>
    %40 = vector.extract_strided_slice %18 {offsets = [0, 256], sizes = [8, 128], strides = [1, 1]} : vector<8x384xf32> to vector<8x128xf32>
    %41 = vector.extract_strided_slice %21 {offsets = [0, 256], sizes = [8, 128], strides = [1, 1]} : vector<8x384xf32> to vector<8x128xf32>
    %42 = vector.broadcast %14 : vector<1x128xf32> to vector<8x128xf32>
    %43 = arith.addf %41, %42 : vector<8x128xf32>
    %44 = arith.mulf %31, %43 : vector<8x128xf32>
    %45 = arith.addf %40, %44 : vector<8x128xf32>
    %46 = math.tanh %45 : vector<8x128xf32>
    %47 = arith.subf %16, %46 : vector<8x128xf32>
    %48 = arith.mulf %39, %47 : vector<8x128xf32>
    %49 = arith.addf %46, %48 : vector<8x128xf32>
    %50 = vector.extract_strided_slice %19 {offsets = [0, 0], sizes = [8, 128], strides = [1, 1]} : vector<8x384xf32> to vector<8x128xf32>
    %51 = vector.extract_strided_slice %23 {offsets = [0, 0], sizes = [8, 128], strides = [1, 1]} : vector<8x384xf32> to vector<8x128xf32>
    %52 = arith.addf %50, %51 : vector<8x128xf32>
    %53 = arith.negf %52 : vector<8x128xf32>
    %54 = math.exp %53 : vector<8x128xf32>
    %cst_33 = arith.constant 1.000000e+00 : f32
    %55 = vector.broadcast %cst_33 : f32 to vector<8x128xf32>
    %56 = arith.addf %55, %54 : vector<8x128xf32>
    %57 = arith.divf %55, %56 : vector<8x128xf32>
    %58 = vector.extract_strided_slice %19 {offsets = [0, 128], sizes = [8, 128], strides = [1, 1]} : vector<8x384xf32> to vector<8x128xf32>
    %59 = vector.extract_strided_slice %23 {offsets = [0, 128], sizes = [8, 128], strides = [1, 1]} : vector<8x384xf32> to vector<8x128xf32>
    %60 = arith.addf %58, %59 : vector<8x128xf32>
    %61 = arith.negf %60 : vector<8x128xf32>
    %62 = math.exp %61 : vector<8x128xf32>
    %cst_34 = arith.constant 1.000000e+00 : f32
    %63 = vector.broadcast %cst_34 : f32 to vector<8x128xf32>
    %64 = arith.addf %63, %62 : vector<8x128xf32>
    %65 = arith.divf %63, %64 : vector<8x128xf32>
    %66 = vector.extract_strided_slice %19 {offsets = [0, 256], sizes = [8, 128], strides = [1, 1]} : vector<8x384xf32> to vector<8x128xf32>
    %67 = vector.extract_strided_slice %23 {offsets = [0, 256], sizes = [8, 128], strides = [1, 1]} : vector<8x384xf32> to vector<8x128xf32>
    %68 = vector.broadcast %15 : vector<1x128xf32> to vector<8x128xf32>
    %69 = arith.addf %67, %68 : vector<8x128xf32>
    %70 = arith.mulf %57, %69 : vector<8x128xf32>
    %71 = arith.addf %66, %70 : vector<8x128xf32>
    %72 = math.tanh %71 : vector<8x128xf32>
    %73 = arith.subf %17, %72 : vector<8x128xf32>
    %74 = arith.mulf %65, %73 : vector<8x128xf32>
    %75 = arith.addf %72, %74 : vector<8x128xf32>
    %c0_i32 = arith.constant 0 : i32
    %76 = vector.broadcast %c0_i32 : i32 to vector<8x1xi32>
    %77 = arith.cmpi sgt, %0, %76 : vector<8x1xi32>
    %c7_i32 = arith.constant 7 : i32
    %78 = vector.broadcast %c7_i32 : i32 to vector<8x1xi32>
    %79 = arith.cmpi sgt, %0, %78 : vector<8x1xi32>
    %80 = vector.shape_cast %77 : vector<8x1xi1> to vector<8x1xi1>
    %81 = vector.broadcast %80 : vector<8x1xi1> to vector<8x128xi1>
    %82 = arith.select %81, %49, %16 : vector<8x128xi1>, vector<8x128xf32>
    %83 = vector.shape_cast %79 : vector<8x1xi1> to vector<8x1xi1>
    %84 = vector.broadcast %83 : vector<8x1xi1> to vector<8x128xi1>
    %85 = arith.select %84, %75, %17 : vector<8x128xi1>, vector<8x128xf32>
    %cst_35 = arith.constant 0.000000e+00 : f32
    %86 = vector.shape_cast %77 : vector<8x1xi1> to vector<8x1xi1>
    %87 = vector.broadcast %86 : vector<8x1xi1> to vector<8x128xi1>
    %88 = vector.broadcast %cst_35 : f32 to vector<8x128xf32>
    %89 = arith.select %87, %49, %88 : vector<8x128xi1>, vector<8x128xf32>
    %c0_36 = arith.constant 0 : index
    %c0_37 = arith.constant 0 : index
    %90 = vector.load %arg16[%c0_36, %c0_37] : memref<64x128xf32, #tpu.memory_space<vmem>>, vector<8x128xf32>
    tpu.vector_store %arg16[%c0_36, %c0_37], %89 {strides = array<i32>} : memref<64x128xf32, #tpu.memory_space<vmem>>, vector<8x128xf32>,
    %cst_38 = arith.constant 0.000000e+00 : f32
    %91 = vector.shape_cast %79 : vector<8x1xi1> to vector<8x1xi1>
    %92 = vector.broadcast %91 : vector<8x1xi1> to vector<8x128xi1>
    %93 = vector.broadcast %cst_38 : f32 to vector<8x128xf32>
    %94 = arith.select %92, %75, %93 : vector<8x128xi1>, vector<8x128xf32>
    %c56_39 = arith.constant 56 : index
    %c0_40 = arith.constant 0 : index
    %95 = vector.load %arg17[%c56_39, %c0_40] : memref<64x128xf32, #tpu.memory_space<vmem>>, vector<8x128xf32>
    tpu.vector_store %arg17[%c56_39, %c0_40], %94 {strides = array<i32>} : memref<64x128xf32, #tpu.memory_space<vmem>>, vector<8x128xf32>,
    %c8 = arith.constant 8 : index
    %c0_41 = arith.constant 0 : index
    %96 = vector.load %arg14[%c8, %c0_41] : memref<64x384xf32, #tpu.memory_space<vmem>>, vector<8x384xf32>
    %c48 = arith.constant 48 : index
    %c0_42 = arith.constant 0 : index
    %97 = vector.load %arg15[%c48, %c0_42] : memref<64x384xf32, #tpu.memory_space<vmem>>, vector<8x384xf32>
    %c0_43 = arith.constant 0 : index
    %c0_44 = arith.constant 0 : index
    %98 = vector.load %arg6[%c0_43, %c0_44] : memref<128x384xf32, #tpu.memory_space<vmem>>, vector<128x384xf32>
    %cst_45 = arith.constant dense<0.000000e+00> : vector<8x384xf32>
    %99 = tpu.matmul %82, %98, %cst_45 {dimension_numbers = #tpu.dot_dimension_numbers<[1], [0], [0], [1], [0, 0, 1, 1], [], []>} : vector<8x128xf32>, vector<128x384xf32>, vector<8x384xf32> -> vector<8x384xf32>
    %c0_46 = arith.constant 0 : index
    %c0_47 = arith.constant 0 : index
    %100 = vector.load %arg8[%c0_46, %c0_47] : memref<128x384xf32, #tpu.memory_space<vmem>>, vector<128x384xf32>
    %cst_48 = arith.constant dense<0.000000e+00> : vector<8x384xf32>
    %101 = tpu.matmul %85, %100, %cst_48 {dimension_numbers = #tpu.dot_dimension_numbers<[1], [0], [0], [1], [0, 0, 1, 1], [], []>} : vector<8x128xf32>, vector<128x384xf32>, vector<8x384xf32> -> vector<8x384xf32>
    %102 = vector.extract_strided_slice %96 {offsets = [0, 0], sizes = [8, 128], strides = [1, 1]} : vector<8x384xf32> to vector<8x128xf32>
    %103 = vector.extract_strided_slice %99 {offsets = [0, 0], sizes = [8, 128], strides = [1, 1]} : vector<8x384xf32> to vector<8x128xf32>
    %104 = arith.addf %102, %103 : vector<8x128xf32>
    %105 = arith.negf %104 : vector<8x128xf32>
    %106 = math.exp %105 : vector<8x128xf32>
    %cst_49 = arith.constant 1.000000e+00 : f32
    %107 = vector.broadcast %cst_49 : f32 to vector<8x128xf32>
    %108 = arith.addf %107, %106 : vector<8x128xf32>
    %109 = arith.divf %107, %108 : vector<8x128xf32>
    %110 = vector.extract_strided_slice %96 {offsets = [0, 128], sizes = [8, 128], strides = [1, 1]} : vector<8x384xf32> to vector<8x128xf32>
    %111 = vector.extract_strided_slice %99 {offsets = [0, 128], sizes = [8, 128], strides = [1, 1]} : vector<8x384xf32> to vector<8x128xf32>
    %112 = arith.addf %110, %111 : vector<8x128xf32>
    %113 = arith.negf %112 : vector<8x128xf32>
    %114 = math.exp %113 : vector<8x128xf32>
    %cst_50 = arith.constant 1.000000e+00 : f32
    %115 = vector.broadcast %cst_50 : f32 to vector<8x128xf32>
    %116 = arith.addf %115, %114 : vector<8x128xf32>
    %117 = arith.divf %115, %116 : vector<8x128xf32>
    %118 = vector.extract_strided_slice %96 {offsets = [0, 256], sizes = [8, 128], strides = [1, 1]} : vector<8x384xf32> to vector<8x128xf32>
    %119 = vector.extract_strided_slice %99 {offsets = [0, 256], sizes = [8, 128], strides = [1, 1]} : vector<8x384xf32> to vector<8x128xf32>
    %120 = vector.broadcast %14 : vector<1x128xf32> to vector<8x128xf32>
    %121 = arith.addf %119, %120 : vector<8x128xf32>
    %122 = arith.mulf %109, %121 : vector<8x128xf32>
    %123 = arith.addf %118, %122 : vector<8x128xf32>
    %124 = math.tanh %123 : vector<8x128xf32>
    %125 = arith.subf %82, %124 : vector<8x128xf32>
    %126 = arith.mulf %117, %125 : vector<8x128xf32>
    %127 = arith.addf %124, %126 : vector<8x128xf32>
    %128 = vector.extract_strided_slice %97 {offsets = [0, 0], sizes = [8, 128], strides = [1, 1]} : vector<8x384xf32> to vector<8x128xf32>
    %129 = vector.extract_strided_slice %101 {offsets = [0, 0], sizes = [8, 128], strides = [1, 1]} : vector<8x384xf32> to vector<8x128xf32>
    %130 = arith.addf %128, %129 : vector<8x128xf32>
    %131 = arith.negf %130 : vector<8x128xf32>
    %132 = math.exp %131 : vector<8x128xf32>
    %cst_51 = arith.constant 1.000000e+00 : f32
    %133 = vector.broadcast %cst_51 : f32 to vector<8x128xf32>
    %134 = arith.addf %133, %132 : vector<8x128xf32>
    %135 = arith.divf %133, %134 : vector<8x128xf32>
    %136 = vector.extract_strided_slice %97 {offsets = [0, 128], sizes = [8, 128], strides = [1, 1]} : vector<8x384xf32> to vector<8x128xf32>
    %137 = vector.extract_strided_slice %101 {offsets = [0, 128], sizes = [8, 128], strides = [1, 1]} : vector<8x384xf32> to vector<8x128xf32>
    %138 = arith.addf %136, %137 : vector<8x128xf32>
    %139 = arith.negf %138 : vector<8x128xf32>
    %140 = math.exp %139 : vector<8x128xf32>
    %cst_52 = arith.constant 1.000000e+00 : f32
    %141 = vector.broadcast %cst_52 : f32 to vector<8x128xf32>
    %142 = arith.addf %141, %140 : vector<8x128xf32>
    %143 = arith.divf %141, %142 : vector<8x128xf32>
    %144 = vector.extract_strided_slice %97 {offsets = [0, 256], sizes = [8, 128], strides = [1, 1]} : vector<8x384xf32> to vector<8x128xf32>
    %145 = vector.extract_strided_slice %101 {offsets = [0, 256], sizes = [8, 128], strides = [1, 1]} : vector<8x384xf32> to vector<8x128xf32>
    %146 = vector.broadcast %15 : vector<1x128xf32> to vector<8x128xf32>
    %147 = arith.addf %145, %146 : vector<8x128xf32>
    %148 = arith.mulf %135, %147 : vector<8x128xf32>
    %149 = arith.addf %144, %148 : vector<8x128xf32>
    %150 = math.tanh %149 : vector<8x128xf32>
    %151 = arith.subf %85, %150 : vector<8x128xf32>
    %152 = arith.mulf %143, %151 : vector<8x128xf32>
    %153 = arith.addf %150, %152 : vector<8x128xf32>
    %c1_i32 = arith.constant 1 : i32
    %154 = vector.broadcast %c1_i32 : i32 to vector<8x1xi32>
    %155 = arith.cmpi sgt, %0, %154 : vector<8x1xi32>
    %c6_i32 = arith.constant 6 : i32
    %156 = vector.broadcast %c6_i32 : i32 to vector<8x1xi32>
    %157 = arith.cmpi sgt, %0, %156 : vector<8x1xi32>
    %158 = vector.shape_cast %155 : vector<8x1xi1> to vector<8x1xi1>
    %159 = vector.broadcast %158 : vector<8x1xi1> to vector<8x128xi1>
    %160 = arith.select %159, %127, %82 : vector<8x128xi1>, vector<8x128xf32>
    %161 = vector.shape_cast %157 : vector<8x1xi1> to vector<8x1xi1>
    %162 = vector.broadcast %161 : vector<8x1xi1> to vector<8x128xi1>
    %163 = arith.select %162, %153, %85 : vector<8x128xi1>, vector<8x128xf32>
    %cst_53 = arith.constant 0.000000e+00 : f32
    %164 = vector.shape_cast %155 : vector<8x1xi1> to vector<8x1xi1>
    %165 = vector.broadcast %164 : vector<8x1xi1> to vector<8x128xi1>
    %166 = vector.broadcast %cst_53 : f32 to vector<8x128xf32>
    %167 = arith.select %165, %127, %166 : vector<8x128xi1>, vector<8x128xf32>
    %c8_54 = arith.constant 8 : index
    %c0_55 = arith.constant 0 : index
    %168 = vector.load %arg16[%c8_54, %c0_55] : memref<64x128xf32, #tpu.memory_space<vmem>>, vector<8x128xf32>
    tpu.vector_store %arg16[%c8_54, %c0_55], %167 {strides = array<i32>} : memref<64x128xf32, #tpu.memory_space<vmem>>, vector<8x128xf32>,
    %cst_56 = arith.constant 0.000000e+00 : f32
    %169 = vector.shape_cast %157 : vector<8x1xi1> to vector<8x1xi1>
    %170 = vector.broadcast %169 : vector<8x1xi1> to vector<8x128xi1>
    %171 = vector.broadcast %cst_56 : f32 to vector<8x128xf32>
    %172 = arith.select %170, %153, %171 : vector<8x128xi1>, vector<8x128xf32>
    %c48_57 = arith.constant 48 : index
    %c0_58 = arith.constant 0 : index
    %173 = vector.load %arg17[%c48_57, %c0_58] : memref<64x128xf32, #tpu.memory_space<vmem>>, vector<8x128xf32>
    tpu.vector_store %arg17[%c48_57, %c0_58], %172 {strides = array<i32>} : memref<64x128xf32, #tpu.memory_space<vmem>>, vector<8x128xf32>,
    %c16 = arith.constant 16 : index
    %c0_59 = arith.constant 0 : index
    %174 = vector.load %arg14[%c16, %c0_59] : memref<64x384xf32, #tpu.memory_space<vmem>>, vector<8x384xf32>
    %c40 = arith.constant 40 : index
    %c0_60 = arith.constant 0 : index
    %175 = vector.load %arg15[%c40, %c0_60] : memref<64x384xf32, #tpu.memory_space<vmem>>, vector<8x384xf32>
    %c0_61 = arith.constant 0 : index
    %c0_62 = arith.constant 0 : index
    %176 = vector.load %arg6[%c0_61, %c0_62] : memref<128x384xf32, #tpu.memory_space<vmem>>, vector<128x384xf32>
    %cst_63 = arith.constant dense<0.000000e+00> : vector<8x384xf32>
    %177 = tpu.matmul %160, %176, %cst_63 {dimension_numbers = #tpu.dot_dimension_numbers<[1], [0], [0], [1], [0, 0, 1, 1], [], []>} : vector<8x128xf32>, vector<128x384xf32>, vector<8x384xf32> -> vector<8x384xf32>
    %c0_64 = arith.constant 0 : index
    %c0_65 = arith.constant 0 : index
    %178 = vector.load %arg8[%c0_64, %c0_65] : memref<128x384xf32, #tpu.memory_space<vmem>>, vector<128x384xf32>
    %cst_66 = arith.constant dense<0.000000e+00> : vector<8x384xf32>
    %179 = tpu.matmul %163, %178, %cst_66 {dimension_numbers = #tpu.dot_dimension_numbers<[1], [0], [0], [1], [0, 0, 1, 1], [], []>} : vector<8x128xf32>, vector<128x384xf32>, vector<8x384xf32> -> vector<8x384xf32>
    %180 = vector.extract_strided_slice %174 {offsets = [0, 0], sizes = [8, 128], strides = [1, 1]} : vector<8x384xf32> to vector<8x128xf32>
    %181 = vector.extract_strided_slice %177 {offsets = [0, 0], sizes = [8, 128], strides = [1, 1]} : vector<8x384xf32> to vector<8x128xf32>
    %182 = arith.addf %180, %181 : vector<8x128xf32>
    %183 = arith.negf %182 : vector<8x128xf32>
    %184 = math.exp %183 : vector<8x128xf32>
    %cst_67 = arith.constant 1.000000e+00 : f32
    %185 = vector.broadcast %cst_67 : f32 to vector<8x128xf32>
    %186 = arith.addf %185, %184 : vector<8x128xf32>
    %187 = arith.divf %185, %186 : vector<8x128xf32>
    %188 = vector.extract_strided_slice %174 {offsets = [0, 128], sizes = [8, 128], strides = [1, 1]} : vector<8x384xf32> to vector<8x128xf32>
    %189 = vector.extract_strided_slice %177 {offsets = [0, 128], sizes = [8, 128], strides = [1, 1]} : vector<8x384xf32> to vector<8x128xf32>
    %190 = arith.addf %188, %189 : vector<8x128xf32>
    %191 = arith.negf %190 : vector<8x128xf32>
    %192 = math.exp %191 : vector<8x128xf32>
    %cst_68 = arith.constant 1.000000e+00 : f32
    %193 = vector.broadcast %cst_68 : f32 to vector<8x128xf32>
    %194 = arith.addf %193, %192 : vector<8x128xf32>
    %195 = arith.divf %193, %194 : vector<8x128xf32>
    %196 = vector.extract_strided_slice %174 {offsets = [0, 256], sizes = [8, 128], strides = [1, 1]} : vector<8x384xf32> to vector<8x128xf32>
    %197 = vector.extract_strided_slice %177 {offsets = [0, 256], sizes = [8, 128], strides = [1, 1]} : vector<8x384xf32> to vector<8x128xf32>
    %198 = vector.broadcast %14 : vector<1x128xf32> to vector<8x128xf32>
    %199 = arith.addf %197, %198 : vector<8x128xf32>
    %200 = arith.mulf %187, %199 : vector<8x128xf32>
    %201 = arith.addf %196, %200 : vector<8x128xf32>
    %202 = math.tanh %201 : vector<8x128xf32>
    %203 = arith.subf %160, %202 : vector<8x128xf32>
    %204 = arith.mulf %195, %203 : vector<8x128xf32>
    %205 = arith.addf %202, %204 : vector<8x128xf32>
    %206 = vector.extract_strided_slice %175 {offsets = [0, 0], sizes = [8, 128], strides = [1, 1]} : vector<8x384xf32> to vector<8x128xf32>
    %207 = vector.extract_strided_slice %179 {offsets = [0, 0], sizes = [8, 128], strides = [1, 1]} : vector<8x384xf32> to vector<8x128xf32>
    %208 = arith.addf %206, %207 : vector<8x128xf32>
    %209 = arith.negf %208 : vector<8x128xf32>
    %210 = math.exp %209 : vector<8x128xf32>
    %cst_69 = arith.constant 1.000000e+00 : f32
    %211 = vector.broadcast %cst_69 : f32 to vector<8x128xf32>
    %212 = arith.addf %211, %210 : vector<8x128xf32>
    %213 = arith.divf %211, %212 : vector<8x128xf32>
    %214 = vector.extract_strided_slice %175 {offsets = [0, 128], sizes = [8, 128], strides = [1, 1]} : vector<8x384xf32> to vector<8x128xf32>
    %215 = vector.extract_strided_slice %179 {offsets = [0, 128], sizes = [8, 128], strides = [1, 1]} : vector<8x384xf32> to vector<8x128xf32>
    %216 = arith.addf %214, %215 : vector<8x128xf32>
    %217 = arith.negf %216 : vector<8x128xf32>
    %218 = math.exp %217 : vector<8x128xf32>
    %cst_70 = arith.constant 1.000000e+00 : f32
    %219 = vector.broadcast %cst_70 : f32 to vector<8x128xf32>
    %220 = arith.addf %219, %218 : vector<8x128xf32>
    %221 = arith.divf %219, %220 : vector<8x128xf32>
    %222 = vector.extract_strided_slice %175 {offsets = [0, 256], sizes = [8, 128], strides = [1, 1]} : vector<8x384xf32> to vector<8x128xf32>
    %223 = vector.extract_strided_slice %179 {offsets = [0, 256], sizes = [8, 128], strides = [1, 1]} : vector<8x384xf32> to vector<8x128xf32>
    %224 = vector.broadcast %15 : vector<1x128xf32> to vector<8x128xf32>
    %225 = arith.addf %223, %224 : vector<8x128xf32>
    %226 = arith.mulf %213, %225 : vector<8x128xf32>
    %227 = arith.addf %222, %226 : vector<8x128xf32>
    %228 = math.tanh %227 : vector<8x128xf32>
    %229 = arith.subf %163, %228 : vector<8x128xf32>
    %230 = arith.mulf %221, %229 : vector<8x128xf32>
    %231 = arith.addf %228, %230 : vector<8x128xf32>
    %c2_i32 = arith.constant 2 : i32
    %232 = vector.broadcast %c2_i32 : i32 to vector<8x1xi32>
    %233 = arith.cmpi sgt, %0, %232 : vector<8x1xi32>
    %c5_i32 = arith.constant 5 : i32
    %234 = vector.broadcast %c5_i32 : i32 to vector<8x1xi32>
    %235 = arith.cmpi sgt, %0, %234 : vector<8x1xi32>
    %236 = vector.shape_cast %233 : vector<8x1xi1> to vector<8x1xi1>
    %237 = vector.broadcast %236 : vector<8x1xi1> to vector<8x128xi1>
    %238 = arith.select %237, %205, %160 : vector<8x128xi1>, vector<8x128xf32>
    %239 = vector.shape_cast %235 : vector<8x1xi1> to vector<8x1xi1>
    %240 = vector.broadcast %239 : vector<8x1xi1> to vector<8x128xi1>
    %241 = arith.select %240, %231, %163 : vector<8x128xi1>, vector<8x128xf32>
    %cst_71 = arith.constant 0.000000e+00 : f32
    %242 = vector.shape_cast %233 : vector<8x1xi1> to vector<8x1xi1>
    %243 = vector.broadcast %242 : vector<8x1xi1> to vector<8x128xi1>
    %244 = vector.broadcast %cst_71 : f32 to vector<8x128xf32>
    %245 = arith.select %243, %205, %244 : vector<8x128xi1>, vector<8x128xf32>
    %c16_72 = arith.constant 16 : index
    %c0_73 = arith.constant 0 : index
    %246 = vector.load %arg16[%c16_72, %c0_73] : memref<64x128xf32, #tpu.memory_space<vmem>>, vector<8x128xf32>
    tpu.vector_store %arg16[%c16_72, %c0_73], %245 {strides = array<i32>} : memref<64x128xf32, #tpu.memory_space<vmem>>, vector<8x128xf32>,
    %cst_74 = arith.constant 0.000000e+00 : f32
    %247 = vector.shape_cast %235 : vector<8x1xi1> to vector<8x1xi1>
    %248 = vector.broadcast %247 : vector<8x1xi1> to vector<8x128xi1>
    %249 = vector.broadcast %cst_74 : f32 to vector<8x128xf32>
    %250 = arith.select %248, %231, %249 : vector<8x128xi1>, vector<8x128xf32>
    %c40_75 = arith.constant 40 : index
    %c0_76 = arith.constant 0 : index
    %251 = vector.load %arg17[%c40_75, %c0_76] : memref<64x128xf32, #tpu.memory_space<vmem>>, vector<8x128xf32>
    tpu.vector_store %arg17[%c40_75, %c0_76], %250 {strides = array<i32>} : memref<64x128xf32, #tpu.memory_space<vmem>>, vector<8x128xf32>,
    %c24 = arith.constant 24 : index
    %c0_77 = arith.constant 0 : index
    %252 = vector.load %arg14[%c24, %c0_77] : memref<64x384xf32, #tpu.memory_space<vmem>>, vector<8x384xf32>
    %c32 = arith.constant 32 : index
    %c0_78 = arith.constant 0 : index
    %253 = vector.load %arg15[%c32, %c0_78] : memref<64x384xf32, #tpu.memory_space<vmem>>, vector<8x384xf32>
    %c0_79 = arith.constant 0 : index
    %c0_80 = arith.constant 0 : index
    %254 = vector.load %arg6[%c0_79, %c0_80] : memref<128x384xf32, #tpu.memory_space<vmem>>, vector<128x384xf32>
    %cst_81 = arith.constant dense<0.000000e+00> : vector<8x384xf32>
    %255 = tpu.matmul %238, %254, %cst_81 {dimension_numbers = #tpu.dot_dimension_numbers<[1], [0], [0], [1], [0, 0, 1, 1], [], []>} : vector<8x128xf32>, vector<128x384xf32>, vector<8x384xf32> -> vector<8x384xf32>
    %c0_82 = arith.constant 0 : index
    %c0_83 = arith.constant 0 : index
    %256 = vector.load %arg8[%c0_82, %c0_83] : memref<128x384xf32, #tpu.memory_space<vmem>>, vector<128x384xf32>
    %cst_84 = arith.constant dense<0.000000e+00> : vector<8x384xf32>
    %257 = tpu.matmul %241, %256, %cst_84 {dimension_numbers = #tpu.dot_dimension_numbers<[1], [0], [0], [1], [0, 0, 1, 1], [], []>} : vector<8x128xf32>, vector<128x384xf32>, vector<8x384xf32> -> vector<8x384xf32>
    %258 = vector.extract_strided_slice %252 {offsets = [0, 0], sizes = [8, 128], strides = [1, 1]} : vector<8x384xf32> to vector<8x128xf32>
    %259 = vector.extract_strided_slice %255 {offsets = [0, 0], sizes = [8, 128], strides = [1, 1]} : vector<8x384xf32> to vector<8x128xf32>
    %260 = arith.addf %258, %259 : vector<8x128xf32>
    %261 = arith.negf %260 : vector<8x128xf32>
    %262 = math.exp %261 : vector<8x128xf32>
    %cst_85 = arith.constant 1.000000e+00 : f32
    %263 = vector.broadcast %cst_85 : f32 to vector<8x128xf32>
    %264 = arith.addf %263, %262 : vector<8x128xf32>
    %265 = arith.divf %263, %264 : vector<8x128xf32>
    %266 = vector.extract_strided_slice %252 {offsets = [0, 128], sizes = [8, 128], strides = [1, 1]} : vector<8x384xf32> to vector<8x128xf32>
    %267 = vector.extract_strided_slice %255 {offsets = [0, 128], sizes = [8, 128], strides = [1, 1]} : vector<8x384xf32> to vector<8x128xf32>
    %268 = arith.addf %266, %267 : vector<8x128xf32>
    %269 = arith.negf %268 : vector<8x128xf32>
    %270 = math.exp %269 : vector<8x128xf32>
    %cst_86 = arith.constant 1.000000e+00 : f32
    %271 = vector.broadcast %cst_86 : f32 to vector<8x128xf32>
    %272 = arith.addf %271, %270 : vector<8x128xf32>
    %273 = arith.divf %271, %272 : vector<8x128xf32>
    %274 = vector.extract_strided_slice %252 {offsets = [0, 256], sizes = [8, 128], strides = [1, 1]} : vector<8x384xf32> to vector<8x128xf32>
    %275 = vector.extract_strided_slice %255 {offsets = [0, 256], sizes = [8, 128], strides = [1, 1]} : vector<8x384xf32> to vector<8x128xf32>
    %276 = vector.broadcast %14 : vector<1x128xf32> to vector<8x128xf32>
    %277 = arith.addf %275, %276 : vector<8x128xf32>
    %278 = arith.mulf %265, %277 : vector<8x128xf32>
    %279 = arith.addf %274, %278 : vector<8x128xf32>
    %280 = math.tanh %279 : vector<8x128xf32>
    %281 = arith.subf %238, %280 : vector<8x128xf32>
    %282 = arith.mulf %273, %281 : vector<8x128xf32>
    %283 = arith.addf %280, %282 : vector<8x128xf32>
    %284 = vector.extract_strided_slice %253 {offsets = [0, 0], sizes = [8, 128], strides = [1, 1]} : vector<8x384xf32> to vector<8x128xf32>
    %285 = vector.extract_strided_slice %257 {offsets = [0, 0], sizes = [8, 128], strides = [1, 1]} : vector<8x384xf32> to vector<8x128xf32>
    %286 = arith.addf %284, %285 : vector<8x128xf32>
    %287 = arith.negf %286 : vector<8x128xf32>
    %288 = math.exp %287 : vector<8x128xf32>
    %cst_87 = arith.constant 1.000000e+00 : f32
    %289 = vector.broadcast %cst_87 : f32 to vector<8x128xf32>
    %290 = arith.addf %289, %288 : vector<8x128xf32>
    %291 = arith.divf %289, %290 : vector<8x128xf32>
    %292 = vector.extract_strided_slice %253 {offsets = [0, 128], sizes = [8, 128], strides = [1, 1]} : vector<8x384xf32> to vector<8x128xf32>
    %293 = vector.extract_strided_slice %257 {offsets = [0, 128], sizes = [8, 128], strides = [1, 1]} : vector<8x384xf32> to vector<8x128xf32>
    %294 = arith.addf %292, %293 : vector<8x128xf32>
    %295 = arith.negf %294 : vector<8x128xf32>
    %296 = math.exp %295 : vector<8x128xf32>
    %cst_88 = arith.constant 1.000000e+00 : f32
    %297 = vector.broadcast %cst_88 : f32 to vector<8x128xf32>
    %298 = arith.addf %297, %296 : vector<8x128xf32>
    %299 = arith.divf %297, %298 : vector<8x128xf32>
    %300 = vector.extract_strided_slice %253 {offsets = [0, 256], sizes = [8, 128], strides = [1, 1]} : vector<8x384xf32> to vector<8x128xf32>
    %301 = vector.extract_strided_slice %257 {offsets = [0, 256], sizes = [8, 128], strides = [1, 1]} : vector<8x384xf32> to vector<8x128xf32>
    %302 = vector.broadcast %15 : vector<1x128xf32> to vector<8x128xf32>
    %303 = arith.addf %301, %302 : vector<8x128xf32>
    %304 = arith.mulf %291, %303 : vector<8x128xf32>
    %305 = arith.addf %300, %304 : vector<8x128xf32>
    %306 = math.tanh %305 : vector<8x128xf32>
    %307 = arith.subf %241, %306 : vector<8x128xf32>
    %308 = arith.mulf %299, %307 : vector<8x128xf32>
    %309 = arith.addf %306, %308 : vector<8x128xf32>
    %c3_i32 = arith.constant 3 : i32
    %310 = vector.broadcast %c3_i32 : i32 to vector<8x1xi32>
    %311 = arith.cmpi sgt, %0, %310 : vector<8x1xi32>
    %c4_i32 = arith.constant 4 : i32
    %312 = vector.broadcast %c4_i32 : i32 to vector<8x1xi32>
    %313 = arith.cmpi sgt, %0, %312 : vector<8x1xi32>
    %314 = vector.shape_cast %311 : vector<8x1xi1> to vector<8x1xi1>
    %315 = vector.broadcast %314 : vector<8x1xi1> to vector<8x128xi1>
    %316 = arith.select %315, %283, %238 : vector<8x128xi1>, vector<8x128xf32>
    %317 = vector.shape_cast %313 : vector<8x1xi1> to vector<8x1xi1>
    %318 = vector.broadcast %317 : vector<8x1xi1> to vector<8x128xi1>
    %319 = arith.select %318, %309, %241 : vector<8x128xi1>, vector<8x128xf32>
    %cst_89 = arith.constant 0.000000e+00 : f32
    %320 = vector.shape_cast %311 : vector<8x1xi1> to vector<8x1xi1>
    %321 = vector.broadcast %320 : vector<8x1xi1> to vector<8x128xi1>
    %322 = vector.broadcast %cst_89 : f32 to vector<8x128xf32>
    %323 = arith.select %321, %283, %322 : vector<8x128xi1>, vector<8x128xf32>
    %c24_90 = arith.constant 24 : index
    %c0_91 = arith.constant 0 : index
    %324 = vector.load %arg16[%c24_90, %c0_91] : memref<64x128xf32, #tpu.memory_space<vmem>>, vector<8x128xf32>
    tpu.vector_store %arg16[%c24_90, %c0_91], %323 {strides = array<i32>} : memref<64x128xf32, #tpu.memory_space<vmem>>, vector<8x128xf32>,
    %cst_92 = arith.constant 0.000000e+00 : f32
    %325 = vector.shape_cast %313 : vector<8x1xi1> to vector<8x1xi1>
    %326 = vector.broadcast %325 : vector<8x1xi1> to vector<8x128xi1>
    %327 = vector.broadcast %cst_92 : f32 to vector<8x128xf32>
    %328 = arith.select %326, %309, %327 : vector<8x128xi1>, vector<8x128xf32>
    %c32_93 = arith.constant 32 : index
    %c0_94 = arith.constant 0 : index
    %329 = vector.load %arg17[%c32_93, %c0_94] : memref<64x128xf32, #tpu.memory_space<vmem>>, vector<8x128xf32>
    tpu.vector_store %arg17[%c32_93, %c0_94], %328 {strides = array<i32>} : memref<64x128xf32, #tpu.memory_space<vmem>>, vector<8x128xf32>,
    %c32_95 = arith.constant 32 : index
    %c0_96 = arith.constant 0 : index
    %330 = vector.load %arg14[%c32_95, %c0_96] : memref<64x384xf32, #tpu.memory_space<vmem>>, vector<8x384xf32>
    %c24_97 = arith.constant 24 : index
    %c0_98 = arith.constant 0 : index
    %331 = vector.load %arg15[%c24_97, %c0_98] : memref<64x384xf32, #tpu.memory_space<vmem>>, vector<8x384xf32>
    %c0_99 = arith.constant 0 : index
    %c0_100 = arith.constant 0 : index
    %332 = vector.load %arg6[%c0_99, %c0_100] : memref<128x384xf32, #tpu.memory_space<vmem>>, vector<128x384xf32>
    %cst_101 = arith.constant dense<0.000000e+00> : vector<8x384xf32>
    %333 = tpu.matmul %316, %332, %cst_101 {dimension_numbers = #tpu.dot_dimension_numbers<[1], [0], [0], [1], [0, 0, 1, 1], [], []>} : vector<8x128xf32>, vector<128x384xf32>, vector<8x384xf32> -> vector<8x384xf32>
    %c0_102 = arith.constant 0 : index
    %c0_103 = arith.constant 0 : index
    %334 = vector.load %arg8[%c0_102, %c0_103] : memref<128x384xf32, #tpu.memory_space<vmem>>, vector<128x384xf32>
    %cst_104 = arith.constant dense<0.000000e+00> : vector<8x384xf32>
    %335 = tpu.matmul %319, %334, %cst_104 {dimension_numbers = #tpu.dot_dimension_numbers<[1], [0], [0], [1], [0, 0, 1, 1], [], []>} : vector<8x128xf32>, vector<128x384xf32>, vector<8x384xf32> -> vector<8x384xf32>
    %336 = vector.extract_strided_slice %330 {offsets = [0, 0], sizes = [8, 128], strides = [1, 1]} : vector<8x384xf32> to vector<8x128xf32>
    %337 = vector.extract_strided_slice %333 {offsets = [0, 0], sizes = [8, 128], strides = [1, 1]} : vector<8x384xf32> to vector<8x128xf32>
    %338 = arith.addf %336, %337 : vector<8x128xf32>
    %339 = arith.negf %338 : vector<8x128xf32>
    %340 = math.exp %339 : vector<8x128xf32>
    %cst_105 = arith.constant 1.000000e+00 : f32
    %341 = vector.broadcast %cst_105 : f32 to vector<8x128xf32>
    %342 = arith.addf %341, %340 : vector<8x128xf32>
    %343 = arith.divf %341, %342 : vector<8x128xf32>
    %344 = vector.extract_strided_slice %330 {offsets = [0, 128], sizes = [8, 128], strides = [1, 1]} : vector<8x384xf32> to vector<8x128xf32>
    %345 = vector.extract_strided_slice %333 {offsets = [0, 128], sizes = [8, 128], strides = [1, 1]} : vector<8x384xf32> to vector<8x128xf32>
    %346 = arith.addf %344, %345 : vector<8x128xf32>
    %347 = arith.negf %346 : vector<8x128xf32>
    %348 = math.exp %347 : vector<8x128xf32>
    %cst_106 = arith.constant 1.000000e+00 : f32
    %349 = vector.broadcast %cst_106 : f32 to vector<8x128xf32>
    %350 = arith.addf %349, %348 : vector<8x128xf32>
    %351 = arith.divf %349, %350 : vector<8x128xf32>
    %352 = vector.extract_strided_slice %330 {offsets = [0, 256], sizes = [8, 128], strides = [1, 1]} : vector<8x384xf32> to vector<8x128xf32>
    %353 = vector.extract_strided_slice %333 {offsets = [0, 256], sizes = [8, 128], strides = [1, 1]} : vector<8x384xf32> to vector<8x128xf32>
    %354 = vector.broadcast %14 : vector<1x128xf32> to vector<8x128xf32>
    %355 = arith.addf %353, %354 : vector<8x128xf32>
    %356 = arith.mulf %343, %355 : vector<8x128xf32>
    %357 = arith.addf %352, %356 : vector<8x128xf32>
    %358 = math.tanh %357 : vector<8x128xf32>
    %359 = arith.subf %316, %358 : vector<8x128xf32>
    %360 = arith.mulf %351, %359 : vector<8x128xf32>
    %361 = arith.addf %358, %360 : vector<8x128xf32>
    %362 = vector.extract_strided_slice %331 {offsets = [0, 0], sizes = [8, 128], strides = [1, 1]} : vector<8x384xf32> to vector<8x128xf32>
    %363 = vector.extract_strided_slice %335 {offsets = [0, 0], sizes = [8, 128], strides = [1, 1]} : vector<8x384xf32> to vector<8x128xf32>
    %364 = arith.addf %362, %363 : vector<8x128xf32>
    %365 = arith.negf %364 : vector<8x128xf32>
    %366 = math.exp %365 : vector<8x128xf32>
    %cst_107 = arith.constant 1.000000e+00 : f32
    %367 = vector.broadcast %cst_107 : f32 to vector<8x128xf32>
    %368 = arith.addf %367, %366 : vector<8x128xf32>
    %369 = arith.divf %367, %368 : vector<8x128xf32>
    %370 = vector.extract_strided_slice %331 {offsets = [0, 128], sizes = [8, 128], strides = [1, 1]} : vector<8x384xf32> to vector<8x128xf32>
    %371 = vector.extract_strided_slice %335 {offsets = [0, 128], sizes = [8, 128], strides = [1, 1]} : vector<8x384xf32> to vector<8x128xf32>
    %372 = arith.addf %370, %371 : vector<8x128xf32>
    %373 = arith.negf %372 : vector<8x128xf32>
    %374 = math.exp %373 : vector<8x128xf32>
    %cst_108 = arith.constant 1.000000e+00 : f32
    %375 = vector.broadcast %cst_108 : f32 to vector<8x128xf32>
    %376 = arith.addf %375, %374 : vector<8x128xf32>
    %377 = arith.divf %375, %376 : vector<8x128xf32>
    %378 = vector.extract_strided_slice %331 {offsets = [0, 256], sizes = [8, 128], strides = [1, 1]} : vector<8x384xf32> to vector<8x128xf32>
    %379 = vector.extract_strided_slice %335 {offsets = [0, 256], sizes = [8, 128], strides = [1, 1]} : vector<8x384xf32> to vector<8x128xf32>
    %380 = vector.broadcast %15 : vector<1x128xf32> to vector<8x128xf32>
    %381 = arith.addf %379, %380 : vector<8x128xf32>
    %382 = arith.mulf %369, %381 : vector<8x128xf32>
    %383 = arith.addf %378, %382 : vector<8x128xf32>
    %384 = math.tanh %383 : vector<8x128xf32>
    %385 = arith.subf %319, %384 : vector<8x128xf32>
    %386 = arith.mulf %377, %385 : vector<8x128xf32>
    %387 = arith.addf %384, %386 : vector<8x128xf32>
    %c4_i32_109 = arith.constant 4 : i32
    %388 = vector.broadcast %c4_i32_109 : i32 to vector<8x1xi32>
    %389 = arith.cmpi sgt, %0, %388 : vector<8x1xi32>
    %c3_i32_110 = arith.constant 3 : i32
    %390 = vector.broadcast %c3_i32_110 : i32 to vector<8x1xi32>
    %391 = arith.cmpi sgt, %0, %390 : vector<8x1xi32>
    %392 = vector.shape_cast %389 : vector<8x1xi1> to vector<8x1xi1>
    %393 = vector.broadcast %392 : vector<8x1xi1> to vector<8x128xi1>
    %394 = arith.select %393, %361, %316 : vector<8x128xi1>, vector<8x128xf32>
    %395 = vector.shape_cast %391 : vector<8x1xi1> to vector<8x1xi1>
    %396 = vector.broadcast %395 : vector<8x1xi1> to vector<8x128xi1>
    %397 = arith.select %396, %387, %319 : vector<8x128xi1>, vector<8x128xf32>
    %cst_111 = arith.constant 0.000000e+00 : f32
    %398 = vector.shape_cast %389 : vector<8x1xi1> to vector<8x1xi1>
    %399 = vector.broadcast %398 : vector<8x1xi1> to vector<8x128xi1>
    %400 = vector.broadcast %cst_111 : f32 to vector<8x128xf32>
    %401 = arith.select %399, %361, %400 : vector<8x128xi1>, vector<8x128xf32>
    %c32_112 = arith.constant 32 : index
    %c0_113 = arith.constant 0 : index
    %402 = vector.load %arg16[%c32_112, %c0_113] : memref<64x128xf32, #tpu.memory_space<vmem>>, vector<8x128xf32>
    tpu.vector_store %arg16[%c32_112, %c0_113], %401 {strides = array<i32>} : memref<64x128xf32, #tpu.memory_space<vmem>>, vector<8x128xf32>,
    %cst_114 = arith.constant 0.000000e+00 : f32
    %403 = vector.shape_cast %391 : vector<8x1xi1> to vector<8x1xi1>
    %404 = vector.broadcast %403 : vector<8x1xi1> to vector<8x128xi1>
    %405 = vector.broadcast %cst_114 : f32 to vector<8x128xf32>
    %406 = arith.select %404, %387, %405 : vector<8x128xi1>, vector<8x128xf32>
    %c24_115 = arith.constant 24 : index
    %c0_116 = arith.constant 0 : index
    %407 = vector.load %arg17[%c24_115, %c0_116] : memref<64x128xf32, #tpu.memory_space<vmem>>, vector<8x128xf32>
    tpu.vector_store %arg17[%c24_115, %c0_116], %406 {strides = array<i32>} : memref<64x128xf32, #tpu.memory_space<vmem>>, vector<8x128xf32>,
    %c40_117 = arith.constant 40 : index
    %c0_118 = arith.constant 0 : index
    %408 = vector.load %arg14[%c40_117, %c0_118] : memref<64x384xf32, #tpu.memory_space<vmem>>, vector<8x384xf32>
    %c16_119 = arith.constant 16 : index
    %c0_120 = arith.constant 0 : index
    %409 = vector.load %arg15[%c16_119, %c0_120] : memref<64x384xf32, #tpu.memory_space<vmem>>, vector<8x384xf32>
    %c0_121 = arith.constant 0 : index
    %c0_122 = arith.constant 0 : index
    %410 = vector.load %arg6[%c0_121, %c0_122] : memref<128x384xf32, #tpu.memory_space<vmem>>, vector<128x384xf32>
    %cst_123 = arith.constant dense<0.000000e+00> : vector<8x384xf32>
    %411 = tpu.matmul %394, %410, %cst_123 {dimension_numbers = #tpu.dot_dimension_numbers<[1], [0], [0], [1], [0, 0, 1, 1], [], []>} : vector<8x128xf32>, vector<128x384xf32>, vector<8x384xf32> -> vector<8x384xf32>
    %c0_124 = arith.constant 0 : index
    %c0_125 = arith.constant 0 : index
    %412 = vector.load %arg8[%c0_124, %c0_125] : memref<128x384xf32, #tpu.memory_space<vmem>>, vector<128x384xf32>
    %cst_126 = arith.constant dense<0.000000e+00> : vector<8x384xf32>
    %413 = tpu.matmul %397, %412, %cst_126 {dimension_numbers = #tpu.dot_dimension_numbers<[1], [0], [0], [1], [0, 0, 1, 1], [], []>} : vector<8x128xf32>, vector<128x384xf32>, vector<8x384xf32> -> vector<8x384xf32>
    %414 = vector.extract_strided_slice %408 {offsets = [0, 0], sizes = [8, 128], strides = [1, 1]} : vector<8x384xf32> to vector<8x128xf32>
    %415 = vector.extract_strided_slice %411 {offsets = [0, 0], sizes = [8, 128], strides = [1, 1]} : vector<8x384xf32> to vector<8x128xf32>
    %416 = arith.addf %414, %415 : vector<8x128xf32>
    %417 = arith.negf %416 : vector<8x128xf32>
    %418 = math.exp %417 : vector<8x128xf32>
    %cst_127 = arith.constant 1.000000e+00 : f32
    %419 = vector.broadcast %cst_127 : f32 to vector<8x128xf32>
    %420 = arith.addf %419, %418 : vector<8x128xf32>
    %421 = arith.divf %419, %420 : vector<8x128xf32>
    %422 = vector.extract_strided_slice %408 {offsets = [0, 128], sizes = [8, 128], strides = [1, 1]} : vector<8x384xf32> to vector<8x128xf32>
    %423 = vector.extract_strided_slice %411 {offsets = [0, 128], sizes = [8, 128], strides = [1, 1]} : vector<8x384xf32> to vector<8x128xf32>
    %424 = arith.addf %422, %423 : vector<8x128xf32>
    %425 = arith.negf %424 : vector<8x128xf32>
    %426 = math.exp %425 : vector<8x128xf32>
    %cst_128 = arith.constant 1.000000e+00 : f32
    %427 = vector.broadcast %cst_128 : f32 to vector<8x128xf32>
    %428 = arith.addf %427, %426 : vector<8x128xf32>
    %429 = arith.divf %427, %428 : vector<8x128xf32>
    %430 = vector.extract_strided_slice %408 {offsets = [0, 256], sizes = [8, 128], strides = [1, 1]} : vector<8x384xf32> to vector<8x128xf32>
    %431 = vector.extract_strided_slice %411 {offsets = [0, 256], sizes = [8, 128], strides = [1, 1]} : vector<8x384xf32> to vector<8x128xf32>
    %432 = vector.broadcast %14 : vector<1x128xf32> to vector<8x128xf32>
    %433 = arith.addf %431, %432 : vector<8x128xf32>
    %434 = arith.mulf %421, %433 : vector<8x128xf32>
    %435 = arith.addf %430, %434 : vector<8x128xf32>
    %436 = math.tanh %435 : vector<8x128xf32>
    %437 = arith.subf %394, %436 : vector<8x128xf32>
    %438 = arith.mulf %429, %437 : vector<8x128xf32>
    %439 = arith.addf %436, %438 : vector<8x128xf32>
    %440 = vector.extract_strided_slice %409 {offsets = [0, 0], sizes = [8, 128], strides = [1, 1]} : vector<8x384xf32> to vector<8x128xf32>
    %441 = vector.extract_strided_slice %413 {offsets = [0, 0], sizes = [8, 128], strides = [1, 1]} : vector<8x384xf32> to vector<8x128xf32>
    %442 = arith.addf %440, %441 : vector<8x128xf32>
    %443 = arith.negf %442 : vector<8x128xf32>
    %444 = math.exp %443 : vector<8x128xf32>
    %cst_129 = arith.constant 1.000000e+00 : f32
    %445 = vector.broadcast %cst_129 : f32 to vector<8x128xf32>
    %446 = arith.addf %445, %444 : vector<8x128xf32>
    %447 = arith.divf %445, %446 : vector<8x128xf32>
    %448 = vector.extract_strided_slice %409 {offsets = [0, 128], sizes = [8, 128], strides = [1, 1]} : vector<8x384xf32> to vector<8x128xf32>
    %449 = vector.extract_strided_slice %413 {offsets = [0, 128], sizes = [8, 128], strides = [1, 1]} : vector<8x384xf32> to vector<8x128xf32>
    %450 = arith.addf %448, %449 : vector<8x128xf32>
    %451 = arith.negf %450 : vector<8x128xf32>
    %452 = math.exp %451 : vector<8x128xf32>
    %cst_130 = arith.constant 1.000000e+00 : f32
    %453 = vector.broadcast %cst_130 : f32 to vector<8x128xf32>
    %454 = arith.addf %453, %452 : vector<8x128xf32>
    %455 = arith.divf %453, %454 : vector<8x128xf32>
    %456 = vector.extract_strided_slice %409 {offsets = [0, 256], sizes = [8, 128], strides = [1, 1]} : vector<8x384xf32> to vector<8x128xf32>
    %457 = vector.extract_strided_slice %413 {offsets = [0, 256], sizes = [8, 128], strides = [1, 1]} : vector<8x384xf32> to vector<8x128xf32>
    %458 = vector.broadcast %15 : vector<1x128xf32> to vector<8x128xf32>
    %459 = arith.addf %457, %458 : vector<8x128xf32>
    %460 = arith.mulf %447, %459 : vector<8x128xf32>
    %461 = arith.addf %456, %460 : vector<8x128xf32>
    %462 = math.tanh %461 : vector<8x128xf32>
    %463 = arith.subf %397, %462 : vector<8x128xf32>
    %464 = arith.mulf %455, %463 : vector<8x128xf32>
    %465 = arith.addf %462, %464 : vector<8x128xf32>
    %c5_i32_131 = arith.constant 5 : i32
    %466 = vector.broadcast %c5_i32_131 : i32 to vector<8x1xi32>
    %467 = arith.cmpi sgt, %0, %466 : vector<8x1xi32>
    %c2_i32_132 = arith.constant 2 : i32
    %468 = vector.broadcast %c2_i32_132 : i32 to vector<8x1xi32>
    %469 = arith.cmpi sgt, %0, %468 : vector<8x1xi32>
    %470 = vector.shape_cast %467 : vector<8x1xi1> to vector<8x1xi1>
    %471 = vector.broadcast %470 : vector<8x1xi1> to vector<8x128xi1>
    %472 = arith.select %471, %439, %394 : vector<8x128xi1>, vector<8x128xf32>
    %473 = vector.shape_cast %469 : vector<8x1xi1> to vector<8x1xi1>
    %474 = vector.broadcast %473 : vector<8x1xi1> to vector<8x128xi1>
    %475 = arith.select %474, %465, %397 : vector<8x128xi1>, vector<8x128xf32>
    %cst_133 = arith.constant 0.000000e+00 : f32
    %476 = vector.shape_cast %467 : vector<8x1xi1> to vector<8x1xi1>
    %477 = vector.broadcast %476 : vector<8x1xi1> to vector<8x128xi1>
    %478 = vector.broadcast %cst_133 : f32 to vector<8x128xf32>
    %479 = arith.select %477, %439, %478 : vector<8x128xi1>, vector<8x128xf32>
    %c40_134 = arith.constant 40 : index
    %c0_135 = arith.constant 0 : index
    %480 = vector.load %arg16[%c40_134, %c0_135] : memref<64x128xf32, #tpu.memory_space<vmem>>, vector<8x128xf32>
    tpu.vector_store %arg16[%c40_134, %c0_135], %479 {strides = array<i32>} : memref<64x128xf32, #tpu.memory_space<vmem>>, vector<8x128xf32>,
    %cst_136 = arith.constant 0.000000e+00 : f32
    %481 = vector.shape_cast %469 : vector<8x1xi1> to vector<8x1xi1>
    %482 = vector.broadcast %481 : vector<8x1xi1> to vector<8x128xi1>
    %483 = vector.broadcast %cst_136 : f32 to vector<8x128xf32>
    %484 = arith.select %482, %465, %483 : vector<8x128xi1>, vector<8x128xf32>
    %c16_137 = arith.constant 16 : index
    %c0_138 = arith.constant 0 : index
    %485 = vector.load %arg17[%c16_137, %c0_138] : memref<64x128xf32, #tpu.memory_space<vmem>>, vector<8x128xf32>
    tpu.vector_store %arg17[%c16_137, %c0_138], %484 {strides = array<i32>} : memref<64x128xf32, #tpu.memory_space<vmem>>, vector<8x128xf32>,
    %c48_139 = arith.constant 48 : index
    %c0_140 = arith.constant 0 : index
    %486 = vector.load %arg14[%c48_139, %c0_140] : memref<64x384xf32, #tpu.memory_space<vmem>>, vector<8x384xf32>
    %c8_141 = arith.constant 8 : index
    %c0_142 = arith.constant 0 : index
    %487 = vector.load %arg15[%c8_141, %c0_142] : memref<64x384xf32, #tpu.memory_space<vmem>>, vector<8x384xf32>
    %c0_143 = arith.constant 0 : index
    %c0_144 = arith.constant 0 : index
    %488 = vector.load %arg6[%c0_143, %c0_144] : memref<128x384xf32, #tpu.memory_space<vmem>>, vector<128x384xf32>
    %cst_145 = arith.constant dense<0.000000e+00> : vector<8x384xf32>
    %489 = tpu.matmul %472, %488, %cst_145 {dimension_numbers = #tpu.dot_dimension_numbers<[1], [0], [0], [1], [0, 0, 1, 1], [], []>} : vector<8x128xf32>, vector<128x384xf32>, vector<8x384xf32> -> vector<8x384xf32>
    %c0_146 = arith.constant 0 : index
    %c0_147 = arith.constant 0 : index
    %490 = vector.load %arg8[%c0_146, %c0_147] : memref<128x384xf32, #tpu.memory_space<vmem>>, vector<128x384xf32>
    %cst_148 = arith.constant dense<0.000000e+00> : vector<8x384xf32>
    %491 = tpu.matmul %475, %490, %cst_148 {dimension_numbers = #tpu.dot_dimension_numbers<[1], [0], [0], [1], [0, 0, 1, 1], [], []>} : vector<8x128xf32>, vector<128x384xf32>, vector<8x384xf32> -> vector<8x384xf32>
    %492 = vector.extract_strided_slice %486 {offsets = [0, 0], sizes = [8, 128], strides = [1, 1]} : vector<8x384xf32> to vector<8x128xf32>
    %493 = vector.extract_strided_slice %489 {offsets = [0, 0], sizes = [8, 128], strides = [1, 1]} : vector<8x384xf32> to vector<8x128xf32>
    %494 = arith.addf %492, %493 : vector<8x128xf32>
    %495 = arith.negf %494 : vector<8x128xf32>
    %496 = math.exp %495 : vector<8x128xf32>
    %cst_149 = arith.constant 1.000000e+00 : f32
    %497 = vector.broadcast %cst_149 : f32 to vector<8x128xf32>
    %498 = arith.addf %497, %496 : vector<8x128xf32>
    %499 = arith.divf %497, %498 : vector<8x128xf32>
    %500 = vector.extract_strided_slice %486 {offsets = [0, 128], sizes = [8, 128], strides = [1, 1]} : vector<8x384xf32> to vector<8x128xf32>
    %501 = vector.extract_strided_slice %489 {offsets = [0, 128], sizes = [8, 128], strides = [1, 1]} : vector<8x384xf32> to vector<8x128xf32>
    %502 = arith.addf %500, %501 : vector<8x128xf32>
    %503 = arith.negf %502 : vector<8x128xf32>
    %504 = math.exp %503 : vector<8x128xf32>
    %cst_150 = arith.constant 1.000000e+00 : f32
    %505 = vector.broadcast %cst_150 : f32 to vector<8x128xf32>
    %506 = arith.addf %505, %504 : vector<8x128xf32>
    %507 = arith.divf %505, %506 : vector<8x128xf32>
    %508 = vector.extract_strided_slice %486 {offsets = [0, 256], sizes = [8, 128], strides = [1, 1]} : vector<8x384xf32> to vector<8x128xf32>
    %509 = vector.extract_strided_slice %489 {offsets = [0, 256], sizes = [8, 128], strides = [1, 1]} : vector<8x384xf32> to vector<8x128xf32>
    %510 = vector.broadcast %14 : vector<1x128xf32> to vector<8x128xf32>
    %511 = arith.addf %509, %510 : vector<8x128xf32>
    %512 = arith.mulf %499, %511 : vector<8x128xf32>
    %513 = arith.addf %508, %512 : vector<8x128xf32>
    %514 = math.tanh %513 : vector<8x128xf32>
    %515 = arith.subf %472, %514 : vector<8x128xf32>
    %516 = arith.mulf %507, %515 : vector<8x128xf32>
    %517 = arith.addf %514, %516 : vector<8x128xf32>
    %518 = vector.extract_strided_slice %487 {offsets = [0, 0], sizes = [8, 128], strides = [1, 1]} : vector<8x384xf32> to vector<8x128xf32>
    %519 = vector.extract_strided_slice %491 {offsets = [0, 0], sizes = [8, 128], strides = [1, 1]} : vector<8x384xf32> to vector<8x128xf32>
    %520 = arith.addf %518, %519 : vector<8x128xf32>
    %521 = arith.negf %520 : vector<8x128xf32>
    %522 = math.exp %521 : vector<8x128xf32>
    %cst_151 = arith.constant 1.000000e+00 : f32
    %523 = vector.broadcast %cst_151 : f32 to vector<8x128xf32>
    %524 = arith.addf %523, %522 : vector<8x128xf32>
    %525 = arith.divf %523, %524 : vector<8x128xf32>
    %526 = vector.extract_strided_slice %487 {offsets = [0, 128], sizes = [8, 128], strides = [1, 1]} : vector<8x384xf32> to vector<8x128xf32>
    %527 = vector.extract_strided_slice %491 {offsets = [0, 128], sizes = [8, 128], strides = [1, 1]} : vector<8x384xf32> to vector<8x128xf32>
    %528 = arith.addf %526, %527 : vector<8x128xf32>
    %529 = arith.negf %528 : vector<8x128xf32>
    %530 = math.exp %529 : vector<8x128xf32>
    %cst_152 = arith.constant 1.000000e+00 : f32
    %531 = vector.broadcast %cst_152 : f32 to vector<8x128xf32>
    %532 = arith.addf %531, %530 : vector<8x128xf32>
    %533 = arith.divf %531, %532 : vector<8x128xf32>
    %534 = vector.extract_strided_slice %487 {offsets = [0, 256], sizes = [8, 128], strides = [1, 1]} : vector<8x384xf32> to vector<8x128xf32>
    %535 = vector.extract_strided_slice %491 {offsets = [0, 256], sizes = [8, 128], strides = [1, 1]} : vector<8x384xf32> to vector<8x128xf32>
    %536 = vector.broadcast %15 : vector<1x128xf32> to vector<8x128xf32>
    %537 = arith.addf %535, %536 : vector<8x128xf32>
    %538 = arith.mulf %525, %537 : vector<8x128xf32>
    %539 = arith.addf %534, %538 : vector<8x128xf32>
    %540 = math.tanh %539 : vector<8x128xf32>
    %541 = arith.subf %475, %540 : vector<8x128xf32>
    %542 = arith.mulf %533, %541 : vector<8x128xf32>
    %543 = arith.addf %540, %542 : vector<8x128xf32>
    %c6_i32_153 = arith.constant 6 : i32
    %544 = vector.broadcast %c6_i32_153 : i32 to vector<8x1xi32>
    %545 = arith.cmpi sgt, %0, %544 : vector<8x1xi32>
    %c1_i32_154 = arith.constant 1 : i32
    %546 = vector.broadcast %c1_i32_154 : i32 to vector<8x1xi32>
    %547 = arith.cmpi sgt, %0, %546 : vector<8x1xi32>
    %548 = vector.shape_cast %545 : vector<8x1xi1> to vector<8x1xi1>
    %549 = vector.broadcast %548 : vector<8x1xi1> to vector<8x128xi1>
    %550 = arith.select %549, %517, %472 : vector<8x128xi1>, vector<8x128xf32>
    %551 = vector.shape_cast %547 : vector<8x1xi1> to vector<8x1xi1>
    %552 = vector.broadcast %551 : vector<8x1xi1> to vector<8x128xi1>
    %553 = arith.select %552, %543, %475 : vector<8x128xi1>, vector<8x128xf32>
    %cst_155 = arith.constant 0.000000e+00 : f32
    %554 = vector.shape_cast %545 : vector<8x1xi1> to vector<8x1xi1>
    %555 = vector.broadcast %554 : vector<8x1xi1> to vector<8x128xi1>
    %556 = vector.broadcast %cst_155 : f32 to vector<8x128xf32>
    %557 = arith.select %555, %517, %556 : vector<8x128xi1>, vector<8x128xf32>
    %c48_156 = arith.constant 48 : index
    %c0_157 = arith.constant 0 : index
    %558 = vector.load %arg16[%c48_156, %c0_157] : memref<64x128xf32, #tpu.memory_space<vmem>>, vector<8x128xf32>
    tpu.vector_store %arg16[%c48_156, %c0_157], %557 {strides = array<i32>} : memref<64x128xf32, #tpu.memory_space<vmem>>, vector<8x128xf32>,
    %cst_158 = arith.constant 0.000000e+00 : f32
    %559 = vector.shape_cast %547 : vector<8x1xi1> to vector<8x1xi1>
    %560 = vector.broadcast %559 : vector<8x1xi1> to vector<8x128xi1>
    %561 = vector.broadcast %cst_158 : f32 to vector<8x128xf32>
    %562 = arith.select %560, %543, %561 : vector<8x128xi1>, vector<8x128xf32>
    %c8_159 = arith.constant 8 : index
    %c0_160 = arith.constant 0 : index
    %563 = vector.load %arg17[%c8_159, %c0_160] : memref<64x128xf32, #tpu.memory_space<vmem>>, vector<8x128xf32>
    tpu.vector_store %arg17[%c8_159, %c0_160], %562 {strides = array<i32>} : memref<64x128xf32, #tpu.memory_space<vmem>>, vector<8x128xf32>,
    %c56_161 = arith.constant 56 : index
    %c0_162 = arith.constant 0 : index
    %564 = vector.load %arg14[%c56_161, %c0_162] : memref<64x384xf32, #tpu.memory_space<vmem>>, vector<8x384xf32>
    %c0_163 = arith.constant 0 : index
    %c0_164 = arith.constant 0 : index
    %565 = vector.load %arg15[%c0_163, %c0_164] : memref<64x384xf32, #tpu.memory_space<vmem>>, vector<8x384xf32>
    %c0_165 = arith.constant 0 : index
    %c0_166 = arith.constant 0 : index
    %566 = vector.load %arg6[%c0_165, %c0_166] : memref<128x384xf32, #tpu.memory_space<vmem>>, vector<128x384xf32>
    %cst_167 = arith.constant dense<0.000000e+00> : vector<8x384xf32>
    %567 = tpu.matmul %550, %566, %cst_167 {dimension_numbers = #tpu.dot_dimension_numbers<[1], [0], [0], [1], [0, 0, 1, 1], [], []>} : vector<8x128xf32>, vector<128x384xf32>, vector<8x384xf32> -> vector<8x384xf32>
    %c0_168 = arith.constant 0 : index
    %c0_169 = arith.constant 0 : index
    %568 = vector.load %arg8[%c0_168, %c0_169] : memref<128x384xf32, #tpu.memory_space<vmem>>, vector<128x384xf32>
    %cst_170 = arith.constant dense<0.000000e+00> : vector<8x384xf32>
    %569 = tpu.matmul %553, %568, %cst_170 {dimension_numbers = #tpu.dot_dimension_numbers<[1], [0], [0], [1], [0, 0, 1, 1], [], []>} : vector<8x128xf32>, vector<128x384xf32>, vector<8x384xf32> -> vector<8x384xf32>
    %570 = vector.extract_strided_slice %564 {offsets = [0, 0], sizes = [8, 128], strides = [1, 1]} : vector<8x384xf32> to vector<8x128xf32>
    %571 = vector.extract_strided_slice %567 {offsets = [0, 0], sizes = [8, 128], strides = [1, 1]} : vector<8x384xf32> to vector<8x128xf32>
    %572 = arith.addf %570, %571 : vector<8x128xf32>
    %573 = arith.negf %572 : vector<8x128xf32>
    %574 = math.exp %573 : vector<8x128xf32>
    %cst_171 = arith.constant 1.000000e+00 : f32
    %575 = vector.broadcast %cst_171 : f32 to vector<8x128xf32>
    %576 = arith.addf %575, %574 : vector<8x128xf32>
    %577 = arith.divf %575, %576 : vector<8x128xf32>
    %578 = vector.extract_strided_slice %564 {offsets = [0, 128], sizes = [8, 128], strides = [1, 1]} : vector<8x384xf32> to vector<8x128xf32>
    %579 = vector.extract_strided_slice %567 {offsets = [0, 128], sizes = [8, 128], strides = [1, 1]} : vector<8x384xf32> to vector<8x128xf32>
    %580 = arith.addf %578, %579 : vector<8x128xf32>
    %581 = arith.negf %580 : vector<8x128xf32>
    %582 = math.exp %581 : vector<8x128xf32>
    %cst_172 = arith.constant 1.000000e+00 : f32
    %583 = vector.broadcast %cst_172 : f32 to vector<8x128xf32>
    %584 = arith.addf %583, %582 : vector<8x128xf32>
    %585 = arith.divf %583, %584 : vector<8x128xf32>
    %586 = vector.extract_strided_slice %564 {offsets = [0, 256], sizes = [8, 128], strides = [1, 1]} : vector<8x384xf32> to vector<8x128xf32>
    %587 = vector.extract_strided_slice %567 {offsets = [0, 256], sizes = [8, 128], strides = [1, 1]} : vector<8x384xf32> to vector<8x128xf32>
    %588 = vector.broadcast %14 : vector<1x128xf32> to vector<8x128xf32>
    %589 = arith.addf %587, %588 : vector<8x128xf32>
    %590 = arith.mulf %577, %589 : vector<8x128xf32>
    %591 = arith.addf %586, %590 : vector<8x128xf32>
    %592 = math.tanh %591 : vector<8x128xf32>
    %593 = arith.subf %550, %592 : vector<8x128xf32>
    %594 = arith.mulf %585, %593 : vector<8x128xf32>
    %595 = arith.addf %592, %594 : vector<8x128xf32>
    %596 = vector.extract_strided_slice %565 {offsets = [0, 0], sizes = [8, 128], strides = [1, 1]} : vector<8x384xf32> to vector<8x128xf32>
    %597 = vector.extract_strided_slice %569 {offsets = [0, 0], sizes = [8, 128], strides = [1, 1]} : vector<8x384xf32> to vector<8x128xf32>
    %598 = arith.addf %596, %597 : vector<8x128xf32>
    %599 = arith.negf %598 : vector<8x128xf32>
    %600 = math.exp %599 : vector<8x128xf32>
    %cst_173 = arith.constant 1.000000e+00 : f32
    %601 = vector.broadcast %cst_173 : f32 to vector<8x128xf32>
    %602 = arith.addf %601, %600 : vector<8x128xf32>
    %603 = arith.divf %601, %602 : vector<8x128xf32>
    %604 = vector.extract_strided_slice %565 {offsets = [0, 128], sizes = [8, 128], strides = [1, 1]} : vector<8x384xf32> to vector<8x128xf32>
    %605 = vector.extract_strided_slice %569 {offsets = [0, 128], sizes = [8, 128], strides = [1, 1]} : vector<8x384xf32> to vector<8x128xf32>
    %606 = arith.addf %604, %605 : vector<8x128xf32>
    %607 = arith.negf %606 : vector<8x128xf32>
    %608 = math.exp %607 : vector<8x128xf32>
    %cst_174 = arith.constant 1.000000e+00 : f32
    %609 = vector.broadcast %cst_174 : f32 to vector<8x128xf32>
    %610 = arith.addf %609, %608 : vector<8x128xf32>
    %611 = arith.divf %609, %610 : vector<8x128xf32>
    %612 = vector.extract_strided_slice %565 {offsets = [0, 256], sizes = [8, 128], strides = [1, 1]} : vector<8x384xf32> to vector<8x128xf32>
    %613 = vector.extract_strided_slice %569 {offsets = [0, 256], sizes = [8, 128], strides = [1, 1]} : vector<8x384xf32> to vector<8x128xf32>
    %614 = vector.broadcast %15 : vector<1x128xf32> to vector<8x128xf32>
    %615 = arith.addf %613, %614 : vector<8x128xf32>
    %616 = arith.mulf %603, %615 : vector<8x128xf32>
    %617 = arith.addf %612, %616 : vector<8x128xf32>
    %618 = math.tanh %617 : vector<8x128xf32>
    %619 = arith.subf %553, %618 : vector<8x128xf32>
    %620 = arith.mulf %611, %619 : vector<8x128xf32>
    %621 = arith.addf %618, %620 : vector<8x128xf32>
    %c7_i32_175 = arith.constant 7 : i32
    %622 = vector.broadcast %c7_i32_175 : i32 to vector<8x1xi32>
    %623 = arith.cmpi sgt, %0, %622 : vector<8x1xi32>
    %c0_i32_176 = arith.constant 0 : i32
    %624 = vector.broadcast %c0_i32_176 : i32 to vector<8x1xi32>
    %625 = arith.cmpi sgt, %0, %624 : vector<8x1xi32>
    %cst_177 = arith.constant 0.000000e+00 : f32
    %626 = vector.shape_cast %623 : vector<8x1xi1> to vector<8x1xi1>
    %627 = vector.broadcast %626 : vector<8x1xi1> to vector<8x128xi1>
    %628 = vector.broadcast %cst_177 : f32 to vector<8x128xf32>
    %629 = arith.select %627, %595, %628 : vector<8x128xi1>, vector<8x128xf32>
    %c56_178 = arith.constant 56 : index
    %c0_179 = arith.constant 0 : index
    %630 = vector.load %arg16[%c56_178, %c0_179] : memref<64x128xf32, #tpu.memory_space<vmem>>, vector<8x128xf32>
    tpu.vector_store %arg16[%c56_178, %c0_179], %629 {strides = array<i32>} : memref<64x128xf32, #tpu.memory_space<vmem>>, vector<8x128xf32>,
    %cst_180 = arith.constant 0.000000e+00 : f32
    %631 = vector.shape_cast %625 : vector<8x1xi1> to vector<8x1xi1>
    %632 = vector.broadcast %631 : vector<8x1xi1> to vector<8x128xi1>
    %633 = vector.broadcast %cst_180 : f32 to vector<8x128xf32>
    %634 = arith.select %632, %621, %633 : vector<8x128xi1>, vector<8x128xf32>
    %c0_181 = arith.constant 0 : index
    %c0_182 = arith.constant 0 : index
    %635 = vector.load %arg17[%c0_181, %c0_182] : memref<64x128xf32, #tpu.memory_space<vmem>>, vector<8x128xf32>
    tpu.vector_store %arg17[%c0_181, %c0_182], %634 {strides = array<i32>} : memref<64x128xf32, #tpu.memory_space<vmem>>, vector<8x128xf32>,
    %c0_183 = arith.constant 0 : index
    %c0_184 = arith.constant 0 : index
    %636 = vector.load %arg16[%c0_183, %c0_184] : memref<64x128xf32, #tpu.memory_space<vmem>>, vector<64x128xf32>
    %c0_185 = arith.constant 0 : index
    %c0_186 = arith.constant 0 : index
    %637 = vector.load %arg10[%c0_185, %c0_186] : memref<128x128xf32, #tpu.memory_space<vmem>>, vector<128x128xf32>
    %cst_187 = arith.constant dense<0.000000e+00> : vector<64x128xf32>
    %638 = tpu.matmul %636, %637, %cst_187 {dimension_numbers = #tpu.dot_dimension_numbers<[1], [0], [0], [1], [0, 0, 1, 1], [], []>} : vector<64x128xf32>, vector<128x128xf32>, vector<64x128xf32> -> vector<64x128xf32>
    %c0_188 = arith.constant 0 : index
    %c0_189 = arith.constant 0 : index
    %639 = vector.load %arg17[%c0_188, %c0_189] : memref<64x128xf32, #tpu.memory_space<vmem>>, vector<64x128xf32>
    %c0_190 = arith.constant 0 : index
    %c0_191 = arith.constant 0 : index
    %640 = vector.load %arg11[%c0_190, %c0_191] : memref<128x128xf32, #tpu.memory_space<vmem>>, vector<128x128xf32>
    %cst_192 = arith.constant dense<0.000000e+00> : vector<64x128xf32>
    %641 = tpu.matmul %639, %640, %cst_192 {dimension_numbers = #tpu.dot_dimension_numbers<[1], [0], [0], [1], [0, 0, 1, 1], [], []>} : vector<64x128xf32>, vector<128x128xf32>, vector<64x128xf32> -> vector<64x128xf32>
    %642 = arith.addf %638, %641 : vector<64x128xf32>
    %c0_193 = arith.constant 0 : index
    %c0_194 = arith.constant 0 : index
    %643 = vector.load %arg12[%c0_193, %c0_194] : memref<1x128xf32, #tpu.memory_space<vmem>>, vector<1x128xf32>
    %644 = vector.broadcast %643 : vector<1x128xf32> to vector<64x128xf32>
    %645 = arith.addf %642, %644 : vector<64x128xf32>
    %cst_195 = arith.constant dense<0xFF800000> : vector<64xf32>
    %646 = vector.multi_reduction <maximumf>, %645, %cst_195 [1] : vector<64x128xf32> to vector<64xf32>
    %647 = vector.shape_cast %646 : vector<64xf32> to vector<64x1xf32>
    %648 = vector.broadcast %647 : vector<64x1xf32> to vector<64x128xf32>
    %649 = arith.subf %645, %648 : vector<64x128xf32>
    %650 = math.exp %649 : vector<64x128xf32>
    %cst_196 = arith.constant dense<0.000000e+00> : vector<64xf32>
    %651 = vector.multi_reduction <add>, %650, %cst_196 [1] : vector<64x128xf32> to vector<64xf32>
    %652 = vector.shape_cast %651 : vector<64xf32> to vector<64x1xf32>
    %653 = math.log %652 : vector<64x1xf32>
    %654 = vector.broadcast %653 : vector<64x1xf32> to vector<64x128xf32>
    %655 = arith.subf %649, %654 : vector<64x128xf32>
    %c0_197 = arith.constant 0 : index
    %c0_198 = arith.constant 0 : index
    %656 = vector.load %arg13[%c0_197, %c0_198] : memref<64x128xf32, #tpu.memory_space<vmem>>, vector<64x128xf32>
    tpu.vector_store %arg13[%c0_197, %c0_198], %655 {strides = array<i32>} : memref<64x128xf32, #tpu.memory_space<vmem>>, vector<64x128xf32>,
    return
  }
}

</mosaic_0001>

<llo_original>
// kernel: tpu_custom_call.1
$region0: #{tpu_custom_call.1}
  #allocation0 [shape = 'u32[]', space=smem, size = 0x4, offset = 0x4, fixed_abs, tag = 'smem constant byte address 0x4 - core index']
  #allocation1 [shape = 'u32[144,128]{1,0:T(1,128)}', space=vmem, size = 0x12000, scoped, tag = 'internal scratch']
  #allocation2 [shape = 'f32[64,384]{1,0:T(8,128)}', space=vmem, size = 0x18000, scoped, tag = 'scratch operand']
  #allocation3 [shape = 'f32[64,384]{1,0:T(8,128)}', space=vmem, size = 0x18000, scoped, tag = 'scratch operand']
  #allocation4 [shape = 'f32[64,128]{1,0:T(8,128)}', space=vmem, size = 0x8000, scoped, tag = 'scratch operand']
  #allocation5 [shape = 'f32[64,128]{1,0:T(8,128)}', space=vmem, size = 0x8000, scoped, tag = 'scratch operand']
  %s0 = inlined_call_operand.vmem [shape: s32[8,1], index: 0, kind: input, shape index: {}]
  %s1 = inlined_call_operand.vmem [shape: f32[64,32], index: 1, kind: input, shape index: {}]
  %s2 = inlined_call_operand.hbm [shape: f32[32,384], index: 2, kind: input, shape index: {}]
  %s3 = inlined_call_operand.vmem [shape: f32[1,384], index: 3, kind: input, shape index: {}]
  %s4 = inlined_call_operand.hbm [shape: f32[32,384], index: 4, kind: input, shape index: {}]
  %s5 = inlined_call_operand.vmem [shape: f32[1,384], index: 5, kind: input, shape index: {}]
  %s6 = inlined_call_operand.hbm [shape: f32[128,384], index: 6, kind: input, shape index: {}]
  %s7 = inlined_call_operand.vmem [shape: f32[1,128], index: 7, kind: input, shape index: {}]
  %s8 = inlined_call_operand.hbm [shape: f32[128,384], index: 8, kind: input, shape index: {}]
  %s9 = inlined_call_operand.vmem [shape: f32[1,128], index: 9, kind: input, shape index: {}]
  %s10 = inlined_call_operand.vmem [shape: f32[128,128], index: 10, kind: input, shape index: {}]
  %s11 = inlined_call_operand.hbm [shape: f32[128,128], index: 11, kind: input, shape index: {}]
  %s12 = inlined_call_operand.vmem [shape: f32[1,128], index: 12, kind: input, shape index: {}]
  %s13 = inlined_call_operand.hbm [shape: f32[64,128], index: 13, kind: output, shape index: {}]
  %s14 = sld [smem:[#allocation0]]
  $region82: #{tpu_custom_call.1} parent=0
    _
  %s16 = ssub.s32 1, %s14
  %s17 = scalar_select 0, %s16, %s14
  $region1: #{tpu_custom_call.1} parent=0
    #allocation6 [shape = 'u8[49152]{0}', space=vmem, size = 0xc000, scoped, tag = 'input window, operand 2, single buffered']
    #allocation7 [shape = 's32[1]{0}', space=sflag, size = 0x4, scoped, tag = 'scoped memory for tpu_custom_call.1']
    #allocation8 [shape = 's32[1]{0}', space=sflag, size = 0x4, scoped, tag = 'scoped memory for tpu_custom_call.1']
    #allocation9 [shape = 'u8[49152]{0}', space=vmem, size = 0xc000, scoped, tag = 'input window, operand 4, single buffered']
    #allocation10 [shape = 's32[1]{0}', space=sflag, size = 0x4, scoped, tag = 'scoped memory for tpu_custom_call.1']
    #allocation11 [shape = 'u8[196608]{0}', space=vmem, size = 0x30000, scoped, tag = 'input window, operand 6, single buffered']
    #allocation12 [shape = 'u8[196608]{0}', space=vmem, size = 0x30000, scoped, tag = 'input window, operand 8, single buffered']
    #allocation13 [shape = 's32[1]{0}', space=sflag, size = 0x4, scoped, tag = 'scoped memory for tpu_custom_call.1']
    #allocation14 [shape = 'u8[65536]{0}', space=vmem, size = 0x10000, scoped, tag = 'input window, operand 11, single buffered']
    #allocation15 [shape = 'u8[32768]{0}', space=vmem, size = 0x8000, scoped, tag = 'output window, operand 0, single buffered']
    %18 = vsyncpa [#allocation7], 0
    %19 = vsyncpa [#allocation10], 0
    %20 = vsyncpa [#allocation13], 0
    %21 = vsyncpa [#allocation8], 0
    // Predicated region
    $region2: #{tpu_custom_call.1} parent=1 // pred_check
      _
    $region3: #{tpu_custom_call.1} parent=1 // pred_check_branch
      %23 = sbr.rel (0) target = $region5
    $region4: #{tpu_custom_call.1} parent=1 // pred_region
      _
    $region5: #{tpu_custom_call.1} parent=1 // pred_fallthru
      _
    // Predicated region
    $region6: #{tpu_custom_call.1} parent=1 // pred_check
      _
    $region7: #{tpu_custom_call.1} parent=1 // pred_check_branch
      %25 = sbr.rel (0) target = $region9
    $region8: #{tpu_custom_call.1} parent=1 // pred_region
      _
    $region9: #{tpu_custom_call.1} parent=1 // pred_fallthru
      _
    // Predicated region
    $region10: #{tpu_custom_call.1} parent=1 // pred_check
      _
    $region11: #{tpu_custom_call.1} parent=1 // pred_check_branch
      %27 = sbr.rel (0) target = $region13
    $region12: #{tpu_custom_call.1} parent=1 // pred_region
      %s29 = ssub.s32 1536, 1536
      %30 = vsyncadd [#allocation7], %s29
      %s31 = sshll.u32 [#allocation6], 4
      %s32 = int_to_ptr.vmem [resolvable:$true] %s31
      %37 = dma.hbm_to_vmem [thread:$0]  %s2, 1536, %s32, [#allocation7], 384, 384, 24
    $region13: #{tpu_custom_call.1} parent=1 // pred_fallthru
      _
    // Predicated region
    $region14: #{tpu_custom_call.1} parent=1 // pred_check
      _
    $region15: #{tpu_custom_call.1} parent=1 // pred_check_branch
      %39 = sbr.rel (0) target = $region17
    $region16: #{tpu_custom_call.1} parent=1 // pred_region
      _
    $region17: #{tpu_custom_call.1} parent=1 // pred_fallthru
      _
    // Predicated region
    $region18: #{tpu_custom_call.1} parent=1 // pred_check
      _
    $region19: #{tpu_custom_call.1} parent=1 // pred_check_branch
      %41 = sbr.rel (0) target = $region21
    $region20: #{tpu_custom_call.1} parent=1 // pred_region
      %s43 = ssub.s32 1536, 1536
      %44 = vsyncadd [#allocation10], %s43
      %s45 = sshll.u32 [#allocation9], 4
      %s46 = int_to_ptr.vmem [resolvable:$true] %s45
      %51 = dma.hbm_to_vmem [thread:$0]  %s4, 1536, %s46, [#allocation10], 384, 384, 24
    $region21: #{tpu_custom_call.1} parent=1 // pred_fallthru
      _
    // Predicated region
    $region22: #{tpu_custom_call.1} parent=1 // pred_check
      _
    $region23: #{tpu_custom_call.1} parent=1 // pred_check_branch
      %53 = sbr.rel (0) target = $region25
    $region24: #{tpu_custom_call.1} parent=1 // pred_region
      _
    $region25: #{tpu_custom_call.1} parent=1 // pred_fallthru
      _
    // Predicated region
    $region26: #{tpu_custom_call.1} parent=1 // pred_check
      _
    $region27: #{tpu_custom_call.1} parent=1 // pred_check_branch
      %55 = sbr.rel (0) target = $region29
    $region28: #{tpu_custom_call.1} parent=1 // pred_region
      %s57 = ssub.s32 6144, 6144
      %58 = vsyncadd [#allocation10], %s57
      %s59 = sshll.u32 [#allocation11], 4
      %s60 = int_to_ptr.vmem [resolvable:$true] %s59
      %65 = dma.hbm_to_vmem [thread:$0]  %s6, 6144, %s60, [#allocation10], 384, 384, 24
    $region29: #{tpu_custom_call.1} parent=1 // pred_fallthru
      _
    // Predicated region
    $region30: #{tpu_custom_call.1} parent=1 // pred_check
      _
    $region31: #{tpu_custom_call.1} parent=1 // pred_check_branch
      %67 = sbr.rel (0) target = $region33
    $region32: #{tpu_custom_call.1} parent=1 // pred_region
      _
    $region33: #{tpu_custom_call.1} parent=1 // pred_fallthru
      _
    // Predicated region
    $region34: #{tpu_custom_call.1} parent=1 // pred_check
      _
    $region35: #{tpu_custom_call.1} parent=1 // pred_check_branch
      %69 = sbr.rel (0) target = $region37
    $region36: #{tpu_custom_call.1} parent=1 // pred_region
      %s71 = ssub.s32 6144, 6144
      %72 = vsyncadd [#allocation13], %s71
      %s73 = sshll.u32 [#allocation12], 4
      %s74 = int_to_ptr.vmem [resolvable:$true] %s73
      %79 = dma.hbm_to_vmem [thread:$0]  %s8, 6144, %s74, [#allocation13], 384, 384, 24
    $region37: #{tpu_custom_call.1} parent=1 // pred_fallthru
      _
    // Predicated region
    $region38: #{tpu_custom_call.1} parent=1 // pred_check
      _
    $region39: #{tpu_custom_call.1} parent=1 // pred_check_branch
      %81 = sbr.rel (0) target = $region41
    $region40: #{tpu_custom_call.1} parent=1 // pred_region
      _
    $region41: #{tpu_custom_call.1} parent=1 // pred_fallthru
      _
    // Predicated region
    $region42: #{tpu_custom_call.1} parent=1 // pred_check
      _
    $region43: #{tpu_custom_call.1} parent=1 // pred_check_branch
      %83 = sbr.rel (0) target = $region45
    $region44: #{tpu_custom_call.1} parent=1 // pred_region
      _
    $region45: #{tpu_custom_call.1} parent=1 // pred_fallthru
      _
    // Predicated region
    $region46: #{tpu_custom_call.1} parent=1 // pred_check
      _
    $region47: #{tpu_custom_call.1} parent=1 // pred_check_branch
      %85 = sbr.rel (0) target = $region49
    $region48: #{tpu_custom_call.1} parent=1 // pred_region
      %s87 = ssub.s32 2048, 2048
      %88 = vsyncadd [#allocation13], %s87
      %s89 = sshll.u32 [#allocation14], 4
      %s90 = int_to_ptr.vmem [resolvable:$true] %s89
      %95 = dma.hbm_to_vmem [thread:$0]  %s11, 2048, %s90, [#allocation13], 128, 128, 8
    $region49: #{tpu_custom_call.1} parent=1 // pred_fallthru
      _
    // Predicated region
    $region50: #{tpu_custom_call.1} parent=1 // pred_check
      _
    $region51: #{tpu_custom_call.1} parent=1 // pred_check_branch
      %97 = sbr.rel (0) target = $region53
    $region52: #{tpu_custom_call.1} parent=1 // pred_region
      _
    $region53: #{tpu_custom_call.1} parent=1 // pred_fallthru
      _
    // Predicated region
    $region54: #{tpu_custom_call.1} parent=1 // pred_check
      _
    $region55: #{tpu_custom_call.1} parent=1 // pred_check_branch
      %99 = sbr.rel (0) target = $region57
    $region56: #{tpu_custom_call.1} parent=1 // pred_region
      %100 = dma.done [#allocation7], 1536
    $region57: #{tpu_custom_call.1} parent=1 // pred_fallthru
      _
    // Predicated region
    $region58: #{tpu_custom_call.1} parent=1 // pred_check
      _
    $region59: #{tpu_custom_call.1} parent=1 // pred_check_branch
      %102 = sbr.rel (0) target = $region61
    $region60: #{tpu_custom_call.1} parent=1 // pred_region
      %103 = dma.done [#allocation10], 1536
    $region61: #{tpu_custom_call.1} parent=1 // pred_fallthru
      _
    // Predicated region
    $region62: #{tpu_custom_call.1} parent=1 // pred_check
      _
    $region63: #{tpu_custom_call.1} parent=1 // pred_check_branch
      %105 = sbr.rel (0) target = $region65
    $region64: #{tpu_custom_call.1} parent=1 // pred_region
      %106 = dma.done [#allocation10], 6144
    $region65: #{tpu_custom_call.1} parent=1 // pred_fallthru
      _
    // Predicated region
    $region66: #{tpu_custom_call.1} parent=1 // pred_check
      _
    $region67: #{tpu_custom_call.1} parent=1 // pred_check_branch
      %108 = sbr.rel (0) target = $region69
    $region68: #{tpu_custom_call.1} parent=1 // pred_region
      %109 = dma.done [#allocation13], 6144
    $region69: #{tpu_custom_call.1} parent=1 // pred_fallthru
      _
    // Predicated region
    $region70: #{tpu_custom_call.1} parent=1 // pred_check
      _
    $region71: #{tpu_custom_call.1} parent=1 // pred_check_branch
      %111 = sbr.rel (0) target = $region73
    $region72: #{tpu_custom_call.1} parent=1 // pred_region
      %112 = dma.done [#allocation13], 2048
    $region73: #{tpu_custom_call.1} parent=1 // pred_fallthru
      _
    %v113 = vld [vmem:[%s0] sm:$0xff]
    %v114 = vld [vmem:[%s1] sm:$0xff]
    %v115 = vld [vmem:[%s1 + $0x8] sm:$0xff]
    %v116 = vld [vmem:[%s1 + $0x10] sm:$0xff]
    %v117 = vld [vmem:[%s1 + $0x18] sm:$0xff]
    %v118 = vld [vmem:[%s1 + $0x20] sm:$0xff]
    %v119 = vld [vmem:[%s1 + $0x28] sm:$0xff]
    %v120 = vld [vmem:[%s1 + $0x30] sm:$0xff]
    %v121 = vld [vmem:[%s1 + $0x38] sm:$0xff]
    %v122 = vld [vmem:[#allocation6] sm:$0xff]
    %v123 = vld [vmem:[#allocation6 + $0x8] sm:$0xff]
    %v124 = vld [vmem:[#allocation6 + $0x10] sm:$0xff]
    %v125 = vld [vmem:[#allocation6 + $0x18] sm:$0xff]
    %v126 = vld [vmem:[#allocation6 + $0x20] sm:$0xff]
    %v127 = vld [vmem:[#allocation6 + $0x28] sm:$0xff]
    %v128 = vld [vmem:[#allocation6 + $0x30] sm:$0xff]
    %v129 = vld [vmem:[#allocation6 + $0x38] sm:$0xff]
    %v130 = vld [vmem:[#allocation6 + $0x40] sm:$0xff]
    %v131 = vld [vmem:[#allocation6 + $0x48] sm:$0xff]
    %v132 = vld [vmem:[#allocation6 + $0x50] sm:$0xff]
    %v133 = vld [vmem:[#allocation6 + $0x58] sm:$0xff]
    %v134 = vld [vmem:[%s3] sm:$0x7]
    %v136 = vlaneseq
    %v137 = vshrl.u32 %v136, 7
    %v138 = vsub.s32 0, %v137
    %v139 = vrot.slane %v134, %v138
    %v140 = vlaneseq
    %v141 = vshrl.u32 %v140, 7
    %v142 = vsub.s32 1, %v141
    %v143 = vrot.slane %v134, %v142
    %v144 = vlaneseq
    %v145 = vshrl.u32 %v144, 7
    %v146 = vsub.s32 2, %v145
    %v147 = vrot.slane %v134, %v146
    %vm151 = vcmask 261120
    %v153 = vsel %vm151, %v114, 0
    %v156 = vsel %vm151, %v115, 0
    %v159 = vsel %vm151, %v116, 0
    %v162 = vsel %vm151, %v117, 0
    %v165 = vsel %vm151, %v118, 0
    %v168 = vsel %vm151, %v119, 0
    %v171 = vsel %vm151, %v120, 0
    %v174 = vsel %vm151, %v121, 0
    %176 = vmatprep.subr.mxu0 %v123
    %177 = vmatpush1.msra.mxu0 %v122
    %178 = vmatprep.subr.mxu0 %v126
    %179 = vmatpush1.msra.mxu0 %v125
    %180 = vmatprep.subr.mxu0 %v129
    %181 = vmatpush1.msra.mxu0 %v128
    %182 = vmatprep.subr.mxu0 %v132
    %183 = vmatpush1.msra.mxu0 %v131
    %184 = vmatprep.subr.mxu0 0.0
    %185 = vmatpush1.msra.mxu0 0.0
    %186 = vmatprep.subr.mxu0 0.0
    %187 = vmatpush1.msra.mxu0 0.0
    %188 = vmatprep.subr.mxu0 0.0
    %189 = vmatpush1.msra.mxu0 0.0
    %190 = vmatprep.subr.mxu0 0.0
    %191 = vmatpush1.msra.mxu0 0.0
    %192 = vmatprep.subr.mxu0 0.0
    %193 = vmatpush1.msra.mxu0 0.0
    %194 = vmatprep.subr.mxu0 0.0
    %195 = vmatpush1.msra.mxu0 0.0
    %196 = vmatprep.subr.mxu0 0.0
    %197 = vmatpush1.msra.mxu0 0.0
    %198 = vmatprep.subr.mxu0 0.0
    %199 = vmatpush1.msra.mxu0 0.0
    %200 = vmatprep.subr.mxu0 0.0
    %201 = vmatpush1.msra.mxu0 0.0
    %202 = vmatprep.subr.mxu0 0.0
    %203 = vmatpush1.msra.mxu0 0.0
    %204 = vmatprep.subr.mxu0 0.0
    %205 = vmatpush1.msra.mxu0 0.0
    %206 = vmatprep.subr.mxu0 0.0
    %207 = vmatpush1.msra.mxu0 0.0
    %208 = vmatprep.subr.mxu0 0.0
    %209 = vmatpush1.msra.mxu0 0.0
    %210 = vmatprep.subr.mxu0 0.0
    %211 = vmatpush1.msra.mxu0 0.0
    %212 = vmatprep.subr.mxu0 0.0
    %213 = vmatpush1.msra.mxu0 0.0
    %214 = vmatprep.subr.mxu0 0.0
    %215 = vmatpush1.msra.mxu0 0.0
    %216 = vmatprep.subr.mxu0 0.0
    %217 = vmatpush1.msra.mxu0 0.0
    %218 = vmatprep.subr.mxu0 0.0
    %219 = vmatpush1.msra.mxu0 0.0
    %220 = vmatprep.subr.mxu0 0.0
    %221 = vmatpush1.msra.mxu0 0.0
    %222 = vmatprep.subr.mxu0 0.0
    %223 = vmatpush1.msra.mxu0 0.0
    %224 = vmatprep.subr.mxu0 0.0
    %225 = vmatpush1.msra.mxu0 0.0
    %226 = vmatprep.subr.mxu0 0.0
    %227 = vmatpush1.msra.mxu0 0.0
    %228 = vmatprep.subr.mxu0 0.0
    %229 = vmatpush1.msra.mxu0 0.0
    %230 = vmatprep.subr.mxu0 0.0
    %231 = vmatpush1.msra.mxu0 0.0
    %232 = vmatprep.subr.mxu0 0.0
    %233 = vmatpush1.msra.mxu0 0.0
    %234 = vmatprep.subr.mxu0 0.0
    %235 = vmatpush1.msra.mxu0 0.0
    %236 = vmatprep.subr.mxu0 0.0
    %237 = vmatpush1.msra.mxu0 0.0
    %238 = vmatprep.subr.mxu0 0.0
    %239 = vmatpush1.msra.mxu0 0.0
    %240 = vmatprep.mubr.f32.mxu0 0.0
    %241 = vmatmul.mubr.f32.gmra.mrb[0].mxu0 %v153
    %v242 = vpop.f32.mrb[0].mxu0
    %v243 = vadd.f32 %v139, %v242
    %v244 = vpop.f32.mrb[0].mxu0
    %v245 = vadd.f32 %v143, %v244
    %246 = vmatprep.mubr.f32.mxu0 0.0
    %247 = vmatmul.mubr.f32.gmra.mrb[0].mxu0 %v156
    %v248 = vpop.f32.mrb[0].mxu0
    %v249 = vadd.f32 %v139, %v248
    %v250 = vpop.f32.mrb[0].mxu0
    %v251 = vadd.f32 %v143, %v250
    %252 = vmatprep.mubr.f32.mxu0 0.0
    %253 = vmatmul.mubr.f32.gmra.mrb[0].mxu0 %v159
    %v254 = vpop.f32.mrb[0].mxu0
    %v255 = vadd.f32 %v139, %v254
    %v256 = vpop.f32.mrb[0].mxu0
    %v257 = vadd.f32 %v143, %v256
    %258 = vmatprep.mubr.f32.mxu0 0.0
    %259 = vmatmul.mubr.f32.gmra.mrb[0].mxu0 %v162
    %v260 = vpop.f32.mrb[0].mxu0
    %v261 = vadd.f32 %v139, %v260
    %v262 = vpop.f32.mrb[0].mxu0
    %v263 = vadd.f32 %v143, %v262
    %264 = vmatprep.mubr.f32.mxu0 0.0
    %265 = vmatmul.mubr.f32.gmra.mrb[0].mxu0 %v165
    %v266 = vpop.f32.mrb[0].mxu0
    %v267 = vadd.f32 %v139, %v266
    %v268 = vpop.f32.mrb[0].mxu0
    %v269 = vadd.f32 %v143, %v268
    %270 = vmatprep.mubr.f32.mxu0 0.0
    %271 = vmatmul.mubr.f32.gmra.mrb[0].mxu0 %v168
    %v272 = vpop.f32.mrb[0].mxu0
    %v273 = vadd.f32 %v139, %v272
    %v274 = vpop.f32.mrb[0].mxu0
    %v275 = vadd.f32 %v143, %v274
    %276 = vmatprep.mubr.f32.mxu0 0.0
    %277 = vmatmul.mubr.f32.gmra.mrb[0].mxu0 %v171
    %v278 = vpop.f32.mrb[0].mxu0
    %v279 = vadd.f32 %v139, %v278
    %v280 = vpop.f32.mrb[0].mxu0
    %v281 = vadd.f32 %v143, %v280
    %282 = vmatprep.mubr.f32.mxu0 0.0
    %283 = vmatmul.mubr.f32.gmra.mrb[0].mxu0 %v174
    %v284 = vpop.f32.mrb[0].mxu0
    %v285 = vadd.f32 %v139, %v284
    %v286 = vpop.f32.mrb[0].mxu0
    %v287 = vadd.f32 %v143, %v286
    %288 = vdwg.mxu0
    %289 = vmatprep.subr.mxu0 0.0
    %290 = vmatpush1.msra.mxu0 %v124
    %291 = vmatprep.subr.mxu0 0.0
    %292 = vmatpush1.msra.mxu0 %v127
    %293 = vmatprep.subr.mxu0 0.0
    %294 = vmatpush1.msra.mxu0 %v130
    %295 = vmatprep.subr.mxu0 0.0
    %296 = vmatpush1.msra.mxu0 %v133
    %297 = vmatprep.subr.mxu0 0.0
    %298 = vmatpush1.msra.mxu0 0.0
    %299 = vmatprep.subr.mxu0 0.0
    %300 = vmatpush1.msra.mxu0 0.0
    %301 = vmatprep.subr.mxu0 0.0
    %302 = vmatpush1.msra.mxu0 0.0
    %303 = vmatprep.subr.mxu0 0.0
    %304 = vmatpush1.msra.mxu0 0.0
    %305 = vmatprep.subr.mxu0 0.0
    %306 = vmatpush1.msra.mxu0 0.0
    %307 = vmatprep.subr.mxu0 0.0
    %308 = vmatpush1.msra.mxu0 0.0
    %309 = vmatprep.subr.mxu0 0.0
    %310 = vmatpush1.msra.mxu0 0.0
    %311 = vmatprep.subr.mxu0 0.0
    %312 = vmatpush1.msra.mxu0 0.0
    %313 = vmatprep.subr.mxu0 0.0
    %314 = vmatpush1.msra.mxu0 0.0
    %315 = vmatprep.subr.mxu0 0.0
    %316 = vmatpush1.msra.mxu0 0.0
    %317 = vmatprep.subr.mxu0 0.0
    %318 = vmatpush1.msra.mxu0 0.0
    %319 = vmatprep.subr.mxu0 0.0
    %320 = vmatpush1.msra.mxu0 0.0
    %321 = vmatprep.subr.mxu0 0.0
    %322 = vmatpush1.msra.mxu0 0.0
    %323 = vmatprep.subr.mxu0 0.0
    %324 = vmatpush1.msra.mxu0 0.0
    %325 = vmatprep.subr.mxu0 0.0
    %326 = vmatpush1.msra.mxu0 0.0
    %327 = vmatprep.subr.mxu0 0.0
    %328 = vmatpush1.msra.mxu0 0.0
    %329 = vmatprep.subr.mxu0 0.0
    %330 = vmatpush1.msra.mxu0 0.0
    %331 = vmatprep.subr.mxu0 0.0
    %332 = vmatpush1.msra.mxu0 0.0
    %333 = vmatprep.subr.mxu0 0.0
    %334 = vmatpush1.msra.mxu0 0.0
    %335 = vmatprep.subr.mxu0 0.0
    %336 = vmatpush1.msra.mxu0 0.0
    %337 = vmatprep.subr.mxu0 0.0
    %338 = vmatpush1.msra.mxu0 0.0
    %339 = vmatprep.subr.mxu0 0.0
    %340 = vmatpush1.msra.mxu0 0.0
    %341 = vmatprep.subr.mxu0 0.0
    %342 = vmatpush1.msra.mxu0 0.0
    %343 = vmatprep.subr.mxu0 0.0
    %344 = vmatpush1.msra.mxu0 0.0
    %345 = vmatprep.subr.mxu0 0.0
    %346 = vmatpush1.msra.mxu0 0.0
    %347 = vmatprep.subr.mxu0 0.0
    %348 = vmatpush1.msra.mxu0 0.0
    %349 = vmatprep.subr.mxu0 0.0
    %350 = vmatpush1.msra.mxu0 0.0
    %351 = vmatprep.subr.mxu0 0.0
    %352 = vmatpush1.msra.mxu0 0.0
    %353 = vmatprep.mubr.f32.mxu0 0.0
    %354 = vmatmul.mubr.f32.gmra.mrb[0].mxu0 %v153
    %v355 = vpop.f32.mrb[0].mxu0
    %v356 = vadd.f32 %v147, %v355
    %v357 = vpop.f32.mrb[0].mxu0
    %358 = vmatprep.mubr.f32.mxu0 0.0
    %359 = vmatmul.mubr.f32.gmra.mrb[0].mxu0 %v156
    %v360 = vpop.f32.mrb[0].mxu0
    %v361 = vadd.f32 %v147, %v360
    %v362 = vpop.f32.mrb[0].mxu0
    %363 = vmatprep.mubr.f32.mxu0 0.0
    %364 = vmatmul.mubr.f32.gmra.mrb[0].mxu0 %v159
    %v365 = vpop.f32.mrb[0].mxu0
    %v366 = vadd.f32 %v147, %v365
    %v367 = vpop.f32.mrb[0].mxu0
    %368 = vmatprep.mubr.f32.mxu0 0.0
    %369 = vmatmul.mubr.f32.gmra.mrb[0].mxu0 %v162
    %v370 = vpop.f32.mrb[0].mxu0
    %v371 = vadd.f32 %v147, %v370
    %v372 = vpop.f32.mrb[0].mxu0
    %373 = vmatprep.mubr.f32.mxu0 0.0
    %374 = vmatmul.mubr.f32.gmra.mrb[0].mxu0 %v165
    %v375 = vpop.f32.mrb[0].mxu0
    %v376 = vadd.f32 %v147, %v375
    %v377 = vpop.f32.mrb[0].mxu0
    %378 = vmatprep.mubr.f32.mxu0 0.0
    %379 = vmatmul.mubr.f32.gmra.mrb[0].mxu0 %v168
    %v380 = vpop.f32.mrb[0].mxu0
    %v381 = vadd.f32 %v147, %v380
    %v382 = vpop.f32.mrb[0].mxu0
    %383 = vmatprep.mubr.f32.mxu0 0.0
    %384 = vmatmul.mubr.f32.gmra.mrb[0].mxu0 %v171
    %v385 = vpop.f32.mrb[0].mxu0
    %v386 = vadd.f32 %v147, %v385
    %v387 = vpop.f32.mrb[0].mxu0
    %388 = vmatprep.mubr.f32.mxu0 0.0
    %389 = vmatmul.mubr.f32.gmra.mrb[0].mxu0 %v174
    %v390 = vpop.f32.mrb[0].mxu0
    %v391 = vadd.f32 %v147, %v390
    %v392 = vpop.f32.mrb[0].mxu0
    %393 = vdwg.mxu0
    %394 = vst [vmem:[#allocation2] sm:$0xff] %v243
    %395 = vst [vmem:[#allocation2 + $0x8] sm:$0xff] %v245
    %396 = vst [vmem:[#allocation2 + $0x10] sm:$0xff] %v356
    %397 = vst [vmem:[#allocation2 + $0x18] sm:$0xff] %v249
    %398 = vst [vmem:[#allocation2 + $0x20] sm:$0xff] %v251
    %399 = vst [vmem:[#allocation2 + $0x28] sm:$0xff] %v361
    %400 = vst [vmem:[#allocation2 + $0x30] sm:$0xff] %v255
    %401 = vst [vmem:[#allocation2 + $0x38] sm:$0xff] %v257
    %402 = vst [vmem:[#allocation2 + $0x40] sm:$0xff] %v366
    %403 = vst [vmem:[#allocation2 + $0x48] sm:$0xff] %v261
    %404 = vst [vmem:[#allocation2 + $0x50] sm:$0xff] %v263
    %405 = vst [vmem:[#allocation2 + $0x58] sm:$0xff] %v371
    %406 = vst [vmem:[#allocation2 + $0x60] sm:$0xff] %v267
    %407 = vst [vmem:[#allocation2 + $0x68] sm:$0xff] %v269
    %408 = vst [vmem:[#allocation2 + $0x70] sm:$0xff] %v376
    %409 = vst [vmem:[#allocation2 + $0x78] sm:$0xff] %v273
    %410 = vst [vmem:[#allocation2 + $0x80] sm:$0xff] %v275
    %411 = vst [vmem:[#allocation2 + $0x88] sm:$0xff] %v381
    %412 = vst [vmem:[#allocation2 + $0x90] sm:$0xff] %v279
    %413 = vst [vmem:[#allocation2 + $0x98] sm:$0xff] %v281
    %414 = vst [vmem:[#allocation2 + $0xa0] sm:$0xff] %v386
    %415 = vst [vmem:[#allocation2 + $0xa8] sm:$0xff] %v285
    %416 = vst [vmem:[#allocation2 + $0xb0] sm:$0xff] %v287
    %417 = vst [vmem:[#allocation2 + $0xb8] sm:$0xff] %v391
    %v418 = vld [vmem:[#allocation9] sm:$0xff]
    %v419 = vld [vmem:[#allocation9 + $0x8] sm:$0xff]
    %v420 = vld [vmem:[#allocation9 + $0x10] sm:$0xff]
    %v421 = vld [vmem:[#allocation9 + $0x18] sm:$0xff]
    %v422 = vld [vmem:[#allocation9 + $0x20] sm:$0xff]
    %v423 = vld [vmem:[#allocation9 + $0x28] sm:$0xff]
    %v424 = vld [vmem:[#allocation9 + $0x30] sm:$0xff]
    %v425 = vld [vmem:[#allocation9 + $0x38] sm:$0xff]
    %v426 = vld [vmem:[#allocation9 + $0x40] sm:$0xff]
    %v427 = vld [vmem:[#allocation9 + $0x48] sm:$0xff]
    %v428 = vld [vmem:[#allocation9 + $0x50] sm:$0xff]
    %v429 = vld [vmem:[#allocation9 + $0x58] sm:$0xff]
    %v430 = vld [vmem:[%s5] sm:$0x7]
    %v432 = vlaneseq
    %v433 = vshrl.u32 %v432, 7
    %v434 = vsub.s32 0, %v433
    %v435 = vrot.slane %v430, %v434
    %v436 = vlaneseq
    %v437 = vshrl.u32 %v436, 7
    %v438 = vsub.s32 1, %v437
    %v439 = vrot.slane %v430, %v438
    %v440 = vlaneseq
    %v441 = vshrl.u32 %v440, 7
    %v442 = vsub.s32 2, %v441
    %v443 = vrot.slane %v430, %v442
    %447 = vmatprep.subr.mxu0 %v419
    %448 = vmatpush1.msra.mxu0 %v418
    %449 = vmatprep.subr.mxu0 %v422
    %450 = vmatpush1.msra.mxu0 %v421
    %451 = vmatprep.subr.mxu0 %v425
    %452 = vmatpush1.msra.mxu0 %v424
    %453 = vmatprep.subr.mxu0 %v428
    %454 = vmatpush1.msra.mxu0 %v427
    %455 = vmatprep.subr.mxu0 0.0
    %456 = vmatpush1.msra.mxu0 0.0
    %457 = vmatprep.subr.mxu0 0.0
    %458 = vmatpush1.msra.mxu0 0.0
    %459 = vmatprep.subr.mxu0 0.0
    %460 = vmatpush1.msra.mxu0 0.0
    %461 = vmatprep.subr.mxu0 0.0
    %462 = vmatpush1.msra.mxu0 0.0
    %463 = vmatprep.subr.mxu0 0.0
    %464 = vmatpush1.msra.mxu0 0.0
    %465 = vmatprep.subr.mxu0 0.0
    %466 = vmatpush1.msra.mxu0 0.0
    %467 = vmatprep.subr.mxu0 0.0
    %468 = vmatpush1.msra.mxu0 0.0
    %469 = vmatprep.subr.mxu0 0.0
    %470 = vmatpush1.msra.mxu0 0.0
    %471 = vmatprep.subr.mxu0 0.0
    %472 = vmatpush1.msra.mxu0 0.0
    %473 = vmatprep.subr.mxu0 0.0
    %474 = vmatpush1.msra.mxu0 0.0
    %475 = vmatprep.subr.mxu0 0.0
    %476 = vmatpush1.msra.mxu0 0.0
    %477 = vmatprep.subr.mxu0 0.0
    %478 = vmatpush1.msra.mxu0 0.0
    %479 = vmatprep.subr.mxu0 0.0
    %480 = vmatpush1.msra.mxu0 0.0
    %481 = vmatprep.subr.mxu0 0.0
    %482 = vmatpush1.msra.mxu0 0.0
    %483 = vmatprep.subr.mxu0 0.0
    %484 = vmatpush1.msra.mxu0 0.0
    %485 = vmatprep.subr.mxu0 0.0
    %486 = vmatpush1.msra.mxu0 0.0
    %487 = vmatprep.subr.mxu0 0.0
    %488 = vmatpush1.msra.mxu0 0.0
    %489 = vmatprep.subr.mxu0 0.0
    %490 = vmatpush1.msra.mxu0 0.0
    %491 = vmatprep.subr.mxu0 0.0
    %492 = vmatpush1.msra.mxu0 0.0
    %493 = vmatprep.subr.mxu0 0.0
    %494 = vmatpush1.msra.mxu0 0.0
    %495 = vmatprep.subr.mxu0 0.0
    %496 = vmatpush1.msra.mxu0 0.0
    %497 = vmatprep.subr.mxu0 0.0
    %498 = vmatpush1.msra.mxu0 0.0
    %499 = vmatprep.subr.mxu0 0.0
    %500 = vmatpush1.msra.mxu0 0.0
    %501 = vmatprep.subr.mxu0 0.0
    %502 = vmatpush1.msra.mxu0 0.0
    %503 = vmatprep.subr.mxu0 0.0
    %504 = vmatpush1.msra.mxu0 0.0
    %505 = vmatprep.subr.mxu0 0.0
    %506 = vmatpush1.msra.mxu0 0.0
    %507 = vmatprep.subr.mxu0 0.0
    %508 = vmatpush1.msra.mxu0 0.0
    %509 = vmatprep.subr.mxu0 0.0
    %510 = vmatpush1.msra.mxu0 0.0
    %511 = vmatprep.mubr.f32.mxu0 0.0
    %512 = vmatmul.mubr.f32.gmra.mrb[0].mxu0 %v153
    %v513 = vpop.f32.mrb[0].mxu0
    %v514 = vadd.f32 %v435, %v513
    %v515 = vpop.f32.mrb[0].mxu0
    %v516 = vadd.f32 %v439, %v515
    %517 = vmatprep.mubr.f32.mxu0 0.0
    %518 = vmatmul.mubr.f32.gmra.mrb[0].mxu0 %v156
    %v519 = vpop.f32.mrb[0].mxu0
    %v520 = vadd.f32 %v435, %v519
    %v521 = vpop.f32.mrb[0].mxu0
    %v522 = vadd.f32 %v439, %v521
    %523 = vmatprep.mubr.f32.mxu0 0.0
    %524 = vmatmul.mubr.f32.gmra.mrb[0].mxu0 %v159
    %v525 = vpop.f32.mrb[0].mxu0
    %v526 = vadd.f32 %v435, %v525
    %v527 = vpop.f32.mrb[0].mxu0
    %v528 = vadd.f32 %v439, %v527
    %529 = vmatprep.mubr.f32.mxu0 0.0
    %530 = vmatmul.mubr.f32.gmra.mrb[0].mxu0 %v162
    %v531 = vpop.f32.mrb[0].mxu0
    %v532 = vadd.f32 %v435, %v531
    %v533 = vpop.f32.mrb[0].mxu0
    %v534 = vadd.f32 %v439, %v533
    %535 = vmatprep.mubr.f32.mxu0 0.0
    %536 = vmatmul.mubr.f32.gmra.mrb[0].mxu0 %v165
    %v537 = vpop.f32.mrb[0].mxu0
    %v538 = vadd.f32 %v435, %v537
    %v539 = vpop.f32.mrb[0].mxu0
    %v540 = vadd.f32 %v439, %v539
    %541 = vmatprep.mubr.f32.mxu0 0.0
    %542 = vmatmul.mubr.f32.gmra.mrb[0].mxu0 %v168
    %v543 = vpop.f32.mrb[0].mxu0
    %v544 = vadd.f32 %v435, %v543
    %v545 = vpop.f32.mrb[0].mxu0
    %v546 = vadd.f32 %v439, %v545
    %547 = vmatprep.mubr.f32.mxu0 0.0
    %548 = vmatmul.mubr.f32.gmra.mrb[0].mxu0 %v171
    %v549 = vpop.f32.mrb[0].mxu0
    %v550 = vadd.f32 %v435, %v549
    %v551 = vpop.f32.mrb[0].mxu0
    %v552 = vadd.f32 %v439, %v551
    %553 = vmatprep.mubr.f32.mxu0 0.0
    %554 = vmatmul.mubr.f32.gmra.mrb[0].mxu0 %v174
    %v555 = vpop.f32.mrb[0].mxu0
    %v556 = vadd.f32 %v435, %v555
    %v557 = vpop.f32.mrb[0].mxu0
    %v558 = vadd.f32 %v439, %v557
    %559 = vdwg.mxu0
    %560 = vmatprep.subr.mxu0 0.0
    %561 = vmatpush1.msra.mxu0 %v420
    %562 = vmatprep.subr.mxu0 0.0
    %563 = vmatpush1.msra.mxu0 %v423
    %564 = vmatprep.subr.mxu0 0.0
    %565 = vmatpush1.msra.mxu0 %v426
    %566 = vmatprep.subr.mxu0 0.0
    %567 = vmatpush1.msra.mxu0 %v429
    %568 = vmatprep.subr.mxu0 0.0
    %569 = vmatpush1.msra.mxu0 0.0
    %570 = vmatprep.subr.mxu0 0.0
    %571 = vmatpush1.msra.mxu0 0.0
    %572 = vmatprep.subr.mxu0 0.0
    %573 = vmatpush1.msra.mxu0 0.0
    %574 = vmatprep.subr.mxu0 0.0
    %575 = vmatpush1.msra.mxu0 0.0
    %576 = vmatprep.subr.mxu0 0.0
    %577 = vmatpush1.msra.mxu0 0.0
    %578 = vmatprep.subr.mxu0 0.0
    %579 = vmatpush1.msra.mxu0 0.0
    %580 = vmatprep.subr.mxu0 0.0
    %581 = vmatpush1.msra.mxu0 0.0
    %582 = vmatprep.subr.mxu0 0.0
    %583 = vmatpush1.msra.mxu0 0.0
    %584 = vmatprep.subr.mxu0 0.0
    %585 = vmatpush1.msra.mxu0 0.0
    %586 = vmatprep.subr.mxu0 0.0
    %587 = vmatpush1.msra.mxu0 0.0
    %588 = vmatprep.subr.mxu0 0.0
    %589 = vmatpush1.msra.mxu0 0.0
    %590 = vmatprep.subr.mxu0 0.0
    %591 = vmatpush1.msra.mxu0 0.0
    %592 = vmatprep.subr.mxu0 0.0
    %593 = vmatpush1.msra.mxu0 0.0
    %594 = vmatprep.subr.mxu0 0.0
    %595 = vmatpush1.msra.mxu0 0.0
    %596 = vmatprep.subr.mxu0 0.0
    %597 = vmatpush1.msra.mxu0 0.0
    %598 = vmatprep.subr.mxu0 0.0
    %599 = vmatpush1.msra.mxu0 0.0
    %600 = vmatprep.subr.mxu0 0.0
    %601 = vmatpush1.msra.mxu0 0.0
    %602 = vmatprep.subr.mxu0 0.0
    %603 = vmatpush1.msra.mxu0 0.0
    %604 = vmatprep.subr.mxu0 0.0
    %605 = vmatpush1.msra.mxu0 0.0
    %606 = vmatprep.subr.mxu0 0.0
    %607 = vmatpush1.msra.mxu0 0.0
    %608 = vmatprep.subr.mxu0 0.0
    %609 = vmatpush1.msra.mxu0 0.0
    %610 = vmatprep.subr.mxu0 0.0
    %611 = vmatpush1.msra.mxu0 0.0
    %612 = vmatprep.subr.mxu0 0.0
    %613 = vmatpush1.msra.mxu0 0.0
    %614 = vmatprep.subr.mxu0 0.0
    %615 = vmatpush1.msra.mxu0 0.0
    %616 = vmatprep.subr.mxu0 0.0
    %617 = vmatpush1.msra.mxu0 0.0
    %618 = vmatprep.subr.mxu0 0.0
    %619 = vmatpush1.msra.mxu0 0.0
    %620 = vmatprep.subr.mxu0 0.0
    %621 = vmatpush1.msra.mxu0 0.0
    %622 = vmatprep.subr.mxu0 0.0
    %623 = vmatpush1.msra.mxu0 0.0
    %624 = vmatprep.mubr.f32.mxu0 0.0
    %625 = vmatmul.mubr.f32.gmra.mrb[0].mxu0 %v153
    %v626 = vpop.f32.mrb[0].mxu0
    %v627 = vadd.f32 %v443, %v626
    %v628 = vpop.f32.mrb[0].mxu0
    %629 = vmatprep.mubr.f32.mxu0 0.0
    %630 = vmatmul.mubr.f32.gmra.mrb[0].mxu0 %v156
    %v631 = vpop.f32.mrb[0].mxu0
    %v632 = vadd.f32 %v443, %v631
    %v633 = vpop.f32.mrb[0].mxu0
    %634 = vmatprep.mubr.f32.mxu0 0.0
    %635 = vmatmul.mubr.f32.gmra.mrb[0].mxu0 %v159
    %v636 = vpop.f32.mrb[0].mxu0
    %v637 = vadd.f32 %v443, %v636
    %v638 = vpop.f32.mrb[0].mxu0
    %639 = vmatprep.mubr.f32.mxu0 0.0
    %640 = vmatmul.mubr.f32.gmra.mrb[0].mxu0 %v162
    %v641 = vpop.f32.mrb[0].mxu0
    %v642 = vadd.f32 %v443, %v641
    %v643 = vpop.f32.mrb[0].mxu0
    %644 = vmatprep.mubr.f32.mxu0 0.0
    %645 = vmatmul.mubr.f32.gmra.mrb[0].mxu0 %v165
    %v646 = vpop.f32.mrb[0].mxu0
    %v647 = vadd.f32 %v443, %v646
    %v648 = vpop.f32.mrb[0].mxu0
    %649 = vmatprep.mubr.f32.mxu0 0.0
    %650 = vmatmul.mubr.f32.gmra.mrb[0].mxu0 %v168
    %v651 = vpop.f32.mrb[0].mxu0
    %v652 = vadd.f32 %v443, %v651
    %v653 = vpop.f32.mrb[0].mxu0
    %654 = vmatprep.mubr.f32.mxu0 0.0
    %655 = vmatmul.mubr.f32.gmra.mrb[0].mxu0 %v171
    %v656 = vpop.f32.mrb[0].mxu0
    %v657 = vadd.f32 %v443, %v656
    %v658 = vpop.f32.mrb[0].mxu0
    %659 = vmatprep.mubr.f32.mxu0 0.0
    %660 = vmatmul.mubr.f32.gmra.mrb[0].mxu0 %v174
    %v661 = vpop.f32.mrb[0].mxu0
    %v662 = vadd.f32 %v443, %v661
    %v663 = vpop.f32.mrb[0].mxu0
    %664 = vdwg.mxu0
    %665 = vst [vmem:[#allocation3] sm:$0xff] %v514
    %666 = vst [vmem:[#allocation3 + $0x8] sm:$0xff] %v516
    %667 = vst [vmem:[#allocation3 + $0x10] sm:$0xff] %v627
    %668 = vst [vmem:[#allocation3 + $0x18] sm:$0xff] %v520
    %669 = vst [vmem:[#allocation3 + $0x20] sm:$0xff] %v522
    %670 = vst [vmem:[#allocation3 + $0x28] sm:$0xff] %v632
    %671 = vst [vmem:[#allocation3 + $0x30] sm:$0xff] %v526
    %672 = vst [vmem:[#allocation3 + $0x38] sm:$0xff] %v528
    %673 = vst [vmem:[#allocation3 + $0x40] sm:$0xff] %v637
    %674 = vst [vmem:[#allocation3 + $0x48] sm:$0xff] %v532
    %675 = vst [vmem:[#allocation3 + $0x50] sm:$0xff] %v534
    %676 = vst [vmem:[#allocation3 + $0x58] sm:$0xff] %v642
    %677 = vst [vmem:[#allocation3 + $0x60] sm:$0xff] %v538
    %678 = vst [vmem:[#allocation3 + $0x68] sm:$0xff] %v540
    %679 = vst [vmem:[#allocation3 + $0x70] sm:$0xff] %v647
    %680 = vst [vmem:[#allocation3 + $0x78] sm:$0xff] %v544
    %681 = vst [vmem:[#allocation3 + $0x80] sm:$0xff] %v546
    %682 = vst [vmem:[#allocation3 + $0x88] sm:$0xff] %v652
    %683 = vst [vmem:[#allocation3 + $0x90] sm:$0xff] %v550
    %684 = vst [vmem:[#allocation3 + $0x98] sm:$0xff] %v552
    %685 = vst [vmem:[#allocation3 + $0xa0] sm:$0xff] %v657
    %686 = vst [vmem:[#allocation3 + $0xa8] sm:$0xff] %v556
    %687 = vst [vmem:[#allocation3 + $0xb0] sm:$0xff] %v558
    %688 = vst [vmem:[#allocation3 + $0xb8] sm:$0xff] %v662
    %v689 = vld [vmem:[%s7] sm:$0x1]
    %v690 = vld [vmem:[%s9] sm:$0x1]
    %v691 = vld [vmem:[#allocation2] sm:$0xff]
    %v692 = vld [vmem:[#allocation2 + $0x8] sm:$0xff]
    %v693 = vld [vmem:[#allocation2 + $0x10] sm:$0xff]
    %v694 = vld [vmem:[#allocation3 + $0xa8] sm:$0xff]
    %v695 = vld [vmem:[#allocation3 + $0xb0] sm:$0xff]
    %v696 = vld [vmem:[#allocation3 + $0xb8] sm:$0xff]
    %v697 = vld [vmem:[#allocation11] sm:$0xff]
    %v698 = vld [vmem:[#allocation11 + $0x8] sm:$0xff]
    %v699 = vld [vmem:[#allocation11 + $0x10] sm:$0xff]
    %v700 = vld [vmem:[#allocation11 + $0x18] sm:$0xff]
    %v701 = vld [vmem:[#allocation11 + $0x20] sm:$0xff]
    %v702 = vld [vmem:[#allocation11 + $0x28] sm:$0xff]
    %v703 = vld [vmem:[#allocation11 + $0x30] sm:$0xff]
    %v704 = vld [vmem:[#allocation11 + $0x38] sm:$0xff]
    %v705 = vld [vmem:[#allocation11 + $0x40] sm:$0xff]
    %v706 = vld [vmem:[#allocation11 + $0x48] sm:$0xff]
    %v707 = vld [vmem:[#allocation11 + $0x50] sm:$0xff]
    %v708 = vld [vmem:[#allocation11 + $0x58] sm:$0xff]
    %v709 = vld [vmem:[#allocation11 + $0x60] sm:$0xff]
    %v710 = vld [vmem:[#allocation11 + $0x68] sm:$0xff]
    %v711 = vld [vmem:[#allocation11 + $0x70] sm:$0xff]
    %v712 = vld [vmem:[#allocation11 + $0x78] sm:$0xff]
    %v713 = vld [vmem:[#allocation11 + $0x80] sm:$0xff]
    %v714 = vld [vmem:[#allocation11 + $0x88] sm:$0xff]
    %v715 = vld [vmem:[#allocation11 + $0x90] sm:$0xff]
    %v716 = vld [vmem:[#allocation11 + $0x98] sm:$0xff]
    %v717 = vld [vmem:[#allocation11 + $0xa0] sm:$0xff]
    %v718 = vld [vmem:[#allocation11 + $0xa8] sm:$0xff]
    %v719 = vld [vmem:[#allocation11 + $0xb0] sm:$0xff]
    %v720 = vld [vmem:[#allocation11 + $0xb8] sm:$0xff]
    %v721 = vld [vmem:[#allocation11 + $0xc0] sm:$0xff]
    %v722 = vld [vmem:[#allocation11 + $0xc8] sm:$0xff]
    %v723 = vld [vmem:[#allocation11 + $0xd0] sm:$0xff]
    %v724 = vld [vmem:[#allocation11 + $0xd8] sm:$0xff]
    %v725 = vld [vmem:[#allocation11 + $0xe0] sm:$0xff]
    %v726 = vld [vmem:[#allocation11 + $0xe8] sm:$0xff]
    %v727 = vld [vmem:[#allocation11 + $0xf0] sm:$0xff]
    %v728 = vld [vmem:[#allocation11 + $0xf8] sm:$0xff]
    %v729 = vld [vmem:[#allocation11 + $0x100] sm:$0xff]
    %v730 = vld [vmem:[#allocation11 + $0x108] sm:$0xff]
    %v731 = vld [vmem:[#allocation11 + $0x110] sm:$0xff]
    %v732 = vld [vmem:[#allocation11 + $0x118] sm:$0xff]
    %v733 = vld [vmem:[#allocation11 + $0x120] sm:$0xff]
    %v734 = vld [vmem:[#allocation11 + $0x128] sm:$0xff]
    %v735 = vld [vmem:[#allocation11 + $0x130] sm:$0xff]
    %v736 = vld [vmem:[#allocation11 + $0x138] sm:$0xff]
    %v737 = vld [vmem:[#allocation11 + $0x140] sm:$0xff]
    %v738 = vld [vmem:[#allocation11 + $0x148] sm:$0xff]
    %v739 = vld [vmem:[#allocation11 + $0x150] sm:$0xff]
    %v740 = vld [vmem:[#allocation11 + $0x158] sm:$0xff]
    %v741 = vld [vmem:[#allocation11 + $0x160] sm:$0xff]
    %v742 = vld [vmem:[#allocation11 + $0x168] sm:$0xff]
    %v743 = vld [vmem:[#allocation11 + $0x170] sm:$0xff]
    %v744 = vld [vmem:[#allocation11 + $0x178] sm:$0xff]
    %745 = vmatprep.subr.mxu0 %v698
    %746 = vmatpush1.msra.mxu0 %v697
    %747 = vmatprep.subr.mxu0 %v701
    %748 = vmatpush1.msra.mxu0 %v700
    %749 = vmatprep.subr.mxu0 %v704
    %750 = vmatpush1.msra.mxu0 %v703
    %751 = vmatprep.subr.mxu0 %v707
    %752 = vmatpush1.msra.mxu0 %v706
    %753 = vmatprep.subr.mxu0 %v710
    %754 = vmatpush1.msra.mxu0 %v709
    %755 = vmatprep.subr.mxu0 %v713
    %756 = vmatpush1.msra.mxu0 %v712
    %757 = vmatprep.subr.mxu0 %v716
    %758 = vmatpush1.msra.mxu0 %v715
    %759 = vmatprep.subr.mxu0 %v719
    %760 = vmatpush1.msra.mxu0 %v718
    %761 = vmatprep.subr.mxu0 %v722
    %762 = vmatpush1.msra.mxu0 %v721
    %763 = vmatprep.subr.mxu0 %v725
    %764 = vmatpush1.msra.mxu0 %v724
    %765 = vmatprep.subr.mxu0 %v728
    %766 = vmatpush1.msra.mxu0 %v727
    %767 = vmatprep.subr.mxu0 %v731
    %768 = vmatpush1.msra.mxu0 %v730
    %769 = vmatprep.subr.mxu0 %v734
    %770 = vmatpush1.msra.mxu0 %v733
    %771 = vmatprep.subr.mxu0 %v737
    %772 = vmatpush1.msra.mxu0 %v736
    %773 = vmatprep.subr.mxu0 %v740
    %774 = vmatpush1.msra.mxu0 %v739
    %775 = vmatprep.subr.mxu0 %v743
    %776 = vmatpush1.msra.mxu0 %v742
    %777 = vmatprep.subr.mxu0 0.0
    %778 = vmatpush1.msra.mxu0 0.0
    %779 = vmatprep.subr.mxu0 0.0
    %780 = vmatpush1.msra.mxu0 0.0
    %781 = vmatprep.subr.mxu0 0.0
    %782 = vmatpush1.msra.mxu0 0.0
    %783 = vmatprep.subr.mxu0 0.0
    %784 = vmatpush1.msra.mxu0 0.0
    %785 = vmatprep.subr.mxu0 0.0
    %786 = vmatpush1.msra.mxu0 0.0
    %787 = vmatprep.subr.mxu0 0.0
    %788 = vmatpush1.msra.mxu0 0.0
    %789 = vmatprep.subr.mxu0 0.0
    %790 = vmatpush1.msra.mxu0 0.0
    %791 = vmatprep.subr.mxu0 0.0
    %792 = vmatpush1.msra.mxu0 0.0
    %793 = vmatprep.subr.mxu0 0.0
    %794 = vmatpush1.msra.mxu0 0.0
    %795 = vmatprep.subr.mxu0 0.0
    %796 = vmatpush1.msra.mxu0 0.0
    %797 = vmatprep.subr.mxu0 0.0
    %798 = vmatpush1.msra.mxu0 0.0
    %799 = vmatprep.subr.mxu0 0.0
    %800 = vmatpush1.msra.mxu0 0.0
    %801 = vmatprep.subr.mxu0 0.0
    %802 = vmatpush1.msra.mxu0 0.0
    %803 = vmatprep.subr.mxu0 0.0
    %804 = vmatpush1.msra.mxu0 0.0
    %805 = vmatprep.subr.mxu0 0.0
    %806 = vmatpush1.msra.mxu0 0.0
    %807 = vmatprep.subr.mxu0 0.0
    %808 = vmatpush1.msra.mxu0 0.0
    %809 = vmatprep.mubr.f32.mxu0 0.0
    %810 = vmatmul.mubr.f32.gmra.mrb[0].mxu0 0.0
    %v811 = vpop.f32.mrb[0].mxu0
    %v812 = vadd.f32 0.0, %v811
    %v813 = vpop.f32.mrb[0].mxu0
    %v814 = vadd.f32 0.0, %v813
    %815 = vdwg.mxu0
    %816 = vmatprep.subr.mxu0 0.0
    %817 = vmatpush1.msra.mxu0 %v699
    %818 = vmatprep.subr.mxu0 0.0
    %819 = vmatpush1.msra.mxu0 %v702
    %820 = vmatprep.subr.mxu0 0.0
    %821 = vmatpush1.msra.mxu0 %v705
    %822 = vmatprep.subr.mxu0 0.0
    %823 = vmatpush1.msra.mxu0 %v708
    %824 = vmatprep.subr.mxu0 0.0
    %825 = vmatpush1.msra.mxu0 %v711
    %826 = vmatprep.subr.mxu0 0.0
    %827 = vmatpush1.msra.mxu0 %v714
    %828 = vmatprep.subr.mxu0 0.0
    %829 = vmatpush1.msra.mxu0 %v717
    %830 = vmatprep.subr.mxu0 0.0
    %831 = vmatpush1.msra.mxu0 %v720
    %832 = vmatprep.subr.mxu0 0.0
    %833 = vmatpush1.msra.mxu0 %v723
    %834 = vmatprep.subr.mxu0 0.0
    %835 = vmatpush1.msra.mxu0 %v726
    %836 = vmatprep.subr.mxu0 0.0
    %837 = vmatpush1.msra.mxu0 %v729
    %838 = vmatprep.subr.mxu0 0.0
    %839 = vmatpush1.msra.mxu0 %v732
    %840 = vmatprep.subr.mxu0 0.0
    %841 = vmatpush1.msra.mxu0 %v735
    %842 = vmatprep.subr.mxu0 0.0
    %843 = vmatpush1.msra.mxu0 %v738
    %844 = vmatprep.subr.mxu0 0.0
    %845 = vmatpush1.msra.mxu0 %v741
    %846 = vmatprep.subr.mxu0 0.0
    %847 = vmatpush1.msra.mxu0 %v744
    %848 = vmatprep.subr.mxu0 0.0
    %849 = vmatpush1.msra.mxu0 0.0
    %850 = vmatprep.subr.mxu0 0.0
    %851 = vmatpush1.msra.mxu0 0.0
    %852 = vmatprep.subr.mxu0 0.0
    %853 = vmatpush1.msra.mxu0 0.0
    %854 = vmatprep.subr.mxu0 0.0
    %855 = vmatpush1.msra.mxu0 0.0
    %856 = vmatprep.subr.mxu0 0.0
    %857 = vmatpush1.msra.mxu0 0.0
    %858 = vmatprep.subr.mxu0 0.0
    %859 = vmatpush1.msra.mxu0 0.0
    %860 = vmatprep.subr.mxu0 0.0
    %861 = vmatpush1.msra.mxu0 0.0
    %862 = vmatprep.subr.mxu0 0.0
    %863 = vmatpush1.msra.mxu0 0.0
    %864 = vmatprep.subr.mxu0 0.0
    %865 = vmatpush1.msra.mxu0 0.0
    %866 = vmatprep.subr.mxu0 0.0
    %867 = vmatpush1.msra.mxu0 0.0
    %868 = vmatprep.subr.mxu0 0.0
    %869 = vmatpush1.msra.mxu0 0.0
    %870 = vmatprep.subr.mxu0 0.0
    %871 = vmatpush1.msra.mxu0 0.0
    %872 = vmatprep.subr.mxu0 0.0
    %873 = vmatpush1.msra.mxu0 0.0
    %874 = vmatprep.subr.mxu0 0.0
    %875 = vmatpush1.msra.mxu0 0.0
    %876 = vmatprep.subr.mxu0 0.0
    %877 = vmatpush1.msra.mxu0 0.0
    %878 = vmatprep.subr.mxu0 0.0
    %879 = vmatpush1.msra.mxu0 0.0
    %880 = vmatprep.mubr.f32.mxu0 0.0
    %881 = vmatmul.mubr.f32.gmra.mrb[0].mxu0 0.0
    %v882 = vpop.f32.mrb[0].mxu0
    %v883 = vadd.f32 0.0, %v882
    %v884 = vpop.f32.mrb[0].mxu0
    %885 = vdwg.mxu0
    %v886 = vld [vmem:[#allocation12] sm:$0xff]
    %v887 = vld [vmem:[#allocation12 + $0x8] sm:$0xff]
    %v888 = vld [vmem:[#allocation12 + $0x10] sm:$0xff]
    %v889 = vld [vmem:[#allocation12 + $0x18] sm:$0xff]
    %v890 = vld [vmem:[#allocation12 + $0x20] sm:$0xff]
    %v891 = vld [vmem:[#allocation12 + $0x28] sm:$0xff]
    %v892 = vld [vmem:[#allocation12 + $0x30] sm:$0xff]
    %v893 = vld [vmem:[#allocation12 + $0x38] sm:$0xff]
    %v894 = vld [vmem:[#allocation12 + $0x40] sm:$0xff]
    %v895 = vld [vmem:[#allocation12 + $0x48] sm:$0xff]
    %v896 = vld [vmem:[#allocation12 + $0x50] sm:$0xff]
    %v897 = vld [vmem:[#allocation12 + $0x58] sm:$0xff]
    %v898 = vld [vmem:[#allocation12 + $0x60] sm:$0xff]
    %v899 = vld [vmem:[#allocation12 + $0x68] sm:$0xff]
    %v900 = vld [vmem:[#allocation12 + $0x70] sm:$0xff]
    %v901 = vld [vmem:[#allocation12 + $0x78] sm:$0xff]
    %v902 = vld [vmem:[#allocation12 + $0x80] sm:$0xff]
    %v903 = vld [vmem:[#allocation12 + $0x88] sm:$0xff]
    %v904 = vld [vmem:[#allocation12 + $0x90] sm:$0xff]
    %v905 = vld [vmem:[#allocation12 + $0x98] sm:$0xff]
    %v906 = vld [vmem:[#allocation12 + $0xa0] sm:$0xff]
    %v907 = vld [vmem:[#allocation12 + $0xa8] sm:$0xff]
    %v908 = vld [vmem:[#allocation12 + $0xb0] sm:$0xff]
    %v909 = vld [vmem:[#allocation12 + $0xb8] sm:$0xff]
    %v910 = vld [vmem:[#allocation12 + $0xc0] sm:$0xff]
    %v911 = vld [vmem:[#allocation12 + $0xc8] sm:$0xff]
    %v912 = vld [vmem:[#allocation12 + $0xd0] sm:$0xff]
    %v913 = vld [vmem:[#allocation12 + $0xd8] sm:$0xff]
    %v914 = vld [vmem:[#allocation12 + $0xe0] sm:$0xff]
    %v915 = vld [vmem:[#allocation12 + $0xe8] sm:$0xff]
    %v916 = vld [vmem:[#allocation12 + $0xf0] sm:$0xff]
    %v917 = vld [vmem:[#allocation12 + $0xf8] sm:$0xff]
    %v918 = vld [vmem:[#allocation12 + $0x100] sm:$0xff]
    %v919 = vld [vmem:[#allocation12 + $0x108] sm:$0xff]
    %v920 = vld [vmem:[#allocation12 + $0x110] sm:$0xff]
    %v921 = vld [vmem:[#allocation12 + $0x118] sm:$0xff]
    %v922 = vld [vmem:[#allocation12 + $0x120] sm:$0xff]
    %v923 = vld [vmem:[#allocation12 + $0x128] sm:$0xff]
    %v924 = vld [vmem:[#allocation12 + $0x130] sm:$0xff]
    %v925 = vld [vmem:[#allocation12 + $0x138] sm:$0xff]
    %v926 = vld [vmem:[#allocation12 + $0x140] sm:$0xff]
    %v927 = vld [vmem:[#allocation12 + $0x148] sm:$0xff]
    %v928 = vld [vmem:[#allocation12 + $0x150] sm:$0xff]
    %v929 = vld [vmem:[#allocation12 + $0x158] sm:$0xff]
    %v930 = vld [vmem:[#allocation12 + $0x160] sm:$0xff]
    %v931 = vld [vmem:[#allocation12 + $0x168] sm:$0xff]
    %v932 = vld [vmem:[#allocation12 + $0x170] sm:$0xff]
    %v933 = vld [vmem:[#allocation12 + $0x178] sm:$0xff]
    %934 = vmatprep.subr.mxu0 %v887
    %935 = vmatpush1.msra.mxu0 %v886
    %936 = vmatprep.subr.mxu0 %v890
    %937 = vmatpush1.msra.mxu0 %v889
    %938 = vmatprep.subr.mxu0 %v893
    %939 = vmatpush1.msra.mxu0 %v892
    %940 = vmatprep.subr.mxu0 %v896
    %941 = vmatpush1.msra.mxu0 %v895
    %942 = vmatprep.subr.mxu0 %v899
    %943 = vmatpush1.msra.mxu0 %v898
    %944 = vmatprep.subr.mxu0 %v902
    %945 = vmatpush1.msra.mxu0 %v901
    %946 = vmatprep.subr.mxu0 %v905
    %947 = vmatpush1.msra.mxu0 %v904
    %948 = vmatprep.subr.mxu0 %v908
    %949 = vmatpush1.msra.mxu0 %v907
    %950 = vmatprep.subr.mxu0 %v911
    %951 = vmatpush1.msra.mxu0 %v910
    %952 = vmatprep.subr.mxu0 %v914
    %953 = vmatpush1.msra.mxu0 %v913
    %954 = vmatprep.subr.mxu0 %v917
    %955 = vmatpush1.msra.mxu0 %v916
    %956 = vmatprep.subr.mxu0 %v920
    %957 = vmatpush1.msra.mxu0 %v919
    %958 = vmatprep.subr.mxu0 %v923
    %959 = vmatpush1.msra.mxu0 %v922
    %960 = vmatprep.subr.mxu0 %v926
    %961 = vmatpush1.msra.mxu0 %v925
    %962 = vmatprep.subr.mxu0 %v929
    %963 = vmatpush1.msra.mxu0 %v928
    %964 = vmatprep.subr.mxu0 %v932
    %965 = vmatpush1.msra.mxu0 %v931
    %966 = vmatprep.subr.mxu0 0.0
    %967 = vmatpush1.msra.mxu0 0.0
    %968 = vmatprep.subr.mxu0 0.0
    %969 = vmatpush1.msra.mxu0 0.0
    %970 = vmatprep.subr.mxu0 0.0
    %971 = vmatpush1.msra.mxu0 0.0
    %972 = vmatprep.subr.mxu0 0.0
    %973 = vmatpush1.msra.mxu0 0.0
    %974 = vmatprep.subr.mxu0 0.0
    %975 = vmatpush1.msra.mxu0 0.0
    %976 = vmatprep.subr.mxu0 0.0
    %977 = vmatpush1.msra.mxu0 0.0
    %978 = vmatprep.subr.mxu0 0.0
    %979 = vmatpush1.msra.mxu0 0.0
    %980 = vmatprep.subr.mxu0 0.0
    %981 = vmatpush1.msra.mxu0 0.0
    %982 = vmatprep.subr.mxu0 0.0
    %983 = vmatpush1.msra.mxu0 0.0
    %984 = vmatprep.subr.mxu0 0.0
    %985 = vmatpush1.msra.mxu0 0.0
    %986 = vmatprep.subr.mxu0 0.0
    %987 = vmatpush1.msra.mxu0 0.0
    %988 = vmatprep.subr.mxu0 0.0
    %989 = vmatpush1.msra.mxu0 0.0
    %990 = vmatprep.subr.mxu0 0.0
    %991 = vmatpush1.msra.mxu0 0.0
    %992 = vmatprep.subr.mxu0 0.0
    %993 = vmatpush1.msra.mxu0 0.0
    %994 = vmatprep.subr.mxu0 0.0
    %995 = vmatpush1.msra.mxu0 0.0
    %996 = vmatprep.subr.mxu0 0.0
    %997 = vmatpush1.msra.mxu0 0.0
    %998 = vmatprep.mubr.f32.mxu0 0.0
    %999 = vmatmul.mubr.f32.gmra.mrb[0].mxu0 0.0
    %v1000 = vpop.f32.mrb[0].mxu0
    %v1001 = vadd.f32 0.0, %v1000
    %v1002 = vpop.f32.mrb[0].mxu0
    %v1003 = vadd.f32 0.0, %v1002
    %1004 = vdwg.mxu0
    %1005 = vmatprep.subr.mxu0 0.0
    %1006 = vmatpush1.msra.mxu0 %v888
    %1007 = vmatprep.subr.mxu0 0.0
    %1008 = vmatpush1.msra.mxu0 %v891
    %1009 = vmatprep.subr.mxu0 0.0
    %1010 = vmatpush1.msra.mxu0 %v894
    %1011 = vmatprep.subr.mxu0 0.0
    %1012 = vmatpush1.msra.mxu0 %v897
    %1013 = vmatprep.subr.mxu0 0.0
    %1014 = vmatpush1.msra.mxu0 %v900
    %1015 = vmatprep.subr.mxu0 0.0
    %1016 = vmatpush1.msra.mxu0 %v903
    %1017 = vmatprep.subr.mxu0 0.0
    %1018 = vmatpush1.msra.mxu0 %v906
    %1019 = vmatprep.subr.mxu0 0.0
    %1020 = vmatpush1.msra.mxu0 %v909
    %1021 = vmatprep.subr.mxu0 0.0
    %1022 = vmatpush1.msra.mxu0 %v912
    %1023 = vmatprep.subr.mxu0 0.0
    %1024 = vmatpush1.msra.mxu0 %v915
    %1025 = vmatprep.subr.mxu0 0.0
    %1026 = vmatpush1.msra.mxu0 %v918
    %1027 = vmatprep.subr.mxu0 0.0
    %1028 = vmatpush1.msra.mxu0 %v921
    %1029 = vmatprep.subr.mxu0 0.0
    %1030 = vmatpush1.msra.mxu0 %v924
    %1031 = vmatprep.subr.mxu0 0.0
    %1032 = vmatpush1.msra.mxu0 %v927
    %1033 = vmatprep.subr.mxu0 0.0
    %1034 = vmatpush1.msra.mxu0 %v930
    %1035 = vmatprep.subr.mxu0 0.0
    %1036 = vmatpush1.msra.mxu0 %v933
    %1037 = vmatprep.subr.mxu0 0.0
    %1038 = vmatpush1.msra.mxu0 0.0
    %1039 = vmatprep.subr.mxu0 0.0
    %1040 = vmatpush1.msra.mxu0 0.0
    %1041 = vmatprep.subr.mxu0 0.0
    %1042 = vmatpush1.msra.mxu0 0.0
    %1043 = vmatprep.subr.mxu0 0.0
    %1044 = vmatpush1.msra.mxu0 0.0
    %1045 = vmatprep.subr.mxu0 0.0
    %1046 = vmatpush1.msra.mxu0 0.0
    %1047 = vmatprep.subr.mxu0 0.0
    %1048 = vmatpush1.msra.mxu0 0.0
    %1049 = vmatprep.subr.mxu0 0.0
    %1050 = vmatpush1.msra.mxu0 0.0
    %1051 = vmatprep.subr.mxu0 0.0
    %1052 = vmatpush1.msra.mxu0 0.0
    %1053 = vmatprep.subr.mxu0 0.0
    %1054 = vmatpush1.msra.mxu0 0.0
    %1055 = vmatprep.subr.mxu0 0.0
    %1056 = vmatpush1.msra.mxu0 0.0
    %1057 = vmatprep.subr.mxu0 0.0
    %1058 = vmatpush1.msra.mxu0 0.0
    %1059 = vmatprep.subr.mxu0 0.0
    %1060 = vmatpush1.msra.mxu0 0.0
    %1061 = vmatprep.subr.mxu0 0.0
    %1062 = vmatpush1.msra.mxu0 0.0
    %1063 = vmatprep.subr.mxu0 0.0
    %1064 = vmatpush1.msra.mxu0 0.0
    %1065 = vmatprep.subr.mxu0 0.0
    %1066 = vmatpush1.msra.mxu0 0.0
    %1067 = vmatprep.subr.mxu0 0.0
    %1068 = vmatpush1.msra.mxu0 0.0
    %1069 = vmatprep.mubr.f32.mxu0 0.0
    %1070 = vmatmul.mubr.f32.gmra.mrb[0].mxu0 0.0
    %v1071 = vpop.f32.mrb[0].mxu0
    %v1072 = vadd.f32 0.0, %v1071
    %v1073 = vpop.f32.mrb[0].mxu0
    %1074 = vdwg.mxu0
    %v1075 = vadd.f32 %v691, %v812
    %v1076 = vxor.u32 %v1075, 2147483648
    %v1077 = vmul.f32 %v1076, 1.442695
    %v1078 = vpow.pop %v1077
    %v1079 = vadd.f32 %v1078, 1.0
    %v1080 = vrcp.pop %v1079
    %v1081 = vmul.f32 1.0, %v1080
    %v1082 = vadd.f32 %v692, %v814
    %v1083 = vxor.u32 %v1082, 2147483648
    %v1084 = vmul.f32 %v1083, 1.442695
    %v1085 = vpow.pop %v1084
    %v1086 = vadd.f32 %v1085, 1.0
    %v1087 = vrcp.pop %v1086
    %v1088 = vmul.f32 1.0, %v1087
    %v1090 = vlaneseq
    %v1091 = vshrl.u32 %v1090, 7
    %v1092 = vsub.s32 0, %v1091
    %v1093 = vrot.slane %v689, %v1092
    %v1095 = vadd.f32 %v883, %v1093
    %v1096 = vmul.f32 %v1081, %v1095
    %v1097 = vadd.f32 %v693, %v1096
    %v1098 = vtanh.pop %v1097
    %v1099 = vsub.f32 0.0, %v1098
    %v1100 = vmul.f32 %v1088, %v1099
    %v1101 = vadd.f32 %v1098, %v1100
    %v1102 = vadd.f32 %v694, %v1001
    %v1103 = vxor.u32 %v1102, 2147483648
    %v1104 = vmul.f32 %v1103, 1.442695
    %v1105 = vpow.pop %v1104
    %v1106 = vadd.f32 %v1105, 1.0
    %v1107 = vrcp.pop %v1106
    %v1108 = vmul.f32 1.0, %v1107
    %v1109 = vadd.f32 %v695, %v1003
    %v1110 = vxor.u32 %v1109, 2147483648
    %v1111 = vmul.f32 %v1110, 1.442695
    %v1112 = vpow.pop %v1111
    %v1113 = vadd.f32 %v1112, 1.0
    %v1114 = vrcp.pop %v1113
    %v1115 = vmul.f32 1.0, %v1114
    %v1117 = vlaneseq
    %v1118 = vshrl.u32 %v1117, 7
    %v1119 = vsub.s32 0, %v1118
    %v1120 = vrot.slane %v690, %v1119
    %v1122 = vadd.f32 %v1072, %v1120
    %v1123 = vmul.f32 %v1108, %v1122
    %v1124 = vadd.f32 %v696, %v1123
    %v1125 = vtanh.pop %v1124
    %v1126 = vsub.f32 0.0, %v1125
    %v1127 = vmul.f32 %v1115, %v1126
    %v1128 = vadd.f32 %v1125, %v1127
    %vm1129 = vcmp.gt.s32.totalorder %v113, 0
    %vm1130 = vcmp.gt.s32.totalorder %v113, 7
    %v1131 = vsel %vm1129, 1, 0
    %1132 = vset.pattern.permute.xlu0 0
    %1133 = vperm.xlu0 %1132, %v1131
    %v1134 = vpop.permute.xlu0 %1133
    %vm1135 = vcmp.eq.s32.totalorder %v1134, 1
    %v1136 = vsel %vm1135, %v1101, 0.0
    %v1137 = vsel %vm1130, 1, 0
    %1138 = vset.pattern.permute.xlu0 0
    %1139 = vperm.xlu0 %1138, %v1137
    %v1140 = vpop.permute.xlu0 %1139
    %vm1141 = vcmp.eq.s32.totalorder %v1140, 1
    %v1142 = vsel %vm1141, %v1128, 0.0
    %1143 = vst [vmem:[#allocation4] sm:$0xff] %v1136
    %1144 = vst [vmem:[#allocation5 + $0x38] sm:$0xff] %v1142
    %v1145 = vld [vmem:[#allocation2 + $0x18] sm:$0xff]
    %v1146 = vld [vmem:[#allocation2 + $0x20] sm:$0xff]
    %v1147 = vld [vmem:[#allocation2 + $0x28] sm:$0xff]
    %v1148 = vld [vmem:[#allocation3 + $0x90] sm:$0xff]
    %v1149 = vld [vmem:[#allocation3 + $0x98] sm:$0xff]
    %v1150 = vld [vmem:[#allocation3 + $0xa0] sm:$0xff]
    %v1151 = vld [vmem:[#allocation11] sm:$0xff]
    %v1152 = vld [vmem:[#allocation11 + $0x8] sm:$0xff]
    %v1153 = vld [vmem:[#allocation11 + $0x10] sm:$0xff]
    %v1154 = vld [vmem:[#allocation11 + $0x18] sm:$0xff]
    %v1155 = vld [vmem:[#allocation11 + $0x20] sm:$0xff]
    %v1156 = vld [vmem:[#allocation11 + $0x28] sm:$0xff]
    %v1157 = vld [vmem:[#allocation11 + $0x30] sm:$0xff]
    %v1158 = vld [vmem:[#allocation11 + $0x38] sm:$0xff]
    %v1159 = vld [vmem:[#allocation11 + $0x40] sm:$0xff]
    %v1160 = vld [vmem:[#allocation11 + $0x48] sm:$0xff]
    %v1161 = vld [vmem:[#allocation11 + $0x50] sm:$0xff]
    %v1162 = vld [vmem:[#allocation11 + $0x58] sm:$0xff]
    %v1163 = vld [vmem:[#allocation11 + $0x60] sm:$0xff]
    %v1164 = vld [vmem:[#allocation11 + $0x68] sm:$0xff]
    %v1165 = vld [vmem:[#allocation11 + $0x70] sm:$0xff]
    %v1166 = vld [vmem:[#allocation11 + $0x78] sm:$0xff]
    %v1167 = vld [vmem:[#allocation11 + $0x80] sm:$0xff]
    %v1168 = vld [vmem:[#allocation11 + $0x88] sm:$0xff]
    %v1169 = vld [vmem:[#allocation11 + $0x90] sm:$0xff]
    %v1170 = vld [vmem:[#allocation11 + $0x98] sm:$0xff]
    %v1171 = vld [vmem:[#allocation11 + $0xa0] sm:$0xff]
    %v1172 = vld [vmem:[#allocation11 + $0xa8] sm:$0xff]
    %v1173 = vld [vmem:[#allocation11 + $0xb0] sm:$0xff]
    %v1174 = vld [vmem:[#allocation11 + $0xb8] sm:$0xff]
    %v1175 = vld [vmem:[#allocation11 + $0xc0] sm:$0xff]
    %v1176 = vld [vmem:[#allocation11 + $0xc8] sm:$0xff]
    %v1177 = vld [vmem:[#allocation11 + $0xd0] sm:$0xff]
    %v1178 = vld [vmem:[#allocation11 + $0xd8] sm:$0xff]
    %v1179 = vld [vmem:[#allocation11 + $0xe0] sm:$0xff]
    %v1180 = vld [vmem:[#allocation11 + $0xe8] sm:$0xff]
    %v1181 = vld [vmem:[#allocation11 + $0xf0] sm:$0xff]
    %v1182 = vld [vmem:[#allocation11 + $0xf8] sm:$0xff]
    %v1183 = vld [vmem:[#allocation11 + $0x100] sm:$0xff]
    %v1184 = vld [vmem:[#allocation11 + $0x108] sm:$0xff]
    %v1185 = vld [vmem:[#allocation11 + $0x110] sm:$0xff]
    %v1186 = vld [vmem:[#allocation11 + $0x118] sm:$0xff]
    %v1187 = vld [vmem:[#allocation11 + $0x120] sm:$0xff]
    %v1188 = vld [vmem:[#allocation11 + $0x128] sm:$0xff]
    %v1189 = vld [vmem:[#allocation11 + $0x130] sm:$0xff]
    %v1190 = vld [vmem:[#allocation11 + $0x138] sm:$0xff]
    %v1191 = vld [vmem:[#allocation11 + $0x140] sm:$0xff]
    %v1192 = vld [vmem:[#allocation11 + $0x148] sm:$0xff]
    %v1193 = vld [vmem:[#allocation11 + $0x150] sm:$0xff]
    %v1194 = vld [vmem:[#allocation11 + $0x158] sm:$0xff]
    %v1195 = vld [vmem:[#allocation11 + $0x160] sm:$0xff]
    %v1196 = vld [vmem:[#allocation11 + $0x168] sm:$0xff]
    %v1197 = vld [vmem:[#allocation11 + $0x170] sm:$0xff]
    %v1198 = vld [vmem:[#allocation11 + $0x178] sm:$0xff]
    %1199 = vmatprep.subr.mxu0 %v1152
    %1200 = vmatpush1.msra.mxu0 %v1151
    %1201 = vmatprep.subr.mxu0 %v1155
    %1202 = vmatpush1.msra.mxu0 %v1154
    %1203 = vmatprep.subr.mxu0 %v1158
    %1204 = vmatpush1.msra.mxu0 %v1157
    %1205 = vmatprep.subr.mxu0 %v1161
    %1206 = vmatpush1.msra.mxu0 %v1160
    %1207 = vmatprep.subr.mxu0 %v1164
    %1208 = vmatpush1.msra.mxu0 %v1163
    %1209 = vmatprep.subr.mxu0 %v1167
    %1210 = vmatpush1.msra.mxu0 %v1166
    %1211 = vmatprep.subr.mxu0 %v1170
    %1212 = vmatpush1.msra.mxu0 %v1169
    %1213 = vmatprep.subr.mxu0 %v1173
    %1214 = vmatpush1.msra.mxu0 %v1172
    %1215 = vmatprep.subr.mxu0 %v1176
    %1216 = vmatpush1.msra.mxu0 %v1175
    %1217 = vmatprep.subr.mxu0 %v1179
    %1218 = vmatpush1.msra.mxu0 %v1178
    %1219 = vmatprep.subr.mxu0 %v1182
    %1220 = vmatpush1.msra.mxu0 %v1181
    %1221 = vmatprep.subr.mxu0 %v1185
    %1222 = vmatpush1.msra.mxu0 %v1184
    %1223 = vmatprep.subr.mxu0 %v1188
    %1224 = vmatpush1.msra.mxu0 %v1187
    %1225 = vmatprep.subr.mxu0 %v1191
    %1226 = vmatpush1.msra.mxu0 %v1190
    %1227 = vmatprep.subr.mxu0 %v1194
    %1228 = vmatpush1.msra.mxu0 %v1193
    %1229 = vmatprep.subr.mxu0 %v1197
    %1230 = vmatpush1.msra.mxu0 %v1196
    %1231 = vmatprep.subr.mxu0 0.0
    %1232 = vmatpush1.msra.mxu0 0.0
    %1233 = vmatprep.subr.mxu0 0.0
    %1234 = vmatpush1.msra.mxu0 0.0
    %1235 = vmatprep.subr.mxu0 0.0
    %1236 = vmatpush1.msra.mxu0 0.0
    %1237 = vmatprep.subr.mxu0 0.0
    %1238 = vmatpush1.msra.mxu0 0.0
    %1239 = vmatprep.subr.mxu0 0.0
    %1240 = vmatpush1.msra.mxu0 0.0
    %1241 = vmatprep.subr.mxu0 0.0
    %1242 = vmatpush1.msra.mxu0 0.0
    %1243 = vmatprep.subr.mxu0 0.0
    %1244 = vmatpush1.msra.mxu0 0.0
    %1245 = vmatprep.subr.mxu0 0.0
    %1246 = vmatpush1.msra.mxu0 0.0
    %1247 = vmatprep.subr.mxu0 0.0
    %1248 = vmatpush1.msra.mxu0 0.0
    %1249 = vmatprep.subr.mxu0 0.0
    %1250 = vmatpush1.msra.mxu0 0.0
    %1251 = vmatprep.subr.mxu0 0.0
    %1252 = vmatpush1.msra.mxu0 0.0
    %1253 = vmatprep.subr.mxu0 0.0
    %1254 = vmatpush1.msra.mxu0 0.0
    %1255 = vmatprep.subr.mxu0 0.0
    %1256 = vmatpush1.msra.mxu0 0.0
    %1257 = vmatprep.subr.mxu0 0.0
    %1258 = vmatpush1.msra.mxu0 0.0
    %1259 = vmatprep.subr.mxu0 0.0
    %1260 = vmatpush1.msra.mxu0 0.0
    %1261 = vmatprep.subr.mxu0 0.0
    %1262 = vmatpush1.msra.mxu0 0.0
    %1263 = vmatprep.mubr.f32.mxu0 0.0
    %1264 = vmatmul.mubr.f32.gmra.mrb[0].mxu0 %v1136
    %v1265 = vpop.f32.mrb[0].mxu0
    %v1266 = vadd.f32 0.0, %v1265
    %v1267 = vpop.f32.mrb[0].mxu0
    %v1268 = vadd.f32 0.0, %v1267
    %1269 = vdwg.mxu0
    %1270 = vmatprep.subr.mxu0 0.0
    %1271 = vmatpush1.msra.mxu0 %v1153
    %1272 = vmatprep.subr.mxu0 0.0
    %1273 = vmatpush1.msra.mxu0 %v1156
    %1274 = vmatprep.subr.mxu0 0.0
    %1275 = vmatpush1.msra.mxu0 %v1159
    %1276 = vmatprep.subr.mxu0 0.0
    %1277 = vmatpush1.msra.mxu0 %v1162
    %1278 = vmatprep.subr.mxu0 0.0
    %1279 = vmatpush1.msra.mxu0 %v1165
    %1280 = vmatprep.subr.mxu0 0.0
    %1281 = vmatpush1.msra.mxu0 %v1168
    %1282 = vmatprep.subr.mxu0 0.0
    %1283 = vmatpush1.msra.mxu0 %v1171
    %1284 = vmatprep.subr.mxu0 0.0
    %1285 = vmatpush1.msra.mxu0 %v1174
    %1286 = vmatprep.subr.mxu0 0.0
    %1287 = vmatpush1.msra.mxu0 %v1177
    %1288 = vmatprep.subr.mxu0 0.0
    %1289 = vmatpush1.msra.mxu0 %v1180
    %1290 = vmatprep.subr.mxu0 0.0
    %1291 = vmatpush1.msra.mxu0 %v1183
    %1292 = vmatprep.subr.mxu0 0.0
    %1293 = vmatpush1.msra.mxu0 %v1186
    %1294 = vmatprep.subr.mxu0 0.0
    %1295 = vmatpush1.msra.mxu0 %v1189
    %1296 = vmatprep.subr.mxu0 0.0
    %1297 = vmatpush1.msra.mxu0 %v1192
    %1298 = vmatprep.subr.mxu0 0.0
    %1299 = vmatpush1.msra.mxu0 %v1195
    %1300 = vmatprep.subr.mxu0 0.0
    %1301 = vmatpush1.msra.mxu0 %v1198
    %1302 = vmatprep.subr.mxu0 0.0
    %1303 = vmatpush1.msra.mxu0 0.0
    %1304 = vmatprep.subr.mxu0 0.0
    %1305 = vmatpush1.msra.mxu0 0.0
    %1306 = vmatprep.subr.mxu0 0.0
    %1307 = vmatpush1.msra.mxu0 0.0
    %1308 = vmatprep.subr.mxu0 0.0
    %1309 = vmatpush1.msra.mxu0 0.0
    %1310 = vmatprep.subr.mxu0 0.0
    %1311 = vmatpush1.msra.mxu0 0.0
    %1312 = vmatprep.subr.mxu0 0.0
    %1313 = vmatpush1.msra.mxu0 0.0
    %1314 = vmatprep.subr.mxu0 0.0
    %1315 = vmatpush1.msra.mxu0 0.0
    %1316 = vmatprep.subr.mxu0 0.0
    %1317 = vmatpush1.msra.mxu0 0.0
    %1318 = vmatprep.subr.mxu0 0.0
    %1319 = vmatpush1.msra.mxu0 0.0
    %1320 = vmatprep.subr.mxu0 0.0
    %1321 = vmatpush1.msra.mxu0 0.0
    %1322 = vmatprep.subr.mxu0 0.0
    %1323 = vmatpush1.msra.mxu0 0.0
    %1324 = vmatprep.subr.mxu0 0.0
    %1325 = vmatpush1.msra.mxu0 0.0
    %1326 = vmatprep.subr.mxu0 0.0
    %1327 = vmatpush1.msra.mxu0 0.0
    %1328 = vmatprep.subr.mxu0 0.0
    %1329 = vmatpush1.msra.mxu0 0.0
    %1330 = vmatprep.subr.mxu0 0.0
    %1331 = vmatpush1.msra.mxu0 0.0
    %1332 = vmatprep.subr.mxu0 0.0
    %1333 = vmatpush1.msra.mxu0 0.0
    %1334 = vmatprep.mubr.f32.mxu0 0.0
    %1335 = vmatmul.mubr.f32.gmra.mrb[0].mxu0 %v1136
    %v1336 = vpop.f32.mrb[0].mxu0
    %v1337 = vadd.f32 0.0, %v1336
    %v1338 = vpop.f32.mrb[0].mxu0
    %1339 = vdwg.mxu0
    %v1340 = vld [vmem:[#allocation12] sm:$0xff]
    %v1341 = vld [vmem:[#allocation12 + $0x8] sm:$0xff]
    %v1342 = vld [vmem:[#allocation12 + $0x10] sm:$0xff]
    %v1343 = vld [vmem:[#allocation12 + $0x18] sm:$0xff]
    %v1344 = vld [vmem:[#allocation12 + $0x20] sm:$0xff]
    %v1345 = vld [vmem:[#allocation12 + $0x28] sm:$0xff]
    %v1346 = vld [vmem:[#allocation12 + $0x30] sm:$0xff]
    %v1347 = vld [vmem:[#allocation12 + $0x38] sm:$0xff]
    %v1348 = vld [vmem:[#allocation12 + $0x40] sm:$0xff]
    %v1349 = vld [vmem:[#allocation12 + $0x48] sm:$0xff]
    %v1350 = vld [vmem:[#allocation12 + $0x50] sm:$0xff]
    %v1351 = vld [vmem:[#allocation12 + $0x58] sm:$0xff]
    %v1352 = vld [vmem:[#allocation12 + $0x60] sm:$0xff]
    %v1353 = vld [vmem:[#allocation12 + $0x68] sm:$0xff]
    %v1354 = vld [vmem:[#allocation12 + $0x70] sm:$0xff]
    %v1355 = vld [vmem:[#allocation12 + $0x78] sm:$0xff]
    %v1356 = vld [vmem:[#allocation12 + $0x80] sm:$0xff]
    %v1357 = vld [vmem:[#allocation12 + $0x88] sm:$0xff]
    %v1358 = vld [vmem:[#allocation12 + $0x90] sm:$0xff]
    %v1359 = vld [vmem:[#allocation12 + $0x98] sm:$0xff]
    %v1360 = vld [vmem:[#allocation12 + $0xa0] sm:$0xff]
    %v1361 = vld [vmem:[#allocation12 + $0xa8] sm:$0xff]
    %v1362 = vld [vmem:[#allocation12 + $0xb0] sm:$0xff]
    %v1363 = vld [vmem:[#allocation12 + $0xb8] sm:$0xff]
    %v1364 = vld [vmem:[#allocation12 + $0xc0] sm:$0xff]
    %v1365 = vld [vmem:[#allocation12 + $0xc8] sm:$0xff]
    %v1366 = vld [vmem:[#allocation12 + $0xd0] sm:$0xff]
    %v1367 = vld [vmem:[#allocation12 + $0xd8] sm:$0xff]
    %v1368 = vld [vmem:[#allocation12 + $0xe0] sm:$0xff]
    %v1369 = vld [vmem:[#allocation12 + $0xe8] sm:$0xff]
    %v1370 = vld [vmem:[#allocation12 + $0xf0] sm:$0xff]
    %v1371 = vld [vmem:[#allocation12 + $0xf8] sm:$0xff]
    %v1372 = vld [vmem:[#allocation12 + $0x100] sm:$0xff]
    %v1373 = vld [vmem:[#allocation12 + $0x108] sm:$0xff]
    %v1374 = vld [vmem:[#allocation12 + $0x110] sm:$0xff]
    %v1375 = vld [vmem:[#allocation12 + $0x118] sm:$0xff]
    %v1376 = vld [vmem:[#allocation12 + $0x120] sm:$0xff]
    %v1377 = vld [vmem:[#allocation12 + $0x128] sm:$0xff]
    %v1378 = vld [vmem:[#allocation12 + $0x130] sm:$0xff]
    %v1379 = vld [vmem:[#allocation12 + $0x138] sm:$0xff]
    %v1380 = vld [vmem:[#allocation12 + $0x140] sm:$0xff]
    %v1381 = vld [vmem:[#allocation12 + $0x148] sm:$0xff]
    %v1382 = vld [vmem:[#allocation12 + $0x150] sm:$0xff]
    %v1383 = vld [vmem:[#allocation12 + $0x158] sm:$0xff]
    %v1384 = vld [vmem:[#allocation12 + $0x160] sm:$0xff]
    %v1385 = vld [vmem:[#allocation12 + $0x168] sm:$0xff]
    %v1386 = vld [vmem:[#allocation12 + $0x170] sm:$0xff]
    %v1387 = vld [vmem:[#allocation12 + $0x178] sm:$0xff]
    %1388 = vmatprep.subr.mxu0 %v1341
    %1389 = vmatpush1.msra.mxu0 %v1340
    %1390 = vmatprep.subr.mxu0 %v1344
    %1391 = vmatpush1.msra.mxu0 %v1343
    %1392 = vmatprep.subr.mxu0 %v1347
    %1393 = vmatpush1.msra.mxu0 %v1346
    %1394 = vmatprep.subr.mxu0 %v1350
    %1395 = vmatpush1.msra.mxu0 %v1349
    %1396 = vmatprep.subr.mxu0 %v1353
    %1397 = vmatpush1.msra.mxu0 %v1352
    %1398 = vmatprep.subr.mxu0 %v1356
    %1399 = vmatpush1.msra.mxu0 %v1355
    %1400 = vmatprep.subr.mxu0 %v1359
    %1401 = vmatpush1.msra.mxu0 %v1358
    %1402 = vmatprep.subr.mxu0 %v1362
    %1403 = vmatpush1.msra.mxu0 %v1361
    %1404 = vmatprep.subr.mxu0 %v1365
    %1405 = vmatpush1.msra.mxu0 %v1364
    %1406 = vmatprep.subr.mxu0 %v1368
    %1407 = vmatpush1.msra.mxu0 %v1367
    %1408 = vmatprep.subr.mxu0 %v1371
    %1409 = vmatpush1.msra.mxu0 %v1370
    %1410 = vmatprep.subr.mxu0 %v1374
    %1411 = vmatpush1.msra.mxu0 %v1373
    %1412 = vmatprep.subr.mxu0 %v1377
    %1413 = vmatpush1.msra.mxu0 %v1376
    %1414 = vmatprep.subr.mxu0 %v1380
    %1415 = vmatpush1.msra.mxu0 %v1379
    %1416 = vmatprep.subr.mxu0 %v1383
    %1417 = vmatpush1.msra.mxu0 %v1382
    %1418 = vmatprep.subr.mxu0 %v1386
    %1419 = vmatpush1.msra.mxu0 %v1385
    %1420 = vmatprep.subr.mxu0 0.0
    %1421 = vmatpush1.msra.mxu0 0.0
    %1422 = vmatprep.subr.mxu0 0.0
    %1423 = vmatpush1.msra.mxu0 0.0
    %1424 = vmatprep.subr.mxu0 0.0
    %1425 = vmatpush1.msra.mxu0 0.0
    %1426 = vmatprep.subr.mxu0 0.0
    %1427 = vmatpush1.msra.mxu0 0.0
    %1428 = vmatprep.subr.mxu0 0.0
    %1429 = vmatpush1.msra.mxu0 0.0
    %1430 = vmatprep.subr.mxu0 0.0
    %1431 = vmatpush1.msra.mxu0 0.0
    %1432 = vmatprep.subr.mxu0 0.0
    %1433 = vmatpush1.msra.mxu0 0.0
    %1434 = vmatprep.subr.mxu0 0.0
    %1435 = vmatpush1.msra.mxu0 0.0
    %1436 = vmatprep.subr.mxu0 0.0
    %1437 = vmatpush1.msra.mxu0 0.0
    %1438 = vmatprep.subr.mxu0 0.0
    %1439 = vmatpush1.msra.mxu0 0.0
    %1440 = vmatprep.subr.mxu0 0.0
    %1441 = vmatpush1.msra.mxu0 0.0
    %1442 = vmatprep.subr.mxu0 0.0
    %1443 = vmatpush1.msra.mxu0 0.0
    %1444 = vmatprep.subr.mxu0 0.0
    %1445 = vmatpush1.msra.mxu0 0.0
    %1446 = vmatprep.subr.mxu0 0.0
    %1447 = vmatpush1.msra.mxu0 0.0
    %1448 = vmatprep.subr.mxu0 0.0
    %1449 = vmatpush1.msra.mxu0 0.0
    %1450 = vmatprep.subr.mxu0 0.0
    %1451 = vmatpush1.msra.mxu0 0.0
    %1452 = vmatprep.mubr.f32.mxu0 0.0
    %1453 = vmatmul.mubr.f32.gmra.mrb[0].mxu0 %v1142
    %v1454 = vpop.f32.mrb[0].mxu0
    %v1455 = vadd.f32 0.0, %v1454
    %v1456 = vpop.f32.mrb[0].mxu0
    %v1457 = vadd.f32 0.0, %v1456
    %1458 = vdwg.mxu0
    %1459 = vmatprep.subr.mxu0 0.0
    %1460 = vmatpush1.msra.mxu0 %v1342
    %1461 = vmatprep.subr.mxu0 0.0
    %1462 = vmatpush1.msra.mxu0 %v1345
    %1463 = vmatprep.subr.mxu0 0.0
    %1464 = vmatpush1.msra.mxu0 %v1348
    %1465 = vmatprep.subr.mxu0 0.0
    %1466 = vmatpush1.msra.mxu0 %v1351
    %1467 = vmatprep.subr.mxu0 0.0
    %1468 = vmatpush1.msra.mxu0 %v1354
    %1469 = vmatprep.subr.mxu0 0.0
    %1470 = vmatpush1.msra.mxu0 %v1357
    %1471 = vmatprep.subr.mxu0 0.0
    %1472 = vmatpush1.msra.mxu0 %v1360
    %1473 = vmatprep.subr.mxu0 0.0
    %1474 = vmatpush1.msra.mxu0 %v1363
    %1475 = vmatprep.subr.mxu0 0.0
    %1476 = vmatpush1.msra.mxu0 %v1366
    %1477 = vmatprep.subr.mxu0 0.0
    %1478 = vmatpush1.msra.mxu0 %v1369
    %1479 = vmatprep.subr.mxu0 0.0
    %1480 = vmatpush1.msra.mxu0 %v1372
    %1481 = vmatprep.subr.mxu0 0.0
    %1482 = vmatpush1.msra.mxu0 %v1375
    %1483 = vmatprep.subr.mxu0 0.0
    %1484 = vmatpush1.msra.mxu0 %v1378
    %1485 = vmatprep.subr.mxu0 0.0
    %1486 = vmatpush1.msra.mxu0 %v1381
    %1487 = vmatprep.subr.mxu0 0.0
    %1488 = vmatpush1.msra.mxu0 %v1384
    %1489 = vmatprep.subr.mxu0 0.0
    %1490 = vmatpush1.msra.mxu0 %v1387
    %1491 = vmatprep.subr.mxu0 0.0
    %1492 = vmatpush1.msra.mxu0 0.0
    %1493 = vmatprep.subr.mxu0 0.0
    %1494 = vmatpush1.msra.mxu0 0.0
    %1495 = vmatprep.subr.mxu0 0.0
    %1496 = vmatpush1.msra.mxu0 0.0
    %1497 = vmatprep.subr.mxu0 0.0
    %1498 = vmatpush1.msra.mxu0 0.0
    %1499 = vmatprep.subr.mxu0 0.0
    %1500 = vmatpush1.msra.mxu0 0.0
    %1501 = vmatprep.subr.mxu0 0.0
    %1502 = vmatpush1.msra.mxu0 0.0
    %1503 = vmatprep.subr.mxu0 0.0
    %1504 = vmatpush1.msra.mxu0 0.0
    %1505 = vmatprep.subr.mxu0 0.0
    %1506 = vmatpush1.msra.mxu0 0.0
    %1507 = vmatprep.subr.mxu0 0.0
    %1508 = vmatpush1.msra.mxu0 0.0
    %1509 = vmatprep.subr.mxu0 0.0
    %1510 = vmatpush1.msra.mxu0 0.0
    %1511 = vmatprep.subr.mxu0 0.0
    %1512 = vmatpush1.msra.mxu0 0.0
    %1513 = vmatprep.subr.mxu0 0.0
    %1514 = vmatpush1.msra.mxu0 0.0
    %1515 = vmatprep.subr.mxu0 0.0
    %1516 = vmatpush1.msra.mxu0 0.0
    %1517 = vmatprep.subr.mxu0 0.0
    %1518 = vmatpush1.msra.mxu0 0.0
    %1519 = vmatprep.subr.mxu0 0.0
    %1520 = vmatpush1.msra.mxu0 0.0
    %1521 = vmatprep.subr.mxu0 0.0
    %1522 = vmatpush1.msra.mxu0 0.0
    %1523 = vmatprep.mubr.f32.mxu0 0.0
    %1524 = vmatmul.mubr.f32.gmra.mrb[0].mxu0 %v1142
    %v1525 = vpop.f32.mrb[0].mxu0
    %v1526 = vadd.f32 0.0, %v1525
    %v1527 = vpop.f32.mrb[0].mxu0
    %1528 = vdwg.mxu0
    %v1529 = vadd.f32 %v1145, %v1266
    %v1530 = vxor.u32 %v1529, 2147483648
    %v1531 = vmul.f32 %v1530, 1.442695
    %v1532 = vpow.pop %v1531
    %v1533 = vadd.f32 %v1532, 1.0
    %v1534 = vrcp.pop %v1533
    %v1535 = vmul.f32 1.0, %v1534
    %v1536 = vadd.f32 %v1146, %v1268
    %v1537 = vxor.u32 %v1536, 2147483648
    %v1538 = vmul.f32 %v1537, 1.442695
    %v1539 = vpow.pop %v1538
    %v1540 = vadd.f32 %v1539, 1.0
    %v1541 = vrcp.pop %v1540
    %v1542 = vmul.f32 1.0, %v1541
    %v1543 = vadd.f32 %v1337, %v1093
    %v1544 = vmul.f32 %v1535, %v1543
    %v1545 = vadd.f32 %v1147, %v1544
    %v1546 = vtanh.pop %v1545
    %v1547 = vsub.f32 %v1136, %v1546
    %v1548 = vmul.f32 %v1542, %v1547
    %v1549 = vadd.f32 %v1546, %v1548
    %v1550 = vadd.f32 %v1148, %v1455
    %v1551 = vxor.u32 %v1550, 2147483648
    %v1552 = vmul.f32 %v1551, 1.442695
    %v1553 = vpow.pop %v1552
    %v1554 = vadd.f32 %v1553, 1.0
    %v1555 = vrcp.pop %v1554
    %v1556 = vmul.f32 1.0, %v1555
    %v1557 = vadd.f32 %v1149, %v1457
    %v1558 = vxor.u32 %v1557, 2147483648
    %v1559 = vmul.f32 %v1558, 1.442695
    %v1560 = vpow.pop %v1559
    %v1561 = vadd.f32 %v1560, 1.0
    %v1562 = vrcp.pop %v1561
    %v1563 = vmul.f32 1.0, %v1562
    %v1564 = vadd.f32 %v1526, %v1120
    %v1565 = vmul.f32 %v1556, %v1564
    %v1566 = vadd.f32 %v1150, %v1565
    %v1567 = vtanh.pop %v1566
    %v1568 = vsub.f32 %v1142, %v1567
    %v1569 = vmul.f32 %v1563, %v1568
    %v1570 = vadd.f32 %v1567, %v1569
    %vm1571 = vcmp.gt.s32.totalorder %v113, 1
    %vm1572 = vcmp.gt.s32.totalorder %v113, 6
    %v1573 = vsel %vm1571, 1, 0
    %1574 = vset.pattern.permute.xlu0 0
    %1575 = vperm.xlu0 %1574, %v1573
    %v1576 = vpop.permute.xlu0 %1575
    %vm1577 = vcmp.eq.s32.totalorder %v1576, 1
    %v1578 = vsel %vm1577, %v1549, %v1136
    %v1579 = vsel %vm1572, 1, 0
    %1580 = vset.pattern.permute.xlu0 0
    %1581 = vperm.xlu0 %1580, %v1579
    %v1582 = vpop.permute.xlu0 %1581
    %vm1583 = vcmp.eq.s32.totalorder %v1582, 1
    %v1584 = vsel %vm1583, %v1570, %v1142
    %v1585 = vsel %vm1577, %v1549, 0.0
    %1586 = vst [vmem:[#allocation4 + $0x8] sm:$0xff] %v1585
    %v1587 = vsel %vm1583, %v1570, 0.0
    %1588 = vst [vmem:[#allocation5 + $0x30] sm:$0xff] %v1587
    %v1589 = vld [vmem:[#allocation2 + $0x30] sm:$0xff]
    %v1590 = vld [vmem:[#allocation2 + $0x38] sm:$0xff]
    %v1591 = vld [vmem:[#allocation2 + $0x40] sm:$0xff]
    %v1592 = vld [vmem:[#allocation3 + $0x78] sm:$0xff]
    %v1593 = vld [vmem:[#allocation3 + $0x80] sm:$0xff]
    %v1594 = vld [vmem:[#allocation3 + $0x88] sm:$0xff]
    %v1595 = vld [vmem:[#allocation11] sm:$0xff]
    %v1596 = vld [vmem:[#allocation11 + $0x8] sm:$0xff]
    %v1597 = vld [vmem:[#allocation11 + $0x10] sm:$0xff]
    %v1598 = vld [vmem:[#allocation11 + $0x18] sm:$0xff]
    %v1599 = vld [vmem:[#allocation11 + $0x20] sm:$0xff]
    %v1600 = vld [vmem:[#allocation11 + $0x28] sm:$0xff]
    %v1601 = vld [vmem:[#allocation11 + $0x30] sm:$0xff]
    %v1602 = vld [vmem:[#allocation11 + $0x38] sm:$0xff]
    %v1603 = vld [vmem:[#allocation11 + $0x40] sm:$0xff]
    %v1604 = vld [vmem:[#allocation11 + $0x48] sm:$0xff]
    %v1605 = vld [vmem:[#allocation11 + $0x50] sm:$0xff]
    %v1606 = vld [vmem:[#allocation11 + $0x58] sm:$0xff]
    %v1607 = vld [vmem:[#allocation11 + $0x60] sm:$0xff]
    %v1608 = vld [vmem:[#allocation11 + $0x68] sm:$0xff]
    %v1609 = vld [vmem:[#allocation11 + $0x70] sm:$0xff]
    %v1610 = vld [vmem:[#allocation11 + $0x78] sm:$0xff]
    %v1611 = vld [vmem:[#allocation11 + $0x80] sm:$0xff]
    %v1612 = vld [vmem:[#allocation11 + $0x88] sm:$0xff]
    %v1613 = vld [vmem:[#allocation11 + $0x90] sm:$0xff]
    %v1614 = vld [vmem:[#allocation11 + $0x98] sm:$0xff]
    %v1615 = vld [vmem:[#allocation11 + $0xa0] sm:$0xff]
    %v1616 = vld [vmem:[#allocation11 + $0xa8] sm:$0xff]
    %v1617 = vld [vmem:[#allocation11 + $0xb0] sm:$0xff]
    %v1618 = vld [vmem:[#allocation11 + $0xb8] sm:$0xff]
    %v1619 = vld [vmem:[#allocation11 + $0xc0] sm:$0xff]
    %v1620 = vld [vmem:[#allocation11 + $0xc8] sm:$0xff]
    %v1621 = vld [vmem:[#allocation11 + $0xd0] sm:$0xff]
    %v1622 = vld [vmem:[#allocation11 + $0xd8] sm:$0xff]
    %v1623 = vld [vmem:[#allocation11 + $0xe0] sm:$0xff]
    %v1624 = vld [vmem:[#allocation11 + $0xe8] sm:$0xff]
    %v1625 = vld [vmem:[#allocation11 + $0xf0] sm:$0xff]
    %v1626 = vld [vmem:[#allocation11 + $0xf8] sm:$0xff]
    %v1627 = vld [vmem:[#allocation11 + $0x100] sm:$0xff]
    %v1628 = vld [vmem:[#allocation11 + $0x108] sm:$0xff]
    %v1629 = vld [vmem:[#allocation11 + $0x110] sm:$0xff]
    %v1630 = vld [vmem:[#allocation11 + $0x118] sm:$0xff]
    %v1631 = vld [vmem:[#allocation11 + $0x120] sm:$0xff]
    %v1632 = vld [vmem:[#allocation11 + $0x128] sm:$0xff]
    %v1633 = vld [vmem:[#allocation11 + $0x130] sm:$0xff]
    %v1634 = vld [vmem:[#allocation11 + $0x138] sm:$0xff]
    %v1635 = vld [vmem:[#allocation11 + $0x140] sm:$0xff]
    %v1636 = vld [vmem:[#allocation11 + $0x148] sm:$0xff]
    %v1637 = vld [vmem:[#allocation11 + $0x150] sm:$0xff]
    %v1638 = vld [vmem:[#allocation11 + $0x158] sm:$0xff]
    %v1639 = vld [vmem:[#allocation11 + $0x160] sm:$0xff]
    %v1640 = vld [vmem:[#allocation11 + $0x168] sm:$0xff]
    %v1641 = vld [vmem:[#allocation11 + $0x170] sm:$0xff]
    %v1642 = vld [vmem:[#allocation11 + $0x178] sm:$0xff]
    %1643 = vmatprep.subr.mxu0 %v1596
    %1644 = vmatpush1.msra.mxu0 %v1595
    %1645 = vmatprep.subr.mxu0 %v1599
    %1646 = vmatpush1.msra.mxu0 %v1598
    %1647 = vmatprep.subr.mxu0 %v1602
    %1648 = vmatpush1.msra.mxu0 %v1601
    %1649 = vmatprep.subr.mxu0 %v1605
    %1650 = vmatpush1.msra.mxu0 %v1604
    %1651 = vmatprep.subr.mxu0 %v1608
    %1652 = vmatpush1.msra.mxu0 %v1607
    %1653 = vmatprep.subr.mxu0 %v1611
    %1654 = vmatpush1.msra.mxu0 %v1610
    %1655 = vmatprep.subr.mxu0 %v1614
    %1656 = vmatpush1.msra.mxu0 %v1613
    %1657 = vmatprep.subr.mxu0 %v1617
    %1658 = vmatpush1.msra.mxu0 %v1616
    %1659 = vmatprep.subr.mxu0 %v1620
    %1660 = vmatpush1.msra.mxu0 %v1619
    %1661 = vmatprep.subr.mxu0 %v1623
    %1662 = vmatpush1.msra.mxu0 %v1622
    %1663 = vmatprep.subr.mxu0 %v1626
    %1664 = vmatpush1.msra.mxu0 %v1625
    %1665 = vmatprep.subr.mxu0 %v1629
    %1666 = vmatpush1.msra.mxu0 %v1628
    %1667 = vmatprep.subr.mxu0 %v1632
    %1668 = vmatpush1.msra.mxu0 %v1631
    %1669 = vmatprep.subr.mxu0 %v1635
    %1670 = vmatpush1.msra.mxu0 %v1634
    %1671 = vmatprep.subr.mxu0 %v1638
    %1672 = vmatpush1.msra.mxu0 %v1637
    %1673 = vmatprep.subr.mxu0 %v1641
    %1674 = vmatpush1.msra.mxu0 %v1640
    %1675 = vmatprep.subr.mxu0 0.0
    %1676 = vmatpush1.msra.mxu0 0.0
    %1677 = vmatprep.subr.mxu0 0.0
    %1678 = vmatpush1.msra.mxu0 0.0
    %1679 = vmatprep.subr.mxu0 0.0
    %1680 = vmatpush1.msra.mxu0 0.0
    %1681 = vmatprep.subr.mxu0 0.0
    %1682 = vmatpush1.msra.mxu0 0.0
    %1683 = vmatprep.subr.mxu0 0.0
    %1684 = vmatpush1.msra.mxu0 0.0
    %1685 = vmatprep.subr.mxu0 0.0
    %1686 = vmatpush1.msra.mxu0 0.0
    %1687 = vmatprep.subr.mxu0 0.0
    %1688 = vmatpush1.msra.mxu0 0.0
    %1689 = vmatprep.subr.mxu0 0.0
    %1690 = vmatpush1.msra.mxu0 0.0
    %1691 = vmatprep.subr.mxu0 0.0
    %1692 = vmatpush1.msra.mxu0 0.0
    %1693 = vmatprep.subr.mxu0 0.0
    %1694 = vmatpush1.msra.mxu0 0.0
    %1695 = vmatprep.subr.mxu0 0.0
    %1696 = vmatpush1.msra.mxu0 0.0
    %1697 = vmatprep.subr.mxu0 0.0
    %1698 = vmatpush1.msra.mxu0 0.0
    %1699 = vmatprep.subr.mxu0 0.0
    %1700 = vmatpush1.msra.mxu0 0.0
    %1701 = vmatprep.subr.mxu0 0.0
    %1702 = vmatpush1.msra.mxu0 0.0
    %1703 = vmatprep.subr.mxu0 0.0
    %1704 = vmatpush1.msra.mxu0 0.0
    %1705 = vmatprep.subr.mxu0 0.0
    %1706 = vmatpush1.msra.mxu0 0.0
    %1707 = vmatprep.mubr.f32.mxu0 0.0
    %1708 = vmatmul.mubr.f32.gmra.mrb[0].mxu0 %v1578
    %v1709 = vpop.f32.mrb[0].mxu0
    %v1710 = vadd.f32 0.0, %v1709
    %v1711 = vpop.f32.mrb[0].mxu0
    %v1712 = vadd.f32 0.0, %v1711
    %1713 = vdwg.mxu0
    %1714 = vmatprep.subr.mxu0 0.0
    %1715 = vmatpush1.msra.mxu0 %v1597
    %1716 = vmatprep.subr.mxu0 0.0
    %1717 = vmatpush1.msra.mxu0 %v1600
    %1718 = vmatprep.subr.mxu0 0.0
    %1719 = vmatpush1.msra.mxu0 %v1603
    %1720 = vmatprep.subr.mxu0 0.0
    %1721 = vmatpush1.msra.mxu0 %v1606
    %1722 = vmatprep.subr.mxu0 0.0
    %1723 = vmatpush1.msra.mxu0 %v1609
    %1724 = vmatprep.subr.mxu0 0.0
    %1725 = vmatpush1.msra.mxu0 %v1612
    %1726 = vmatprep.subr.mxu0 0.0
    %1727 = vmatpush1.msra.mxu0 %v1615
    %1728 = vmatprep.subr.mxu0 0.0
    %1729 = vmatpush1.msra.mxu0 %v1618
    %1730 = vmatprep.subr.mxu0 0.0
    %1731 = vmatpush1.msra.mxu0 %v1621
    %1732 = vmatprep.subr.mxu0 0.0
    %1733 = vmatpush1.msra.mxu0 %v1624
    %1734 = vmatprep.subr.mxu0 0.0
    %1735 = vmatpush1.msra.mxu0 %v1627
    %1736 = vmatprep.subr.mxu0 0.0
    %1737 = vmatpush1.msra.mxu0 %v1630
    %1738 = vmatprep.subr.mxu0 0.0
    %1739 = vmatpush1.msra.mxu0 %v1633
    %1740 = vmatprep.subr.mxu0 0.0
    %1741 = vmatpush1.msra.mxu0 %v1636
    %1742 = vmatprep.subr.mxu0 0.0
    %1743 = vmatpush1.msra.mxu0 %v1639
    %1744 = vmatprep.subr.mxu0 0.0
    %1745 = vmatpush1.msra.mxu0 %v1642
    %1746 = vmatprep.subr.mxu0 0.0
    %1747 = vmatpush1.msra.mxu0 0.0
    %1748 = vmatprep.subr.mxu0 0.0
    %1749 = vmatpush1.msra.mxu0 0.0
    %1750 = vmatprep.subr.mxu0 0.0
    %1751 = vmatpush1.msra.mxu0 0.0
    %1752 = vmatprep.subr.mxu0 0.0
    %1753 = vmatpush1.msra.mxu0 0.0
    %1754 = vmatprep.subr.mxu0 0.0
    %1755 = vmatpush1.msra.mxu0 0.0
    %1756 = vmatprep.subr.mxu0 0.0
    %1757 = vmatpush1.msra.mxu0 0.0
    %1758 = vmatprep.subr.mxu0 0.0
    %1759 = vmatpush1.msra.mxu0 0.0
    %1760 = vmatprep.subr.mxu0 0.0
    %1761 = vmatpush1.msra.mxu0 0.0
    %1762 = vmatprep.subr.mxu0 0.0
    %1763 = vmatpush1.msra.mxu0 0.0
    %1764 = vmatprep.subr.mxu0 0.0
    %1765 = vmatpush1.msra.mxu0 0.0
    %1766 = vmatprep.subr.mxu0 0.0
    %1767 = vmatpush1.msra.mxu0 0.0
    %1768 = vmatprep.subr.mxu0 0.0
    %1769 = vmatpush1.msra.mxu0 0.0
    %1770 = vmatprep.subr.mxu0 0.0
    %1771 = vmatpush1.msra.mxu0 0.0
    %1772 = vmatprep.subr.mxu0 0.0
    %1773 = vmatpush1.msra.mxu0 0.0
    %1774 = vmatprep.subr.mxu0 0.0
    %1775 = vmatpush1.msra.mxu0 0.0
    %1776 = vmatprep.subr.mxu0 0.0
    %1777 = vmatpush1.msra.mxu0 0.0
    %1778 = vmatprep.mubr.f32.mxu0 0.0
    %1779 = vmatmul.mubr.f32.gmra.mrb[0].mxu0 %v1578
    %v1780 = vpop.f32.mrb[0].mxu0
    %v1781 = vadd.f32 0.0, %v1780
    %v1782 = vpop.f32.mrb[0].mxu0
    %1783 = vdwg.mxu0
    %v1784 = vld [vmem:[#allocation12] sm:$0xff]
    %v1785 = vld [vmem:[#allocation12 + $0x8] sm:$0xff]
    %v1786 = vld [vmem:[#allocation12 + $0x10] sm:$0xff]
    %v1787 = vld [vmem:[#allocation12 + $0x18] sm:$0xff]
    %v1788 = vld [vmem:[#allocation12 + $0x20] sm:$0xff]
    %v1789 = vld [vmem:[#allocation12 + $0x28] sm:$0xff]
    %v1790 = vld [vmem:[#allocation12 + $0x30] sm:$0xff]
    %v1791 = vld [vmem:[#allocation12 + $0x38] sm:$0xff]
    %v1792 = vld [vmem:[#allocation12 + $0x40] sm:$0xff]
    %v1793 = vld [vmem:[#allocation12 + $0x48] sm:$0xff]
    %v1794 = vld [vmem:[#allocation12 + $0x50] sm:$0xff]
    %v1795 = vld [vmem:[#allocation12 + $0x58] sm:$0xff]
    %v1796 = vld [vmem:[#allocation12 + $0x60] sm:$0xff]
    %v1797 = vld [vmem:[#allocation12 + $0x68] sm:$0xff]
    %v1798 = vld [vmem:[#allocation12 + $0x70] sm:$0xff]
    %v1799 = vld [vmem:[#allocation12 + $0x78] sm:$0xff]
    %v1800 = vld [vmem:[#allocation12 + $0x80] sm:$0xff]
    %v1801 = vld [vmem:[#allocation12 + $0x88] sm:$0xff]
    %v1802 = vld [vmem:[#allocation12 + $0x90] sm:$0xff]
    %v1803 = vld [vmem:[#allocation12 + $0x98] sm:$0xff]
    %v1804 = vld [vmem:[#allocation12 + $0xa0] sm:$0xff]
    %v1805 = vld [vmem:[#allocation12 + $0xa8] sm:$0xff]
    %v1806 = vld [vmem:[#allocation12 + $0xb0] sm:$0xff]
    %v1807 = vld [vmem:[#allocation12 + $0xb8] sm:$0xff]
    %v1808 = vld [vmem:[#allocation12 + $0xc0] sm:$0xff]
    %v1809 = vld [vmem:[#allocation12 + $0xc8] sm:$0xff]
    %v1810 = vld [vmem:[#allocation12 + $0xd0] sm:$0xff]
    %v1811 = vld [vmem:[#allocation12 + $0xd8] sm:$0xff]
    %v1812 = vld [vmem:[#allocation12 + $0xe0] sm:$0xff]
    %v1813 = vld [vmem:[#allocation12 + $0xe8] sm:$0xff]
    %v1814 = vld [vmem:[#allocation12 + $0xf0] sm:$0xff]
    %v1815 = vld [vmem:[#allocation12 + $0xf8] sm:$0xff]
    %v1816 = vld [vmem:[#allocation12 + $0x100] sm:$0xff]
    %v1817 = vld [vmem:[#allocation12 + $0x108] sm:$0xff]
    %v1818 = vld [vmem:[#allocation12 + $0x110] sm:$0xff]
    %v1819 = vld [vmem:[#allocation12 + $0x118] sm:$0xff]
    %v1820 = vld [vmem:[#allocation12 + $0x120] sm:$0xff]
    %v1821 = vld [vmem:[#allocation12 + $0x128] sm:$0xff]
    %v1822 = vld [vmem:[#allocation12 + $0x130] sm:$0xff]
    %v1823 = vld [vmem:[#allocation12 + $0x138] sm:$0xff]
    %v1824 = vld [vmem:[#allocation12 + $0x140] sm:$0xff]
    %v1825 = vld [vmem:[#allocation12 + $0x148] sm:$0xff]
    %v1826 = vld [vmem:[#allocation12 + $0x150] sm:$0xff]
    %v1827 = vld [vmem:[#allocation12 + $0x158] sm:$0xff]
    %v1828 = vld [vmem:[#allocation12 + $0x160] sm:$0xff]
    %v1829 = vld [vmem:[#allocation12 + $0x168] sm:$0xff]
    %v1830 = vld [vmem:[#allocation12 + $0x170] sm:$0xff]
    %v1831 = vld [vmem:[#allocation12 + $0x178] sm:$0xff]
    %1832 = vmatprep.subr.mxu0 %v1785
    %1833 = vmatpush1.msra.mxu0 %v1784
    %1834 = vmatprep.subr.mxu0 %v1788
    %1835 = vmatpush1.msra.mxu0 %v1787
    %1836 = vmatprep.subr.mxu0 %v1791
    %1837 = vmatpush1.msra.mxu0 %v1790
    %1838 = vmatprep.subr.mxu0 %v1794
    %1839 = vmatpush1.msra.mxu0 %v1793
    %1840 = vmatprep.subr.mxu0 %v1797
    %1841 = vmatpush1.msra.mxu0 %v1796
    %1842 = vmatprep.subr.mxu0 %v1800
    %1843 = vmatpush1.msra.mxu0 %v1799
    %1844 = vmatprep.subr.mxu0 %v1803
    %1845 = vmatpush1.msra.mxu0 %v1802
    %1846 = vmatprep.subr.mxu0 %v1806
    %1847 = vmatpush1.msra.mxu0 %v1805
    %1848 = vmatprep.subr.mxu0 %v1809
    %1849 = vmatpush1.msra.mxu0 %v1808
    %1850 = vmatprep.subr.mxu0 %v1812
    %1851 = vmatpush1.msra.mxu0 %v1811
    %1852 = vmatprep.subr.mxu0 %v1815
    %1853 = vmatpush1.msra.mxu0 %v1814
    %1854 = vmatprep.subr.mxu0 %v1818
    %1855 = vmatpush1.msra.mxu0 %v1817
    %1856 = vmatprep.subr.mxu0 %v1821
    %1857 = vmatpush1.msra.mxu0 %v1820
    %1858 = vmatprep.subr.mxu0 %v1824
    %1859 = vmatpush1.msra.mxu0 %v1823
    %1860 = vmatprep.subr.mxu0 %v1827
    %1861 = vmatpush1.msra.mxu0 %v1826
    %1862 = vmatprep.subr.mxu0 %v1830
    %1863 = vmatpush1.msra.mxu0 %v1829
    %1864 = vmatprep.subr.mxu0 0.0
    %1865 = vmatpush1.msra.mxu0 0.0
    %1866 = vmatprep.subr.mxu0 0.0
    %1867 = vmatpush1.msra.mxu0 0.0
    %1868 = vmatprep.subr.mxu0 0.0
    %1869 = vmatpush1.msra.mxu0 0.0
    %1870 = vmatprep.subr.mxu0 0.0
    %1871 = vmatpush1.msra.mxu0 0.0
    %1872 = vmatprep.subr.mxu0 0.0
    %1873 = vmatpush1.msra.mxu0 0.0
    %1874 = vmatprep.subr.mxu0 0.0
    %1875 = vmatpush1.msra.mxu0 0.0
    %1876 = vmatprep.subr.mxu0 0.0
    %1877 = vmatpush1.msra.mxu0 0.0
    %1878 = vmatprep.subr.mxu0 0.0
    %1879 = vmatpush1.msra.mxu0 0.0
    %1880 = vmatprep.subr.mxu0 0.0
    %1881 = vmatpush1.msra.mxu0 0.0
    %1882 = vmatprep.subr.mxu0 0.0
    %1883 = vmatpush1.msra.mxu0 0.0
    %1884 = vmatprep.subr.mxu0 0.0
    %1885 = vmatpush1.msra.mxu0 0.0
    %1886 = vmatprep.subr.mxu0 0.0
    %1887 = vmatpush1.msra.mxu0 0.0
    %1888 = vmatprep.subr.mxu0 0.0
    %1889 = vmatpush1.msra.mxu0 0.0
    %1890 = vmatprep.subr.mxu0 0.0
    %1891 = vmatpush1.msra.mxu0 0.0
    %1892 = vmatprep.subr.mxu0 0.0
    %1893 = vmatpush1.msra.mxu0 0.0
    %1894 = vmatprep.subr.mxu0 0.0
    %1895 = vmatpush1.msra.mxu0 0.0
    %1896 = vmatprep.mubr.f32.mxu0 0.0
    %1897 = vmatmul.mubr.f32.gmra.mrb[0].mxu0 %v1584
    %v1898 = vpop.f32.mrb[0].mxu0
    %v1899 = vadd.f32 0.0, %v1898
    %v1900 = vpop.f32.mrb[0].mxu0
    %v1901 = vadd.f32 0.0, %v1900
    %1902 = vdwg.mxu0
    %1903 = vmatprep.subr.mxu0 0.0
    %1904 = vmatpush1.msra.mxu0 %v1786
    %1905 = vmatprep.subr.mxu0 0.0
    %1906 = vmatpush1.msra.mxu0 %v1789
    %1907 = vmatprep.subr.mxu0 0.0
    %1908 = vmatpush1.msra.mxu0 %v1792
    %1909 = vmatprep.subr.mxu0 0.0
    %1910 = vmatpush1.msra.mxu0 %v1795
    %1911 = vmatprep.subr.mxu0 0.0
    %1912 = vmatpush1.msra.mxu0 %v1798
    %1913 = vmatprep.subr.mxu0 0.0
    %1914 = vmatpush1.msra.mxu0 %v1801
    %1915 = vmatprep.subr.mxu0 0.0
    %1916 = vmatpush1.msra.mxu0 %v1804
    %1917 = vmatprep.subr.mxu0 0.0
    %1918 = vmatpush1.msra.mxu0 %v1807
    %1919 = vmatprep.subr.mxu0 0.0
    %1920 = vmatpush1.msra.mxu0 %v1810
    %1921 = vmatprep.subr.mxu0 0.0
    %1922 = vmatpush1.msra.mxu0 %v1813
    %1923 = vmatprep.subr.mxu0 0.0
    %1924 = vmatpush1.msra.mxu0 %v1816
    %1925 = vmatprep.subr.mxu0 0.0
    %1926 = vmatpush1.msra.mxu0 %v1819
    %1927 = vmatprep.subr.mxu0 0.0
    %1928 = vmatpush1.msra.mxu0 %v1822
    %1929 = vmatprep.subr.mxu0 0.0
    %1930 = vmatpush1.msra.mxu0 %v1825
    %1931 = vmatprep.subr.mxu0 0.0
    %1932 = vmatpush1.msra.mxu0 %v1828
    %1933 = vmatprep.subr.mxu0 0.0
    %1934 = vmatpush1.msra.mxu0 %v1831
    %1935 = vmatprep.subr.mxu0 0.0
    %1936 = vmatpush1.msra.mxu0 0.0
    %1937 = vmatprep.subr.mxu0 0.0
    %1938 = vmatpush1.msra.mxu0 0.0
    %1939 = vmatprep.subr.mxu0 0.0
    %1940 = vmatpush1.msra.mxu0 0.0
    %1941 = vmatprep.subr.mxu0 0.0
    %1942 = vmatpush1.msra.mxu0 0.0
    %1943 = vmatprep.subr.mxu0 0.0
    %1944 = vmatpush1.msra.mxu0 0.0
    %1945 = vmatprep.subr.mxu0 0.0
    %1946 = vmatpush1.msra.mxu0 0.0
    %1947 = vmatprep.subr.mxu0 0.0
    %1948 = vmatpush1.msra.mxu0 0.0
    %1949 = vmatprep.subr.mxu0 0.0
    %1950 = vmatpush1.msra.mxu0 0.0
    %1951 = vmatprep.subr.mxu0 0.0
    %1952 = vmatpush1.msra.mxu0 0.0
    %1953 = vmatprep.subr.mxu0 0.0
    %1954 = vmatpush1.msra.mxu0 0.0
    %1955 = vmatprep.subr.mxu0 0.0
    %1956 = vmatpush1.msra.mxu0 0.0
    %1957 = vmatprep.subr.mxu0 0.0
    %1958 = vmatpush1.msra.mxu0 0.0
    %1959 = vmatprep.subr.mxu0 0.0
    %1960 = vmatpush1.msra.mxu0 0.0
    %1961 = vmatprep.subr.mxu0 0.0
    %1962 = vmatpush1.msra.mxu0 0.0
    %1963 = vmatprep.subr.mxu0 0.0
    %1964 = vmatpush1.msra.mxu0 0.0
    %1965 = vmatprep.subr.mxu0 0.0
    %1966 = vmatpush1.msra.mxu0 0.0
    %1967 = vmatprep.mubr.f32.mxu0 0.0
    %1968 = vmatmul.mubr.f32.gmra.mrb[0].mxu0 %v1584
    %v1969 = vpop.f32.mrb[0].mxu0
    %v1970 = vadd.f32 0.0, %v1969
    %v1971 = vpop.f32.mrb[0].mxu0
    %1972 = vdwg.mxu0
    %v1973 = vadd.f32 %v1589, %v1710
    %v1974 = vxor.u32 %v1973, 2147483648
    %v1975 = vmul.f32 %v1974, 1.442695
    %v1976 = vpow.pop %v1975
    %v1977 = vadd.f32 %v1976, 1.0
    %v1978 = vrcp.pop %v1977
    %v1979 = vmul.f32 1.0, %v1978
    %v1980 = vadd.f32 %v1590, %v1712
    %v1981 = vxor.u32 %v1980, 2147483648
    %v1982 = vmul.f32 %v1981, 1.442695
    %v1983 = vpow.pop %v1982
    %v1984 = vadd.f32 %v1983, 1.0
    %v1985 = vrcp.pop %v1984
    %v1986 = vmul.f32 1.0, %v1985
    %v1987 = vadd.f32 %v1781, %v1093
    %v1988 = vmul.f32 %v1979, %v1987
    %v1989 = vadd.f32 %v1591, %v1988
    %v1990 = vtanh.pop %v1989
    %v1991 = vsub.f32 %v1578, %v1990
    %v1992 = vmul.f32 %v1986, %v1991
    %v1993 = vadd.f32 %v1990, %v1992
    %v1994 = vadd.f32 %v1592, %v1899
    %v1995 = vxor.u32 %v1994, 2147483648
    %v1996 = vmul.f32 %v1995, 1.442695
    %v1997 = vpow.pop %v1996
    %v1998 = vadd.f32 %v1997, 1.0
    %v1999 = vrcp.pop %v1998
    %v2000 = vmul.f32 1.0, %v1999
    %v2001 = vadd.f32 %v1593, %v1901
    %v2002 = vxor.u32 %v2001, 2147483648
    %v2003 = vmul.f32 %v2002, 1.442695
    %v2004 = vpow.pop %v2003
    %v2005 = vadd.f32 %v2004, 1.0
    %v2006 = vrcp.pop %v2005
    %v2007 = vmul.f32 1.0, %v2006
    %v2008 = vadd.f32 %v1970, %v1120
    %v2009 = vmul.f32 %v2000, %v2008
    %v2010 = vadd.f32 %v1594, %v2009
    %v2011 = vtanh.pop %v2010
    %v2012 = vsub.f32 %v1584, %v2011
    %v2013 = vmul.f32 %v2007, %v2012
    %v2014 = vadd.f32 %v2011, %v2013
    %vm2015 = vcmp.gt.s32.totalorder %v113, 2
    %vm2016 = vcmp.gt.s32.totalorder %v113, 5
    %v2017 = vsel %vm2015, 1, 0
    %2018 = vset.pattern.permute.xlu0 0
    %2019 = vperm.xlu0 %2018, %v2017
    %v2020 = vpop.permute.xlu0 %2019
    %vm2021 = vcmp.eq.s32.totalorder %v2020, 1
    %v2022 = vsel %vm2021, %v1993, %v1578
    %v2023 = vsel %vm2016, 1, 0
    %2024 = vset.pattern.permute.xlu0 0
    %2025 = vperm.xlu0 %2024, %v2023
    %v2026 = vpop.permute.xlu0 %2025
    %vm2027 = vcmp.eq.s32.totalorder %v2026, 1
    %v2028 = vsel %vm2027, %v2014, %v1584
    %v2029 = vsel %vm2021, %v1993, 0.0
    %2030 = vst [vmem:[#allocation4 + $0x10] sm:$0xff] %v2029
    %v2031 = vsel %vm2027, %v2014, 0.0
    %2032 = vst [vmem:[#allocation5 + $0x28] sm:$0xff] %v2031
    %v2033 = vld [vmem:[#allocation2 + $0x48] sm:$0xff]
    %v2034 = vld [vmem:[#allocation2 + $0x50] sm:$0xff]
    %v2035 = vld [vmem:[#allocation2 + $0x58] sm:$0xff]
    %v2036 = vld [vmem:[#allocation3 + $0x60] sm:$0xff]
    %v2037 = vld [vmem:[#allocation3 + $0x68] sm:$0xff]
    %v2038 = vld [vmem:[#allocation3 + $0x70] sm:$0xff]
    %v2039 = vld [vmem:[#allocation11] sm:$0xff]
    %v2040 = vld [vmem:[#allocation11 + $0x8] sm:$0xff]
    %v2041 = vld [vmem:[#allocation11 + $0x10] sm:$0xff]
    %v2042 = vld [vmem:[#allocation11 + $0x18] sm:$0xff]
    %v2043 = vld [vmem:[#allocation11 + $0x20] sm:$0xff]
    %v2044 = vld [vmem:[#allocation11 + $0x28] sm:$0xff]
    %v2045 = vld [vmem:[#allocation11 + $0x30] sm:$0xff]
    %v2046 = vld [vmem:[#allocation11 + $0x38] sm:$0xff]
    %v2047 = vld [vmem:[#allocation11 + $0x40] sm:$0xff]
    %v2048 = vld [vmem:[#allocation11 + $0x48] sm:$0xff]
    %v2049 = vld [vmem:[#allocation11 + $0x50] sm:$0xff]
    %v2050 = vld [vmem:[#allocation11 + $0x58] sm:$0xff]
    %v2051 = vld [vmem:[#allocation11 + $0x60] sm:$0xff]
    %v2052 = vld [vmem:[#allocation11 + $0x68] sm:$0xff]
    %v2053 = vld [vmem:[#allocation11 + $0x70] sm:$0xff]
    %v2054 = vld [vmem:[#allocation11 + $0x78] sm:$0xff]
    %v2055 = vld [vmem:[#allocation11 + $0x80] sm:$0xff]
    %v2056 = vld [vmem:[#allocation11 + $0x88] sm:$0xff]
    %v2057 = vld [vmem:[#allocation11 + $0x90] sm:$0xff]
    %v2058 = vld [vmem:[#allocation11 + $0x98] sm:$0xff]
    %v2059 = vld [vmem:[#allocation11 + $0xa0] sm:$0xff]
    %v2060 = vld [vmem:[#allocation11 + $0xa8] sm:$0xff]
    %v2061 = vld [vmem:[#allocation11 + $0xb0] sm:$0xff]
    %v2062 = vld [vmem:[#allocation11 + $0xb8] sm:$0xff]
    %v2063 = vld [vmem:[#allocation11 + $0xc0] sm:$0xff]
    %v2064 = vld [vmem:[#allocation11 + $0xc8] sm:$0xff]
    %v2065 = vld [vmem:[#allocation11 + $0xd0] sm:$0xff]
    %v2066 = vld [vmem:[#allocation11 + $0xd8] sm:$0xff]
    %v2067 = vld [vmem:[#allocation11 + $0xe0] sm:$0xff]
    %v2068 = vld [vmem:[#allocation11 + $0xe8] sm:$0xff]
    %v2069 = vld [vmem:[#allocation11 + $0xf0] sm:$0xff]
    %v2070 = vld [vmem:[#allocation11 + $0xf8] sm:$0xff]
    %v2071 = vld [vmem:[#allocation11 + $0x100] sm:$0xff]
    %v2072 = vld [vmem:[#allocation11 + $0x108] sm:$0xff]
    %v2073 = vld [vmem:[#allocation11 + $0x110] sm:$0xff]
    %v2074 = vld [vmem:[#allocation11 + $0x118] sm:$0xff]
    %v2075 = vld [vmem:[#allocation11 + $0x120] sm:$0xff]
    %v2076 = vld [vmem:[#allocation11 + $0x128] sm:$0xff]
    %v2077 = vld [vmem:[#allocation11 + $0x130] sm:$0xff]
    %v2078 = vld [vmem:[#allocation11 + $0x138] sm:$0xff]
    %v2079 = vld [vmem:[#allocation11 + $0x140] sm:$0xff]
    %v2080 = vld [vmem:[#allocation11 + $0x148] sm:$0xff]
    %v2081 = vld [vmem:[#allocation11 + $0x150] sm:$0xff]
    %v2082 = vld [vmem:[#allocation11 + $0x158] sm:$0xff]
    %v2083 = vld [vmem:[#allocation11 + $0x160] sm:$0xff]
    %v2084 = vld [vmem:[#allocation11 + $0x168] sm:$0xff]
    %v2085 = vld [vmem:[#allocation11 + $0x170] sm:$0xff]
    %v2086 = vld [vmem:[#allocation11 + $0x178] sm:$0xff]
    %2087 = vmatprep.subr.mxu0 %v2040
    %2088 = vmatpush1.msra.mxu0 %v2039
    %2089 = vmatprep.subr.mxu0 %v2043
    %2090 = vmatpush1.msra.mxu0 %v2042
    %2091 = vmatprep.subr.mxu0 %v2046
    %2092 = vmatpush1.msra.mxu0 %v2045
    %2093 = vmatprep.subr.mxu0 %v2049
    %2094 = vmatpush1.msra.mxu0 %v2048
    %2095 = vmatprep.subr.mxu0 %v2052
    %2096 = vmatpush1.msra.mxu0 %v2051
    %2097 = vmatprep.subr.mxu0 %v2055
    %2098 = vmatpush1.msra.mxu0 %v2054
    %2099 = vmatprep.subr.mxu0 %v2058
    %2100 = vmatpush1.msra.mxu0 %v2057
    %2101 = vmatprep.subr.mxu0 %v2061
    %2102 = vmatpush1.msra.mxu0 %v2060
    %2103 = vmatprep.subr.mxu0 %v2064
    %2104 = vmatpush1.msra.mxu0 %v2063
    %2105 = vmatprep.subr.mxu0 %v2067
    %2106 = vmatpush1.msra.mxu0 %v2066
    %2107 = vmatprep.subr.mxu0 %v2070
    %2108 = vmatpush1.msra.mxu0 %v2069
    %2109 = vmatprep.subr.mxu0 %v2073
    %2110 = vmatpush1.msra.mxu0 %v2072
    %2111 = vmatprep.subr.mxu0 %v2076
    %2112 = vmatpush1.msra.mxu0 %v2075
    %2113 = vmatprep.subr.mxu0 %v2079
    %2114 = vmatpush1.msra.mxu0 %v2078
    %2115 = vmatprep.subr.mxu0 %v2082
    %2116 = vmatpush1.msra.mxu0 %v2081
    %2117 = vmatprep.subr.mxu0 %v2085
    %2118 = vmatpush1.msra.mxu0 %v2084
    %2119 = vmatprep.subr.mxu0 0.0
    %2120 = vmatpush1.msra.mxu0 0.0
    %2121 = vmatprep.subr.mxu0 0.0
    %2122 = vmatpush1.msra.mxu0 0.0
    %2123 = vmatprep.subr.mxu0 0.0
    %2124 = vmatpush1.msra.mxu0 0.0
    %2125 = vmatprep.subr.mxu0 0.0
    %2126 = vmatpush1.msra.mxu0 0.0
    %2127 = vmatprep.subr.mxu0 0.0
    %2128 = vmatpush1.msra.mxu0 0.0
    %2129 = vmatprep.subr.mxu0 0.0
    %2130 = vmatpush1.msra.mxu0 0.0
    %2131 = vmatprep.subr.mxu0 0.0
    %2132 = vmatpush1.msra.mxu0 0.0
    %2133 = vmatprep.subr.mxu0 0.0
    %2134 = vmatpush1.msra.mxu0 0.0
    %2135 = vmatprep.subr.mxu0 0.0
    %2136 = vmatpush1.msra.mxu0 0.0
    %2137 = vmatprep.subr.mxu0 0.0
    %2138 = vmatpush1.msra.mxu0 0.0
    %2139 = vmatprep.subr.mxu0 0.0
    %2140 = vmatpush1.msra.mxu0 0.0
    %2141 = vmatprep.subr.mxu0 0.0
    %2142 = vmatpush1.msra.mxu0 0.0
    %2143 = vmatprep.subr.mxu0 0.0
    %2144 = vmatpush1.msra.mxu0 0.0
    %2145 = vmatprep.subr.mxu0 0.0
    %2146 = vmatpush1.msra.mxu0 0.0
    %2147 = vmatprep.subr.mxu0 0.0
    %2148 = vmatpush1.msra.mxu0 0.0
    %2149 = vmatprep.subr.mxu0 0.0
    %2150 = vmatpush1.msra.mxu0 0.0
    %2151 = vmatprep.mubr.f32.mxu0 0.0
    %2152 = vmatmul.mubr.f32.gmra.mrb[0].mxu0 %v2022
    %v2153 = vpop.f32.mrb[0].mxu0
    %v2154 = vadd.f32 0.0, %v2153
    %v2155 = vpop.f32.mrb[0].mxu0
    %v2156 = vadd.f32 0.0, %v2155
    %2157 = vdwg.mxu0
    %2158 = vmatprep.subr.mxu0 0.0
    %2159 = vmatpush1.msra.mxu0 %v2041
    %2160 = vmatprep.subr.mxu0 0.0
    %2161 = vmatpush1.msra.mxu0 %v2044
    %2162 = vmatprep.subr.mxu0 0.0
    %2163 = vmatpush1.msra.mxu0 %v2047
    %2164 = vmatprep.subr.mxu0 0.0
    %2165 = vmatpush1.msra.mxu0 %v2050
    %2166 = vmatprep.subr.mxu0 0.0
    %2167 = vmatpush1.msra.mxu0 %v2053
    %2168 = vmatprep.subr.mxu0 0.0
    %2169 = vmatpush1.msra.mxu0 %v2056
    %2170 = vmatprep.subr.mxu0 0.0
    %2171 = vmatpush1.msra.mxu0 %v2059
    %2172 = vmatprep.subr.mxu0 0.0
    %2173 = vmatpush1.msra.mxu0 %v2062
    %2174 = vmatprep.subr.mxu0 0.0
    %2175 = vmatpush1.msra.mxu0 %v2065
    %2176 = vmatprep.subr.mxu0 0.0
    %2177 = vmatpush1.msra.mxu0 %v2068
    %2178 = vmatprep.subr.mxu0 0.0
    %2179 = vmatpush1.msra.mxu0 %v2071
    %2180 = vmatprep.subr.mxu0 0.0
    %2181 = vmatpush1.msra.mxu0 %v2074
    %2182 = vmatprep.subr.mxu0 0.0
    %2183 = vmatpush1.msra.mxu0 %v2077
    %2184 = vmatprep.subr.mxu0 0.0
    %2185 = vmatpush1.msra.mxu0 %v2080
    %2186 = vmatprep.subr.mxu0 0.0
    %2187 = vmatpush1.msra.mxu0 %v2083
    %2188 = vmatprep.subr.mxu0 0.0
    %2189 = vmatpush1.msra.mxu0 %v2086
    %2190 = vmatprep.subr.mxu0 0.0
    %2191 = vmatpush1.msra.mxu0 0.0
    %2192 = vmatprep.subr.mxu0 0.0
    %2193 = vmatpush1.msra.mxu0 0.0
    %2194 = vmatprep.subr.mxu0 0.0
    %2195 = vmatpush1.msra.mxu0 0.0
    %2196 = vmatprep.subr.mxu0 0.0
    %2197 = vmatpush1.msra.mxu0 0.0
    %2198 = vmatprep.subr.mxu0 0.0
    %2199 = vmatpush1.msra.mxu0 0.0
    %2200 = vmatprep.subr.mxu0 0.0
    %2201 = vmatpush1.msra.mxu0 0.0
    %2202 = vmatprep.subr.mxu0 0.0
    %2203 = vmatpush1.msra.mxu0 0.0
    %2204 = vmatprep.subr.mxu0 0.0
    %2205 = vmatpush1.msra.mxu0 0.0
    %2206 = vmatprep.subr.mxu0 0.0
    %2207 = vmatpush1.msra.mxu0 0.0
    %2208 = vmatprep.subr.mxu0 0.0
    %2209 = vmatpush1.msra.mxu0 0.0
    %2210 = vmatprep.subr.mxu0 0.0
    %2211 = vmatpush1.msra.mxu0 0.0
    %2212 = vmatprep.subr.mxu0 0.0
    %2213 = vmatpush1.msra.mxu0 0.0
    %2214 = vmatprep.subr.mxu0 0.0
    %2215 = vmatpush1.msra.mxu0 0.0
    %2216 = vmatprep.subr.mxu0 0.0
    %2217 = vmatpush1.msra.mxu0 0.0
    %2218 = vmatprep.subr.mxu0 0.0
    %2219 = vmatpush1.msra.mxu0 0.0
    %2220 = vmatprep.subr.mxu0 0.0
    %2221 = vmatpush1.msra.mxu0 0.0
    %2222 = vmatprep.mubr.f32.mxu0 0.0
    %2223 = vmatmul.mubr.f32.gmra.mrb[0].mxu0 %v2022
    %v2224 = vpop.f32.mrb[0].mxu0
    %v2225 = vadd.f32 0.0, %v2224
    %v2226 = vpop.f32.mrb[0].mxu0
    %2227 = vdwg.mxu0
    %v2228 = vld [vmem:[#allocation12] sm:$0xff]
    %v2229 = vld [vmem:[#allocation12 + $0x8] sm:$0xff]
    %v2230 = vld [vmem:[#allocation12 + $0x10] sm:$0xff]
    %v2231 = vld [vmem:[#allocation12 + $0x18] sm:$0xff]
    %v2232 = vld [vmem:[#allocation12 + $0x20] sm:$0xff]
    %v2233 = vld [vmem:[#allocation12 + $0x28] sm:$0xff]
    %v2234 = vld [vmem:[#allocation12 + $0x30] sm:$0xff]
    %v2235 = vld [vmem:[#allocation12 + $0x38] sm:$0xff]
    %v2236 = vld [vmem:[#allocation12 + $0x40] sm:$0xff]
    %v2237 = vld [vmem:[#allocation12 + $0x48] sm:$0xff]
    %v2238 = vld [vmem:[#allocation12 + $0x50] sm:$0xff]
    %v2239 = vld [vmem:[#allocation12 + $0x58] sm:$0xff]
    %v2240 = vld [vmem:[#allocation12 + $0x60] sm:$0xff]
    %v2241 = vld [vmem:[#allocation12 + $0x68] sm:$0xff]
    %v2242 = vld [vmem:[#allocation12 + $0x70] sm:$0xff]
    %v2243 = vld [vmem:[#allocation12 + $0x78] sm:$0xff]
    %v2244 = vld [vmem:[#allocation12 + $0x80] sm:$0xff]
    %v2245 = vld [vmem:[#allocation12 + $0x88] sm:$0xff]
    %v2246 = vld [vmem:[#allocation12 + $0x90] sm:$0xff]
    %v2247 = vld [vmem:[#allocation12 + $0x98] sm:$0xff]
    %v2248 = vld [vmem:[#allocation12 + $0xa0] sm:$0xff]
    %v2249 = vld [vmem:[#allocation12 + $0xa8] sm:$0xff]
    %v2250 = vld [vmem:[#allocation12 + $0xb0] sm:$0xff]
    %v2251 = vld [vmem:[#allocation12 + $0xb8] sm:$0xff]
    %v2252 = vld [vmem:[#allocation12 + $0xc0] sm:$0xff]
    %v2253 = vld [vmem:[#allocation12 + $0xc8] sm:$0xff]
    %v2254 = vld [vmem:[#allocation12 + $0xd0] sm:$0xff]
    %v2255 = vld [vmem:[#allocation12 + $0xd8] sm:$0xff]
    %v2256 = vld [vmem:[#allocation12 + $0xe0] sm:$0xff]
    %v2257 = vld [vmem:[#allocation12 + $0xe8] sm:$0xff]
    %v2258 = vld [vmem:[#allocation12 + $0xf0] sm:$0xff]
    %v2259 = vld [vmem:[#allocation12 + $0xf8] sm:$0xff]
    %v2260 = vld [vmem:[#allocation12 + $0x100] sm:$0xff]
    %v2261 = vld [vmem:[#allocation12 + $0x108] sm:$0xff]
    %v2262 = vld [vmem:[#allocation12 + $0x110] sm:$0xff]
    %v2263 = vld [vmem:[#allocation12 + $0x118] sm:$0xff]
    %v2264 = vld [vmem:[#allocation12 + $0x120] sm:$0xff]
    %v2265 = vld [vmem:[#allocation12 + $0x128] sm:$0xff]
    %v2266 = vld [vmem:[#allocation12 + $0x130] sm:$0xff]
    %v2267 = vld [vmem:[#allocation12 + $0x138] sm:$0xff]
    %v2268 = vld [vmem:[#allocation12 + $0x140] sm:$0xff]
    %v2269 = vld [vmem:[#allocation12 + $0x148] sm:$0xff]
    %v2270 = vld [vmem:[#allocation12 + $0x150] sm:$0xff]
    %v2271 = vld [vmem:[#allocation12 + $0x158] sm:$0xff]
    %v2272 = vld [vmem:[#allocation12 + $0x160] sm:$0xff]
    %v2273 = vld [vmem:[#allocation12 + $0x168] sm:$0xff]
    %v2274 = vld [vmem:[#allocation12 + $0x170] sm:$0xff]
    %v2275 = vld [vmem:[#allocation12 + $0x178] sm:$0xff]
    %2276 = vmatprep.subr.mxu0 %v2229
    %2277 = vmatpush1.msra.mxu0 %v2228
    %2278 = vmatprep.subr.mxu0 %v2232
    %2279 = vmatpush1.msra.mxu0 %v2231
    %2280 = vmatprep.subr.mxu0 %v2235
    %2281 = vmatpush1.msra.mxu0 %v2234
    %2282 = vmatprep.subr.mxu0 %v2238
    %2283 = vmatpush1.msra.mxu0 %v2237
    %2284 = vmatprep.subr.mxu0 %v2241
    %2285 = vmatpush1.msra.mxu0 %v2240
    %2286 = vmatprep.subr.mxu0 %v2244
    %2287 = vmatpush1.msra.mxu0 %v2243
    %2288 = vmatprep.subr.mxu0 %v2247
    %2289 = vmatpush1.msra.mxu0 %v2246
    %2290 = vmatprep.subr.mxu0 %v2250
    %2291 = vmatpush1.msra.mxu0 %v2249
    %2292 = vmatprep.subr.mxu0 %v2253
    %2293 = vmatpush1.msra.mxu0 %v2252
    %2294 = vmatprep.subr.mxu0 %v2256
    %2295 = vmatpush1.msra.mxu0 %v2255
    %2296 = vmatprep.subr.mxu0 %v2259
    %2297 = vmatpush1.msra.mxu0 %v2258
    %2298 = vmatprep.subr.mxu0 %v2262
    %2299 = vmatpush1.msra.mxu0 %v2261
    %2300 = vmatprep.subr.mxu0 %v2265
    %2301 = vmatpush1.msra.mxu0 %v2264
    %2302 = vmatprep.subr.mxu0 %v2268
    %2303 = vmatpush1.msra.mxu0 %v2267
    %2304 = vmatprep.subr.mxu0 %v2271
    %2305 = vmatpush1.msra.mxu0 %v2270
    %2306 = vmatprep.subr.mxu0 %v2274
    %2307 = vmatpush1.msra.mxu0 %v2273
    %2308 = vmatprep.subr.mxu0 0.0
    %2309 = vmatpush1.msra.mxu0 0.0
    %2310 = vmatprep.subr.mxu0 0.0
    %2311 = vmatpush1.msra.mxu0 0.0
    %2312 = vmatprep.subr.mxu0 0.0
    %2313 = vmatpush1.msra.mxu0 0.0
    %2314 = vmatprep.subr.mxu0 0.0
    %2315 = vmatpush1.msra.mxu0 0.0
    %2316 = vmatprep.subr.mxu0 0.0
    %2317 = vmatpush1.msra.mxu0 0.0
    %2318 = vmatprep.subr.mxu0 0.0
    %2319 = vmatpush1.msra.mxu0 0.0
    %2320 = vmatprep.subr.mxu0 0.0
    %2321 = vmatpush1.msra.mxu0 0.0
    %2322 = vmatprep.subr.mxu0 0.0
    %2323 = vmatpush1.msra.mxu0 0.0
    %2324 = vmatprep.subr.mxu0 0.0
    %2325 = vmatpush1.msra.mxu0 0.0
    %2326 = vmatprep.subr.mxu0 0.0
    %2327 = vmatpush1.msra.mxu0 0.0
    %2328 = vmatprep.subr.mxu0 0.0
    %2329 = vmatpush1.msra.mxu0 0.0
    %2330 = vmatprep.subr.mxu0 0.0
    %2331 = vmatpush1.msra.mxu0 0.0
    %2332 = vmatprep.subr.mxu0 0.0
    %2333 = vmatpush1.msra.mxu0 0.0
    %2334 = vmatprep.subr.mxu0 0.0
    %2335 = vmatpush1.msra.mxu0 0.0
    %2336 = vmatprep.subr.mxu0 0.0
    %2337 = vmatpush1.msra.mxu0 0.0
    %2338 = vmatprep.subr.mxu0 0.0
    %2339 = vmatpush1.msra.mxu0 0.0
    %2340 = vmatprep.mubr.f32.mxu0 0.0
    %2341 = vmatmul.mubr.f32.gmra.mrb[0].mxu0 %v2028
    %v2342 = vpop.f32.mrb[0].mxu0
    %v2343 = vadd.f32 0.0, %v2342
    %v2344 = vpop.f32.mrb[0].mxu0
    %v2345 = vadd.f32 0.0, %v2344
    %2346 = vdwg.mxu0
    %2347 = vmatprep.subr.mxu0 0.0
    %2348 = vmatpush1.msra.mxu0 %v2230
    %2349 = vmatprep.subr.mxu0 0.0
    %2350 = vmatpush1.msra.mxu0 %v2233
    %2351 = vmatprep.subr.mxu0 0.0
    %2352 = vmatpush1.msra.mxu0 %v2236
    %2353 = vmatprep.subr.mxu0 0.0
    %2354 = vmatpush1.msra.mxu0 %v2239
    %2355 = vmatprep.subr.mxu0 0.0
    %2356 = vmatpush1.msra.mxu0 %v2242
    %2357 = vmatprep.subr.mxu0 0.0
    %2358 = vmatpush1.msra.mxu0 %v2245
    %2359 = vmatprep.subr.mxu0 0.0
    %2360 = vmatpush1.msra.mxu0 %v2248
    %2361 = vmatprep.subr.mxu0 0.0
    %2362 = vmatpush1.msra.mxu0 %v2251
    %2363 = vmatprep.subr.mxu0 0.0
    %2364 = vmatpush1.msra.mxu0 %v2254
    %2365 = vmatprep.subr.mxu0 0.0
    %2366 = vmatpush1.msra.mxu0 %v2257
    %2367 = vmatprep.subr.mxu0 0.0
    %2368 = vmatpush1.msra.mxu0 %v2260
    %2369 = vmatprep.subr.mxu0 0.0
    %2370 = vmatpush1.msra.mxu0 %v2263
    %2371 = vmatprep.subr.mxu0 0.0
    %2372 = vmatpush1.msra.mxu0 %v2266
    %2373 = vmatprep.subr.mxu0 0.0
    %2374 = vmatpush1.msra.mxu0 %v2269
    %2375 = vmatprep.subr.mxu0 0.0
    %2376 = vmatpush1.msra.mxu0 %v2272
    %2377 = vmatprep.subr.mxu0 0.0
    %2378 = vmatpush1.msra.mxu0 %v2275
    %2379 = vmatprep.subr.mxu0 0.0
    %2380 = vmatpush1.msra.mxu0 0.0
    %2381 = vmatprep.subr.mxu0 0.0
    %2382 = vmatpush1.msra.mxu0 0.0
    %2383 = vmatprep.subr.mxu0 0.0
    %2384 = vmatpush1.msra.mxu0 0.0
    %2385 = vmatprep.subr.mxu0 0.0
    %2386 = vmatpush1.msra.mxu0 0.0
    %2387 = vmatprep.subr.mxu0 0.0
    %2388 = vmatpush1.msra.mxu0 0.0
    %2389 = vmatprep.subr.mxu0 0.0
    %2390 = vmatpush1.msra.mxu0 0.0
    %2391 = vmatprep.subr.mxu0 0.0
    %2392 = vmatpush1.msra.mxu0 0.0
    %2393 = vmatprep.subr.mxu0 0.0
    %2394 = vmatpush1.msra.mxu0 0.0
    %2395 = vmatprep.subr.mxu0 0.0
    %2396 = vmatpush1.msra.mxu0 0.0
    %2397 = vmatprep.subr.mxu0 0.0
    %2398 = vmatpush1.msra.mxu0 0.0
    %2399 = vmatprep.subr.mxu0 0.0
    %2400 = vmatpush1.msra.mxu0 0.0
    %2401 = vmatprep.subr.mxu0 0.0
    %2402 = vmatpush1.msra.mxu0 0.0
    %2403 = vmatprep.subr.mxu0 0.0
    %2404 = vmatpush1.msra.mxu0 0.0
    %2405 = vmatprep.subr.mxu0 0.0
    %2406 = vmatpush1.msra.mxu0 0.0
    %2407 = vmatprep.subr.mxu0 0.0
    %2408 = vmatpush1.msra.mxu0 0.0
    %2409 = vmatprep.subr.mxu0 0.0
    %2410 = vmatpush1.msra.mxu0 0.0
    %2411 = vmatprep.mubr.f32.mxu0 0.0
    %2412 = vmatmul.mubr.f32.gmra.mrb[0].mxu0 %v2028
    %v2413 = vpop.f32.mrb[0].mxu0
    %v2414 = vadd.f32 0.0, %v2413
    %v2415 = vpop.f32.mrb[0].mxu0
    %2416 = vdwg.mxu0
    %v2417 = vadd.f32 %v2033, %v2154
    %v2418 = vxor.u32 %v2417, 2147483648
    %v2419 = vmul.f32 %v2418, 1.442695
    %v2420 = vpow.pop %v2419
    %v2421 = vadd.f32 %v2420, 1.0
    %v2422 = vrcp.pop %v2421
    %v2423 = vmul.f32 1.0, %v2422
    %v2424 = vadd.f32 %v2034, %v2156
    %v2425 = vxor.u32 %v2424, 2147483648
    %v2426 = vmul.f32 %v2425, 1.442695
    %v2427 = vpow.pop %v2426
    %v2428 = vadd.f32 %v2427, 1.0
    %v2429 = vrcp.pop %v2428
    %v2430 = vmul.f32 1.0, %v2429
    %v2431 = vadd.f32 %v2225, %v1093
    %v2432 = vmul.f32 %v2423, %v2431
    %v2433 = vadd.f32 %v2035, %v2432
    %v2434 = vtanh.pop %v2433
    %v2435 = vsub.f32 %v2022, %v2434
    %v2436 = vmul.f32 %v2430, %v2435
    %v2437 = vadd.f32 %v2434, %v2436
    %v2438 = vadd.f32 %v2036, %v2343
    %v2439 = vxor.u32 %v2438, 2147483648
    %v2440 = vmul.f32 %v2439, 1.442695
    %v2441 = vpow.pop %v2440
    %v2442 = vadd.f32 %v2441, 1.0
    %v2443 = vrcp.pop %v2442
    %v2444 = vmul.f32 1.0, %v2443
    %v2445 = vadd.f32 %v2037, %v2345
    %v2446 = vxor.u32 %v2445, 2147483648
    %v2447 = vmul.f32 %v2446, 1.442695
    %v2448 = vpow.pop %v2447
    %v2449 = vadd.f32 %v2448, 1.0
    %v2450 = vrcp.pop %v2449
    %v2451 = vmul.f32 1.0, %v2450
    %v2452 = vadd.f32 %v2414, %v1120
    %v2453 = vmul.f32 %v2444, %v2452
    %v2454 = vadd.f32 %v2038, %v2453
    %v2455 = vtanh.pop %v2454
    %v2456 = vsub.f32 %v2028, %v2455
    %v2457 = vmul.f32 %v2451, %v2456
    %v2458 = vadd.f32 %v2455, %v2457
    %vm2459 = vcmp.gt.s32.totalorder %v113, 3
    %vm2460 = vcmp.gt.s32.totalorder %v113, 4
    %v2461 = vsel %vm2459, 1, 0
    %2462 = vset.pattern.permute.xlu0 0
    %2463 = vperm.xlu0 %2462, %v2461
    %v2464 = vpop.permute.xlu0 %2463
    %vm2465 = vcmp.eq.s32.totalorder %v2464, 1
    %v2466 = vsel %vm2465, %v2437, %v2022
    %v2467 = vsel %vm2460, 1, 0
    %2468 = vset.pattern.permute.xlu0 0
    %2469 = vperm.xlu0 %2468, %v2467
    %v2470 = vpop.permute.xlu0 %2469
    %vm2471 = vcmp.eq.s32.totalorder %v2470, 1
    %v2472 = vsel %vm2471, %v2458, %v2028
    %v2473 = vsel %vm2465, %v2437, 0.0
    %2474 = vst [vmem:[#allocation4 + $0x18] sm:$0xff] %v2473
    %v2475 = vsel %vm2471, %v2458, 0.0
    %2476 = vst [vmem:[#allocation5 + $0x20] sm:$0xff] %v2475
    %v2477 = vld [vmem:[#allocation2 + $0x60] sm:$0xff]
    %v2478 = vld [vmem:[#allocation2 + $0x68] sm:$0xff]
    %v2479 = vld [vmem:[#allocation2 + $0x70] sm:$0xff]
    %v2480 = vld [vmem:[#allocation3 + $0x48] sm:$0xff]
    %v2481 = vld [vmem:[#allocation3 + $0x50] sm:$0xff]
    %v2482 = vld [vmem:[#allocation3 + $0x58] sm:$0xff]
    %v2483 = vld [vmem:[#allocation11] sm:$0xff]
    %v2484 = vld [vmem:[#allocation11 + $0x8] sm:$0xff]
    %v2485 = vld [vmem:[#allocation11 + $0x10] sm:$0xff]
    %v2486 = vld [vmem:[#allocation11 + $0x18] sm:$0xff]
    %v2487 = vld [vmem:[#allocation11 + $0x20] sm:$0xff]
    %v2488 = vld [vmem:[#allocation11 + $0x28] sm:$0xff]
    %v2489 = vld [vmem:[#allocation11 + $0x30] sm:$0xff]
    %v2490 = vld [vmem:[#allocation11 + $0x38] sm:$0xff]
    %v2491 = vld [vmem:[#allocation11 + $0x40] sm:$0xff]
    %v2492 = vld [vmem:[#allocation11 + $0x48] sm:$0xff]
    %v2493 = vld [vmem:[#allocation11 + $0x50] sm:$0xff]
    %v2494 = vld [vmem:[#allocation11 + $0x58] sm:$0xff]
    %v2495 = vld [vmem:[#allocation11 + $0x60] sm:$0xff]
    %v2496 = vld [vmem:[#allocation11 + $0x68] sm:$0xff]
    %v2497 = vld [vmem:[#allocation11 + $0x70] sm:$0xff]
    %v2498 = vld [vmem:[#allocation11 + $0x78] sm:$0xff]
    %v2499 = vld [vmem:[#allocation11 + $0x80] sm:$0xff]
    %v2500 = vld [vmem:[#allocation11 + $0x88] sm:$0xff]
    %v2501 = vld [vmem:[#allocation11 + $0x90] sm:$0xff]
    %v2502 = vld [vmem:[#allocation11 + $0x98] sm:$0xff]
    %v2503 = vld [vmem:[#allocation11 + $0xa0] sm:$0xff]
    %v2504 = vld [vmem:[#allocation11 + $0xa8] sm:$0xff]
    %v2505 = vld [vmem:[#allocation11 + $0xb0] sm:$0xff]
    %v2506 = vld [vmem:[#allocation11 + $0xb8] sm:$0xff]
    %v2507 = vld [vmem:[#allocation11 + $0xc0] sm:$0xff]
    %v2508 = vld [vmem:[#allocation11 + $0xc8] sm:$0xff]
    %v2509 = vld [vmem:[#allocation11 + $0xd0] sm:$0xff]
    %v2510 = vld [vmem:[#allocation11 + $0xd8] sm:$0xff]
    %v2511 = vld [vmem:[#allocation11 + $0xe0] sm:$0xff]
    %v2512 = vld [vmem:[#allocation11 + $0xe8] sm:$0xff]
    %v2513 = vld [vmem:[#allocation11 + $0xf0] sm:$0xff]
    %v2514 = vld [vmem:[#allocation11 + $0xf8] sm:$0xff]
    %v2515 = vld [vmem:[#allocation11 + $0x100] sm:$0xff]
    %v2516 = vld [vmem:[#allocation11 + $0x108] sm:$0xff]
    %v2517 = vld [vmem:[#allocation11 + $0x110] sm:$0xff]
    %v2518 = vld [vmem:[#allocation11 + $0x118] sm:$0xff]
    %v2519 = vld [vmem:[#allocation11 + $0x120] sm:$0xff]
    %v2520 = vld [vmem:[#allocation11 + $0x128] sm:$0xff]
    %v2521 = vld [vmem:[#allocation11 + $0x130] sm:$0xff]
    %v2522 = vld [vmem:[#allocation11 + $0x138] sm:$0xff]
    %v2523 = vld [vmem:[#allocation11 + $0x140] sm:$0xff]
    %v2524 = vld [vmem:[#allocation11 + $0x148] sm:$0xff]
    %v2525 = vld [vmem:[#allocation11 + $0x150] sm:$0xff]
    %v2526 = vld [vmem:[#allocation11 + $0x158] sm:$0xff]
    %v2527 = vld [vmem:[#allocation11 + $0x160] sm:$0xff]
    %v2528 = vld [vmem:[#allocation11 + $0x168] sm:$0xff]
    %v2529 = vld [vmem:[#allocation11 + $0x170] sm:$0xff]
    %v2530 = vld [vmem:[#allocation11 + $0x178] sm:$0xff]
    %2531 = vmatprep.subr.mxu0 %v2484
    %2532 = vmatpush1.msra.mxu0 %v2483
    %2533 = vmatprep.subr.mxu0 %v2487
    %2534 = vmatpush1.msra.mxu0 %v2486
    %2535 = vmatprep.subr.mxu0 %v2490
    %2536 = vmatpush1.msra.mxu0 %v2489
    %2537 = vmatprep.subr.mxu0 %v2493
    %2538 = vmatpush1.msra.mxu0 %v2492
    %2539 = vmatprep.subr.mxu0 %v2496
    %2540 = vmatpush1.msra.mxu0 %v2495
    %2541 = vmatprep.subr.mxu0 %v2499
    %2542 = vmatpush1.msra.mxu0 %v2498
    %2543 = vmatprep.subr.mxu0 %v2502
    %2544 = vmatpush1.msra.mxu0 %v2501
    %2545 = vmatprep.subr.mxu0 %v2505
    %2546 = vmatpush1.msra.mxu0 %v2504
    %2547 = vmatprep.subr.mxu0 %v2508
    %2548 = vmatpush1.msra.mxu0 %v2507
    %2549 = vmatprep.subr.mxu0 %v2511
    %2550 = vmatpush1.msra.mxu0 %v2510
    %2551 = vmatprep.subr.mxu0 %v2514
    %2552 = vmatpush1.msra.mxu0 %v2513
    %2553 = vmatprep.subr.mxu0 %v2517
    %2554 = vmatpush1.msra.mxu0 %v2516
    %2555 = vmatprep.subr.mxu0 %v2520
    %2556 = vmatpush1.msra.mxu0 %v2519
    %2557 = vmatprep.subr.mxu0 %v2523
    %2558 = vmatpush1.msra.mxu0 %v2522
    %2559 = vmatprep.subr.mxu0 %v2526
    %2560 = vmatpush1.msra.mxu0 %v2525
    %2561 = vmatprep.subr.mxu0 %v2529
    %2562 = vmatpush1.msra.mxu0 %v2528
    %2563 = vmatprep.subr.mxu0 0.0
    %2564 = vmatpush1.msra.mxu0 0.0
    %2565 = vmatprep.subr.mxu0 0.0
    %2566 = vmatpush1.msra.mxu0 0.0
    %2567 = vmatprep.subr.mxu0 0.0
    %2568 = vmatpush1.msra.mxu0 0.0
    %2569 = vmatprep.subr.mxu0 0.0
    %2570 = vmatpush1.msra.mxu0 0.0
    %2571 = vmatprep.subr.mxu0 0.0
    %2572 = vmatpush1.msra.mxu0 0.0
    %2573 = vmatprep.subr.mxu0 0.0
    %2574 = vmatpush1.msra.mxu0 0.0
    %2575 = vmatprep.subr.mxu0 0.0
    %2576 = vmatpush1.msra.mxu0 0.0
    %2577 = vmatprep.subr.mxu0 0.0
    %2578 = vmatpush1.msra.mxu0 0.0
    %2579 = vmatprep.subr.mxu0 0.0
    %2580 = vmatpush1.msra.mxu0 0.0
    %2581 = vmatprep.subr.mxu0 0.0
    %2582 = vmatpush1.msra.mxu0 0.0
    %2583 = vmatprep.subr.mxu0 0.0
    %2584 = vmatpush1.msra.mxu0 0.0
    %2585 = vmatprep.subr.mxu0 0.0
    %2586 = vmatpush1.msra.mxu0 0.0
    %2587 = vmatprep.subr.mxu0 0.0
    %2588 = vmatpush1.msra.mxu0 0.0
    %2589 = vmatprep.subr.mxu0 0.0
    %2590 = vmatpush1.msra.mxu0 0.0
    %2591 = vmatprep.subr.mxu0 0.0
    %2592 = vmatpush1.msra.mxu0 0.0
    %2593 = vmatprep.subr.mxu0 0.0
    %2594 = vmatpush1.msra.mxu0 0.0
    %2595 = vmatprep.mubr.f32.mxu0 0.0
    %2596 = vmatmul.mubr.f32.gmra.mrb[0].mxu0 %v2466
    %v2597 = vpop.f32.mrb[0].mxu0
    %v2598 = vadd.f32 0.0, %v2597
    %v2599 = vpop.f32.mrb[0].mxu0
    %v2600 = vadd.f32 0.0, %v2599
    %2601 = vdwg.mxu0
    %2602 = vmatprep.subr.mxu0 0.0
    %2603 = vmatpush1.msra.mxu0 %v2485
    %2604 = vmatprep.subr.mxu0 0.0
    %2605 = vmatpush1.msra.mxu0 %v2488
    %2606 = vmatprep.subr.mxu0 0.0
    %2607 = vmatpush1.msra.mxu0 %v2491
    %2608 = vmatprep.subr.mxu0 0.0
    %2609 = vmatpush1.msra.mxu0 %v2494
    %2610 = vmatprep.subr.mxu0 0.0
    %2611 = vmatpush1.msra.mxu0 %v2497
    %2612 = vmatprep.subr.mxu0 0.0
    %2613 = vmatpush1.msra.mxu0 %v2500
    %2614 = vmatprep.subr.mxu0 0.0
    %2615 = vmatpush1.msra.mxu0 %v2503
    %2616 = vmatprep.subr.mxu0 0.0
    %2617 = vmatpush1.msra.mxu0 %v2506
    %2618 = vmatprep.subr.mxu0 0.0
    %2619 = vmatpush1.msra.mxu0 %v2509
    %2620 = vmatprep.subr.mxu0 0.0
    %2621 = vmatpush1.msra.mxu0 %v2512
    %2622 = vmatprep.subr.mxu0 0.0
    %2623 = vmatpush1.msra.mxu0 %v2515
    %2624 = vmatprep.subr.mxu0 0.0
    %2625 = vmatpush1.msra.mxu0 %v2518
    %2626 = vmatprep.subr.mxu0 0.0
    %2627 = vmatpush1.msra.mxu0 %v2521
    %2628 = vmatprep.subr.mxu0 0.0
    %2629 = vmatpush1.msra.mxu0 %v2524
    %2630 = vmatprep.subr.mxu0 0.0
    %2631 = vmatpush1.msra.mxu0 %v2527
    %2632 = vmatprep.subr.mxu0 0.0
    %2633 = vmatpush1.msra.mxu0 %v2530
    %2634 = vmatprep.subr.mxu0 0.0
    %2635 = vmatpush1.msra.mxu0 0.0
    %2636 = vmatprep.subr.mxu0 0.0
    %2637 = vmatpush1.msra.mxu0 0.0
    %2638 = vmatprep.subr.mxu0 0.0
    %2639 = vmatpush1.msra.mxu0 0.0
    %2640 = vmatprep.subr.mxu0 0.0
    %2641 = vmatpush1.msra.mxu0 0.0
    %2642 = vmatprep.subr.mxu0 0.0
    %2643 = vmatpush1.msra.mxu0 0.0
    %2644 = vmatprep.subr.mxu0 0.0
    %2645 = vmatpush1.msra.mxu0 0.0
    %2646 = vmatprep.subr.mxu0 0.0
    %2647 = vmatpush1.msra.mxu0 0.0
    %2648 = vmatprep.subr.mxu0 0.0
    %2649 = vmatpush1.msra.mxu0 0.0
    %2650 = vmatprep.subr.mxu0 0.0
    %2651 = vmatpush1.msra.mxu0 0.0
    %2652 = vmatprep.subr.mxu0 0.0
    %2653 = vmatpush1.msra.mxu0 0.0
    %2654 = vmatprep.subr.mxu0 0.0
    %2655 = vmatpush1.msra.mxu0 0.0
    %2656 = vmatprep.subr.mxu0 0.0
    %2657 = vmatpush1.msra.mxu0 0.0
    %2658 = vmatprep.subr.mxu0 0.0
    %2659 = vmatpush1.msra.mxu0 0.0
    %2660 = vmatprep.subr.mxu0 0.0
    %2661 = vmatpush1.msra.mxu0 0.0
    %2662 = vmatprep.subr.mxu0 0.0
    %2663 = vmatpush1.msra.mxu0 0.0
    %2664 = vmatprep.subr.mxu0 0.0
    %2665 = vmatpush1.msra.mxu0 0.0
    %2666 = vmatprep.mubr.f32.mxu0 0.0
    %2667 = vmatmul.mubr.f32.gmra.mrb[0].mxu0 %v2466
    %v2668 = vpop.f32.mrb[0].mxu0
    %v2669 = vadd.f32 0.0, %v2668
    %v2670 = vpop.f32.mrb[0].mxu0
    %2671 = vdwg.mxu0
    %v2672 = vld [vmem:[#allocation12] sm:$0xff]
    %v2673 = vld [vmem:[#allocation12 + $0x8] sm:$0xff]
    %v2674 = vld [vmem:[#allocation12 + $0x10] sm:$0xff]
    %v2675 = vld [vmem:[#allocation12 + $0x18] sm:$0xff]
    %v2676 = vld [vmem:[#allocation12 + $0x20] sm:$0xff]
    %v2677 = vld [vmem:[#allocation12 + $0x28] sm:$0xff]
    %v2678 = vld [vmem:[#allocation12 + $0x30] sm:$0xff]
    %v2679 = vld [vmem:[#allocation12 + $0x38] sm:$0xff]
    %v2680 = vld [vmem:[#allocation12 + $0x40] sm:$0xff]
    %v2681 = vld [vmem:[#allocation12 + $0x48] sm:$0xff]
    %v2682 = vld [vmem:[#allocation12 + $0x50] sm:$0xff]
    %v2683 = vld [vmem:[#allocation12 + $0x58] sm:$0xff]
    %v2684 = vld [vmem:[#allocation12 + $0x60] sm:$0xff]
    %v2685 = vld [vmem:[#allocation12 + $0x68] sm:$0xff]
    %v2686 = vld [vmem:[#allocation12 + $0x70] sm:$0xff]
    %v2687 = vld [vmem:[#allocation12 + $0x78] sm:$0xff]
    %v2688 = vld [vmem:[#allocation12 + $0x80] sm:$0xff]
    %v2689 = vld [vmem:[#allocation12 + $0x88] sm:$0xff]
    %v2690 = vld [vmem:[#allocation12 + $0x90] sm:$0xff]
    %v2691 = vld [vmem:[#allocation12 + $0x98] sm:$0xff]
    %v2692 = vld [vmem:[#allocation12 + $0xa0] sm:$0xff]
    %v2693 = vld [vmem:[#allocation12 + $0xa8] sm:$0xff]
    %v2694 = vld [vmem:[#allocation12 + $0xb0] sm:$0xff]
    %v2695 = vld [vmem:[#allocation12 + $0xb8] sm:$0xff]
    %v2696 = vld [vmem:[#allocation12 + $0xc0] sm:$0xff]
    %v2697 = vld [vmem:[#allocation12 + $0xc8] sm:$0xff]
    %v2698 = vld [vmem:[#allocation12 + $0xd0] sm:$0xff]
    %v2699 = vld [vmem:[#allocation12 + $0xd8] sm:$0xff]
    %v2700 = vld [vmem:[#allocation12 + $0xe0] sm:$0xff]
    %v2701 = vld [vmem:[#allocation12 + $0xe8] sm:$0xff]
    %v2702 = vld [vmem:[#allocation12 + $0xf0] sm:$0xff]
    %v2703 = vld [vmem:[#allocation12 + $0xf8] sm:$0xff]
    %v2704 = vld [vmem:[#allocation12 + $0x100] sm:$0xff]
    %v2705 = vld [vmem:[#allocation12 + $0x108] sm:$0xff]
    %v2706 = vld [vmem:[#allocation12 + $0x110] sm:$0xff]
    %v2707 = vld [vmem:[#allocation12 + $0x118] sm:$0xff]
    %v2708 = vld [vmem:[#allocation12 + $0x120] sm:$0xff]
    %v2709 = vld [vmem:[#allocation12 + $0x128] sm:$0xff]
    %v2710 = vld [vmem:[#allocation12 + $0x130] sm:$0xff]
    %v2711 = vld [vmem:[#allocation12 + $0x138] sm:$0xff]
    %v2712 = vld [vmem:[#allocation12 + $0x140] sm:$0xff]
    %v2713 = vld [vmem:[#allocation12 + $0x148] sm:$0xff]
    %v2714 = vld [vmem:[#allocation12 + $0x150] sm:$0xff]
    %v2715 = vld [vmem:[#allocation12 + $0x158] sm:$0xff]
    %v2716 = vld [vmem:[#allocation12 + $0x160] sm:$0xff]
    %v2717 = vld [vmem:[#allocation12 + $0x168] sm:$0xff]
    %v2718 = vld [vmem:[#allocation12 + $0x170] sm:$0xff]
    %v2719 = vld [vmem:[#allocation12 + $0x178] sm:$0xff]
    %2720 = vmatprep.subr.mxu0 %v2673
    %2721 = vmatpush1.msra.mxu0 %v2672
    %2722 = vmatprep.subr.mxu0 %v2676
    %2723 = vmatpush1.msra.mxu0 %v2675
    %2724 = vmatprep.subr.mxu0 %v2679
    %2725 = vmatpush1.msra.mxu0 %v2678
    %2726 = vmatprep.subr.mxu0 %v2682
    %2727 = vmatpush1.msra.mxu0 %v2681
    %2728 = vmatprep.subr.mxu0 %v2685
    %2729 = vmatpush1.msra.mxu0 %v2684
    %2730 = vmatprep.subr.mxu0 %v2688
    %2731 = vmatpush1.msra.mxu0 %v2687
    %2732 = vmatprep.subr.mxu0 %v2691
    %2733 = vmatpush1.msra.mxu0 %v2690
    %2734 = vmatprep.subr.mxu0 %v2694
    %2735 = vmatpush1.msra.mxu0 %v2693
    %2736 = vmatprep.subr.mxu0 %v2697
    %2737 = vmatpush1.msra.mxu0 %v2696
    %2738 = vmatprep.subr.mxu0 %v2700
    %2739 = vmatpush1.msra.mxu0 %v2699
    %2740 = vmatprep.subr.mxu0 %v2703
    %2741 = vmatpush1.msra.mxu0 %v2702
    %2742 = vmatprep.subr.mxu0 %v2706
    %2743 = vmatpush1.msra.mxu0 %v2705
    %2744 = vmatprep.subr.mxu0 %v2709
    %2745 = vmatpush1.msra.mxu0 %v2708
    %2746 = vmatprep.subr.mxu0 %v2712
    %2747 = vmatpush1.msra.mxu0 %v2711
    %2748 = vmatprep.subr.mxu0 %v2715
    %2749 = vmatpush1.msra.mxu0 %v2714
    %2750 = vmatprep.subr.mxu0 %v2718
    %2751 = vmatpush1.msra.mxu0 %v2717
    %2752 = vmatprep.subr.mxu0 0.0
    %2753 = vmatpush1.msra.mxu0 0.0
    %2754 = vmatprep.subr.mxu0 0.0
    %2755 = vmatpush1.msra.mxu0 0.0
    %2756 = vmatprep.subr.mxu0 0.0
    %2757 = vmatpush1.msra.mxu0 0.0
    %2758 = vmatprep.subr.mxu0 0.0
    %2759 = vmatpush1.msra.mxu0 0.0
    %2760 = vmatprep.subr.mxu0 0.0
    %2761 = vmatpush1.msra.mxu0 0.0
    %2762 = vmatprep.subr.mxu0 0.0
    %2763 = vmatpush1.msra.mxu0 0.0
    %2764 = vmatprep.subr.mxu0 0.0
    %2765 = vmatpush1.msra.mxu0 0.0
    %2766 = vmatprep.subr.mxu0 0.0
    %2767 = vmatpush1.msra.mxu0 0.0
    %2768 = vmatprep.subr.mxu0 0.0
    %2769 = vmatpush1.msra.mxu0 0.0
    %2770 = vmatprep.subr.mxu0 0.0
    %2771 = vmatpush1.msra.mxu0 0.0
    %2772 = vmatprep.subr.mxu0 0.0
    %2773 = vmatpush1.msra.mxu0 0.0
    %2774 = vmatprep.subr.mxu0 0.0
    %2775 = vmatpush1.msra.mxu0 0.0
    %2776 = vmatprep.subr.mxu0 0.0
    %2777 = vmatpush1.msra.mxu0 0.0
    %2778 = vmatprep.subr.mxu0 0.0
    %2779 = vmatpush1.msra.mxu0 0.0
    %2780 = vmatprep.subr.mxu0 0.0
    %2781 = vmatpush1.msra.mxu0 0.0
    %2782 = vmatprep.subr.mxu0 0.0
    %2783 = vmatpush1.msra.mxu0 0.0
    %2784 = vmatprep.mubr.f32.mxu0 0.0
    %2785 = vmatmul.mubr.f32.gmra.mrb[0].mxu0 %v2472
    %v2786 = vpop.f32.mrb[0].mxu0
    %v2787 = vadd.f32 0.0, %v2786
    %v2788 = vpop.f32.mrb[0].mxu0
    %v2789 = vadd.f32 0.0, %v2788
    %2790 = vdwg.mxu0
    %2791 = vmatprep.subr.mxu0 0.0
    %2792 = vmatpush1.msra.mxu0 %v2674
    %2793 = vmatprep.subr.mxu0 0.0
    %2794 = vmatpush1.msra.mxu0 %v2677
    %2795 = vmatprep.subr.mxu0 0.0
    %2796 = vmatpush1.msra.mxu0 %v2680
    %2797 = vmatprep.subr.mxu0 0.0
    %2798 = vmatpush1.msra.mxu0 %v2683
    %2799 = vmatprep.subr.mxu0 0.0
    %2800 = vmatpush1.msra.mxu0 %v2686
    %2801 = vmatprep.subr.mxu0 0.0
    %2802 = vmatpush1.msra.mxu0 %v2689
    %2803 = vmatprep.subr.mxu0 0.0
    %2804 = vmatpush1.msra.mxu0 %v2692
    %2805 = vmatprep.subr.mxu0 0.0
    %2806 = vmatpush1.msra.mxu0 %v2695
    %2807 = vmatprep.subr.mxu0 0.0
    %2808 = vmatpush1.msra.mxu0 %v2698
    %2809 = vmatprep.subr.mxu0 0.0
    %2810 = vmatpush1.msra.mxu0 %v2701
    %2811 = vmatprep.subr.mxu0 0.0
    %2812 = vmatpush1.msra.mxu0 %v2704
    %2813 = vmatprep.subr.mxu0 0.0
    %2814 = vmatpush1.msra.mxu0 %v2707
    %2815 = vmatprep.subr.mxu0 0.0
    %2816 = vmatpush1.msra.mxu0 %v2710
    %2817 = vmatprep.subr.mxu0 0.0
    %2818 = vmatpush1.msra.mxu0 %v2713
    %2819 = vmatprep.subr.mxu0 0.0
    %2820 = vmatpush1.msra.mxu0 %v2716
    %2821 = vmatprep.subr.mxu0 0.0
    %2822 = vmatpush1.msra.mxu0 %v2719
    %2823 = vmatprep.subr.mxu0 0.0
    %2824 = vmatpush1.msra.mxu0 0.0
    %2825 = vmatprep.subr.mxu0 0.0
    %2826 = vmatpush1.msra.mxu0 0.0
    %2827 = vmatprep.subr.mxu0 0.0
    %2828 = vmatpush1.msra.mxu0 0.0
    %2829 = vmatprep.subr.mxu0 0.0
    %2830 = vmatpush1.msra.mxu0 0.0
    %2831 = vmatprep.subr.mxu0 0.0
    %2832 = vmatpush1.msra.mxu0 0.0
    %2833 = vmatprep.subr.mxu0 0.0
    %2834 = vmatpush1.msra.mxu0 0.0
    %2835 = vmatprep.subr.mxu0 0.0
    %2836 = vmatpush1.msra.mxu0 0.0
    %2837 = vmatprep.subr.mxu0 0.0
    %2838 = vmatpush1.msra.mxu0 0.0
    %2839 = vmatprep.subr.mxu0 0.0
    %2840 = vmatpush1.msra.mxu0 0.0
    %2841 = vmatprep.subr.mxu0 0.0
    %2842 = vmatpush1.msra.mxu0 0.0
    %2843 = vmatprep.subr.mxu0 0.0
    %2844 = vmatpush1.msra.mxu0 0.0
    %2845 = vmatprep.subr.mxu0 0.0
    %2846 = vmatpush1.msra.mxu0 0.0
    %2847 = vmatprep.subr.mxu0 0.0
    %2848 = vmatpush1.msra.mxu0 0.0
    %2849 = vmatprep.subr.mxu0 0.0
    %2850 = vmatpush1.msra.mxu0 0.0
    %2851 = vmatprep.subr.mxu0 0.0
    %2852 = vmatpush1.msra.mxu0 0.0
    %2853 = vmatprep.subr.mxu0 0.0
    %2854 = vmatpush1.msra.mxu0 0.0
    %2855 = vmatprep.mubr.f32.mxu0 0.0
    %2856 = vmatmul.mubr.f32.gmra.mrb[0].mxu0 %v2472
    %v2857 = vpop.f32.mrb[0].mxu0
    %v2858 = vadd.f32 0.0, %v2857
    %v2859 = vpop.f32.mrb[0].mxu0
    %2860 = vdwg.mxu0
    %v2861 = vadd.f32 %v2477, %v2598
    %v2862 = vxor.u32 %v2861, 2147483648
    %v2863 = vmul.f32 %v2862, 1.442695
    %v2864 = vpow.pop %v2863
    %v2865 = vadd.f32 %v2864, 1.0
    %v2866 = vrcp.pop %v2865
    %v2867 = vmul.f32 1.0, %v2866
    %v2868 = vadd.f32 %v2478, %v2600
    %v2869 = vxor.u32 %v2868, 2147483648
    %v2870 = vmul.f32 %v2869, 1.442695
    %v2871 = vpow.pop %v2870
    %v2872 = vadd.f32 %v2871, 1.0
    %v2873 = vrcp.pop %v2872
    %v2874 = vmul.f32 1.0, %v2873
    %v2875 = vadd.f32 %v2669, %v1093
    %v2876 = vmul.f32 %v2867, %v2875
    %v2877 = vadd.f32 %v2479, %v2876
    %v2878 = vtanh.pop %v2877
    %v2879 = vsub.f32 %v2466, %v2878
    %v2880 = vmul.f32 %v2874, %v2879
    %v2881 = vadd.f32 %v2878, %v2880
    %v2882 = vadd.f32 %v2480, %v2787
    %v2883 = vxor.u32 %v2882, 2147483648
    %v2884 = vmul.f32 %v2883, 1.442695
    %v2885 = vpow.pop %v2884
    %v2886 = vadd.f32 %v2885, 1.0
    %v2887 = vrcp.pop %v2886
    %v2888 = vmul.f32 1.0, %v2887
    %v2889 = vadd.f32 %v2481, %v2789
    %v2890 = vxor.u32 %v2889, 2147483648
    %v2891 = vmul.f32 %v2890, 1.442695
    %v2892 = vpow.pop %v2891
    %v2893 = vadd.f32 %v2892, 1.0
    %v2894 = vrcp.pop %v2893
    %v2895 = vmul.f32 1.0, %v2894
    %v2896 = vadd.f32 %v2858, %v1120
    %v2897 = vmul.f32 %v2888, %v2896
    %v2898 = vadd.f32 %v2482, %v2897
    %v2899 = vtanh.pop %v2898
    %v2900 = vsub.f32 %v2472, %v2899
    %v2901 = vmul.f32 %v2895, %v2900
    %v2902 = vadd.f32 %v2899, %v2901
    %v2903 = vsel %vm2471, %v2881, %v2466
    %v2904 = vsel %vm2465, %v2902, %v2472
    %v2905 = vsel %vm2471, %v2881, 0.0
    %2906 = vst [vmem:[#allocation4 + $0x20] sm:$0xff] %v2905
    %v2907 = vsel %vm2465, %v2902, 0.0
    %2908 = vst [vmem:[#allocation5 + $0x18] sm:$0xff] %v2907
    %v2909 = vld [vmem:[#allocation2 + $0x78] sm:$0xff]
    %v2910 = vld [vmem:[#allocation2 + $0x80] sm:$0xff]
    %v2911 = vld [vmem:[#allocation2 + $0x88] sm:$0xff]
    %v2912 = vld [vmem:[#allocation3 + $0x30] sm:$0xff]
    %v2913 = vld [vmem:[#allocation3 + $0x38] sm:$0xff]
    %v2914 = vld [vmem:[#allocation3 + $0x40] sm:$0xff]
    %v2915 = vld [vmem:[#allocation11] sm:$0xff]
    %v2916 = vld [vmem:[#allocation11 + $0x8] sm:$0xff]
    %v2917 = vld [vmem:[#allocation11 + $0x10] sm:$0xff]
    %v2918 = vld [vmem:[#allocation11 + $0x18] sm:$0xff]
    %v2919 = vld [vmem:[#allocation11 + $0x20] sm:$0xff]
    %v2920 = vld [vmem:[#allocation11 + $0x28] sm:$0xff]
    %v2921 = vld [vmem:[#allocation11 + $0x30] sm:$0xff]
    %v2922 = vld [vmem:[#allocation11 + $0x38] sm:$0xff]
    %v2923 = vld [vmem:[#allocation11 + $0x40] sm:$0xff]
    %v2924 = vld [vmem:[#allocation11 + $0x48] sm:$0xff]
    %v2925 = vld [vmem:[#allocation11 + $0x50] sm:$0xff]
    %v2926 = vld [vmem:[#allocation11 + $0x58] sm:$0xff]
    %v2927 = vld [vmem:[#allocation11 + $0x60] sm:$0xff]
    %v2928 = vld [vmem:[#allocation11 + $0x68] sm:$0xff]
    %v2929 = vld [vmem:[#allocation11 + $0x70] sm:$0xff]
    %v2930 = vld [vmem:[#allocation11 + $0x78] sm:$0xff]
    %v2931 = vld [vmem:[#allocation11 + $0x80] sm:$0xff]
    %v2932 = vld [vmem:[#allocation11 + $0x88] sm:$0xff]
    %v2933 = vld [vmem:[#allocation11 + $0x90] sm:$0xff]
    %v2934 = vld [vmem:[#allocation11 + $0x98] sm:$0xff]
    %v2935 = vld [vmem:[#allocation11 + $0xa0] sm:$0xff]
    %v2936 = vld [vmem:[#allocation11 + $0xa8] sm:$0xff]
    %v2937 = vld [vmem:[#allocation11 + $0xb0] sm:$0xff]
    %v2938 = vld [vmem:[#allocation11 + $0xb8] sm:$0xff]
    %v2939 = vld [vmem:[#allocation11 + $0xc0] sm:$0xff]
    %v2940 = vld [vmem:[#allocation11 + $0xc8] sm:$0xff]
    %v2941 = vld [vmem:[#allocation11 + $0xd0] sm:$0xff]
    %v2942 = vld [vmem:[#allocation11 + $0xd8] sm:$0xff]
    %v2943 = vld [vmem:[#allocation11 + $0xe0] sm:$0xff]
    %v2944 = vld [vmem:[#allocation11 + $0xe8] sm:$0xff]
    %v2945 = vld [vmem:[#allocation11 + $0xf0] sm:$0xff]
    %v2946 = vld [vmem:[#allocation11 + $0xf8] sm:$0xff]
    %v2947 = vld [vmem:[#allocation11 + $0x100] sm:$0xff]
    %v2948 = vld [vmem:[#allocation11 + $0x108] sm:$0xff]
    %v2949 = vld [vmem:[#allocation11 + $0x110] sm:$0xff]
    %v2950 = vld [vmem:[#allocation11 + $0x118] sm:$0xff]
    %v2951 = vld [vmem:[#allocation11 + $0x120] sm:$0xff]
    %v2952 = vld [vmem:[#allocation11 + $0x128] sm:$0xff]
    %v2953 = vld [vmem:[#allocation11 + $0x130] sm:$0xff]
    %v2954 = vld [vmem:[#allocation11 + $0x138] sm:$0xff]
    %v2955 = vld [vmem:[#allocation11 + $0x140] sm:$0xff]
    %v2956 = vld [vmem:[#allocation11 + $0x148] sm:$0xff]
    %v2957 = vld [vmem:[#allocation11 + $0x150] sm:$0xff]
    %v2958 = vld [vmem:[#allocation11 + $0x158] sm:$0xff]
    %v2959 = vld [vmem:[#allocation11 + $0x160] sm:$0xff]
    %v2960 = vld [vmem:[#allocation11 + $0x168] sm:$0xff]
    %v2961 = vld [vmem:[#allocation11 + $0x170] sm:$0xff]
    %v2962 = vld [vmem:[#allocation11 + $0x178] sm:$0xff]
    %2963 = vmatprep.subr.mxu0 %v2916
    %2964 = vmatpush1.msra.mxu0 %v2915
    %2965 = vmatprep.subr.mxu0 %v2919
    %2966 = vmatpush1.msra.mxu0 %v2918
    %2967 = vmatprep.subr.mxu0 %v2922
    %2968 = vmatpush1.msra.mxu0 %v2921
    %2969 = vmatprep.subr.mxu0 %v2925
    %2970 = vmatpush1.msra.mxu0 %v2924
    %2971 = vmatprep.subr.mxu0 %v2928
    %2972 = vmatpush1.msra.mxu0 %v2927
    %2973 = vmatprep.subr.mxu0 %v2931
    %2974 = vmatpush1.msra.mxu0 %v2930
    %2975 = vmatprep.subr.mxu0 %v2934
    %2976 = vmatpush1.msra.mxu0 %v2933
    %2977 = vmatprep.subr.mxu0 %v2937
    %2978 = vmatpush1.msra.mxu0 %v2936
    %2979 = vmatprep.subr.mxu0 %v2940
    %2980 = vmatpush1.msra.mxu0 %v2939
    %2981 = vmatprep.subr.mxu0 %v2943
    %2982 = vmatpush1.msra.mxu0 %v2942
    %2983 = vmatprep.subr.mxu0 %v2946
    %2984 = vmatpush1.msra.mxu0 %v2945
    %2985 = vmatprep.subr.mxu0 %v2949
    %2986 = vmatpush1.msra.mxu0 %v2948
    %2987 = vmatprep.subr.mxu0 %v2952
    %2988 = vmatpush1.msra.mxu0 %v2951
    %2989 = vmatprep.subr.mxu0 %v2955
    %2990 = vmatpush1.msra.mxu0 %v2954
    %2991 = vmatprep.subr.mxu0 %v2958
    %2992 = vmatpush1.msra.mxu0 %v2957
    %2993 = vmatprep.subr.mxu0 %v2961
    %2994 = vmatpush1.msra.mxu0 %v2960
    %2995 = vmatprep.subr.mxu0 0.0
    %2996 = vmatpush1.msra.mxu0 0.0
    %2997 = vmatprep.subr.mxu0 0.0
    %2998 = vmatpush1.msra.mxu0 0.0
    %2999 = vmatprep.subr.mxu0 0.0
    %3000 = vmatpush1.msra.mxu0 0.0
    %3001 = vmatprep.subr.mxu0 0.0
    %3002 = vmatpush1.msra.mxu0 0.0
    %3003 = vmatprep.subr.mxu0 0.0
    %3004 = vmatpush1.msra.mxu0 0.0
    %3005 = vmatprep.subr.mxu0 0.0
    %3006 = vmatpush1.msra.mxu0 0.0
    %3007 = vmatprep.subr.mxu0 0.0
    %3008 = vmatpush1.msra.mxu0 0.0
    %3009 = vmatprep.subr.mxu0 0.0
    %3010 = vmatpush1.msra.mxu0 0.0
    %3011 = vmatprep.subr.mxu0 0.0
    %3012 = vmatpush1.msra.mxu0 0.0
    %3013 = vmatprep.subr.mxu0 0.0
    %3014 = vmatpush1.msra.mxu0 0.0
    %3015 = vmatprep.subr.mxu0 0.0
    %3016 = vmatpush1.msra.mxu0 0.0
    %3017 = vmatprep.subr.mxu0 0.0
    %3018 = vmatpush1.msra.mxu0 0.0
    %3019 = vmatprep.subr.mxu0 0.0
    %3020 = vmatpush1.msra.mxu0 0.0
    %3021 = vmatprep.subr.mxu0 0.0
    %3022 = vmatpush1.msra.mxu0 0.0
    %3023 = vmatprep.subr.mxu0 0.0
    %3024 = vmatpush1.msra.mxu0 0.0
    %3025 = vmatprep.subr.mxu0 0.0
    %3026 = vmatpush1.msra.mxu0 0.0
    %3027 = vmatprep.mubr.f32.mxu0 0.0
    %3028 = vmatmul.mubr.f32.gmra.mrb[0].mxu0 %v2903
    %v3029 = vpop.f32.mrb[0].mxu0
    %v3030 = vadd.f32 0.0, %v3029
    %v3031 = vpop.f32.mrb[0].mxu0
    %v3032 = vadd.f32 0.0, %v3031
    %3033 = vdwg.mxu0
    %3034 = vmatprep.subr.mxu0 0.0
    %3035 = vmatpush1.msra.mxu0 %v2917
    %3036 = vmatprep.subr.mxu0 0.0
    %3037 = vmatpush1.msra.mxu0 %v2920
    %3038 = vmatprep.subr.mxu0 0.0
    %3039 = vmatpush1.msra.mxu0 %v2923
    %3040 = vmatprep.subr.mxu0 0.0
    %3041 = vmatpush1.msra.mxu0 %v2926
    %3042 = vmatprep.subr.mxu0 0.0
    %3043 = vmatpush1.msra.mxu0 %v2929
    %3044 = vmatprep.subr.mxu0 0.0
    %3045 = vmatpush1.msra.mxu0 %v2932
    %3046 = vmatprep.subr.mxu0 0.0
    %3047 = vmatpush1.msra.mxu0 %v2935
    %3048 = vmatprep.subr.mxu0 0.0
    %3049 = vmatpush1.msra.mxu0 %v2938
    %3050 = vmatprep.subr.mxu0 0.0
    %3051 = vmatpush1.msra.mxu0 %v2941
    %3052 = vmatprep.subr.mxu0 0.0
    %3053 = vmatpush1.msra.mxu0 %v2944
    %3054 = vmatprep.subr.mxu0 0.0
    %3055 = vmatpush1.msra.mxu0 %v2947
    %3056 = vmatprep.subr.mxu0 0.0
    %3057 = vmatpush1.msra.mxu0 %v2950
    %3058 = vmatprep.subr.mxu0 0.0
    %3059 = vmatpush1.msra.mxu0 %v2953
    %3060 = vmatprep.subr.mxu0 0.0
    %3061 = vmatpush1.msra.mxu0 %v2956
    %3062 = vmatprep.subr.mxu0 0.0
    %3063 = vmatpush1.msra.mxu0 %v2959
    %3064 = vmatprep.subr.mxu0 0.0
    %3065 = vmatpush1.msra.mxu0 %v2962
    %3066 = vmatprep.subr.mxu0 0.0
    %3067 = vmatpush1.msra.mxu0 0.0
    %3068 = vmatprep.subr.mxu0 0.0
    %3069 = vmatpush1.msra.mxu0 0.0
    %3070 = vmatprep.subr.mxu0 0.0
    %3071 = vmatpush1.msra.mxu0 0.0
    %3072 = vmatprep.subr.mxu0 0.0
    %3073 = vmatpush1.msra.mxu0 0.0
    %3074 = vmatprep.subr.mxu0 0.0
    %3075 = vmatpush1.msra.mxu0 0.0
    %3076 = vmatprep.subr.mxu0 0.0
    %3077 = vmatpush1.msra.mxu0 0.0
    %3078 = vmatprep.subr.mxu0 0.0
    %3079 = vmatpush1.msra.mxu0 0.0
    %3080 = vmatprep.subr.mxu0 0.0
    %3081 = vmatpush1.msra.mxu0 0.0
    %3082 = vmatprep.subr.mxu0 0.0
    %3083 = vmatpush1.msra.mxu0 0.0
    %3084 = vmatprep.subr.mxu0 0.0
    %3085 = vmatpush1.msra.mxu0 0.0
    %3086 = vmatprep.subr.mxu0 0.0
    %3087 = vmatpush1.msra.mxu0 0.0
    %3088 = vmatprep.subr.mxu0 0.0
    %3089 = vmatpush1.msra.mxu0 0.0
    %3090 = vmatprep.subr.mxu0 0.0
    %3091 = vmatpush1.msra.mxu0 0.0
    %3092 = vmatprep.subr.mxu0 0.0
    %3093 = vmatpush1.msra.mxu0 0.0
    %3094 = vmatprep.subr.mxu0 0.0
    %3095 = vmatpush1.msra.mxu0 0.0
    %3096 = vmatprep.subr.mxu0 0.0
    %3097 = vmatpush1.msra.mxu0 0.0
    %3098 = vmatprep.mubr.f32.mxu0 0.0
    %3099 = vmatmul.mubr.f32.gmra.mrb[0].mxu0 %v2903
    %v3100 = vpop.f32.mrb[0].mxu0
    %v3101 = vadd.f32 0.0, %v3100
    %v3102 = vpop.f32.mrb[0].mxu0
    %3103 = vdwg.mxu0
    %v3104 = vld [vmem:[#allocation12] sm:$0xff]
    %v3105 = vld [vmem:[#allocation12 + $0x8] sm:$0xff]
    %v3106 = vld [vmem:[#allocation12 + $0x10] sm:$0xff]
    %v3107 = vld [vmem:[#allocation12 + $0x18] sm:$0xff]
    %v3108 = vld [vmem:[#allocation12 + $0x20] sm:$0xff]
    %v3109 = vld [vmem:[#allocation12 + $0x28] sm:$0xff]
    %v3110 = vld [vmem:[#allocation12 + $0x30] sm:$0xff]
    %v3111 = vld [vmem:[#allocation12 + $0x38] sm:$0xff]
    %v3112 = vld [vmem:[#allocation12 + $0x40] sm:$0xff]
    %v3113 = vld [vmem:[#allocation12 + $0x48] sm:$0xff]
    %v3114 = vld [vmem:[#allocation12 + $0x50] sm:$0xff]
    %v3115 = vld [vmem:[#allocation12 + $0x58] sm:$0xff]
    %v3116 = vld [vmem:[#allocation12 + $0x60] sm:$0xff]
    %v3117 = vld [vmem:[#allocation12 + $0x68] sm:$0xff]
    %v3118 = vld [vmem:[#allocation12 + $0x70] sm:$0xff]
    %v3119 = vld [vmem:[#allocation12 + $0x78] sm:$0xff]
    %v3120 = vld [vmem:[#allocation12 + $0x80] sm:$0xff]
    %v3121 = vld [vmem:[#allocation12 + $0x88] sm:$0xff]
    %v3122 = vld [vmem:[#allocation12 + $0x90] sm:$0xff]
    %v3123 = vld [vmem:[#allocation12 + $0x98] sm:$0xff]
    %v3124 = vld [vmem:[#allocation12 + $0xa0] sm:$0xff]
    %v3125 = vld [vmem:[#allocation12 + $0xa8] sm:$0xff]
    %v3126 = vld [vmem:[#allocation12 + $0xb0] sm:$0xff]
    %v3127 = vld [vmem:[#allocation12 + $0xb8] sm:$0xff]
    %v3128 = vld [vmem:[#allocation12 + $0xc0] sm:$0xff]
    %v3129 = vld [vmem:[#allocation12 + $0xc8] sm:$0xff]
    %v3130 = vld [vmem:[#allocation12 + $0xd0] sm:$0xff]
    %v3131 = vld [vmem:[#allocation12 + $0xd8] sm:$0xff]
    %v3132 = vld [vmem:[#allocation12 + $0xe0] sm:$0xff]
    %v3133 = vld [vmem:[#allocation12 + $0xe8] sm:$0xff]
    %v3134 = vld [vmem:[#allocation12 + $0xf0] sm:$0xff]
    %v3135 = vld [vmem:[#allocation12 + $0xf8] sm:$0xff]
    %v3136 = vld [vmem:[#allocation12 + $0x100] sm:$0xff]
    %v3137 = vld [vmem:[#allocation12 + $0x108] sm:$0xff]
    %v3138 = vld [vmem:[#allocation12 + $0x110] sm:$0xff]
    %v3139 = vld [vmem:[#allocation12 + $0x118] sm:$0xff]
    %v3140 = vld [vmem:[#allocation12 + $0x120] sm:$0xff]
    %v3141 = vld [vmem:[#allocation12 + $0x128] sm:$0xff]
    %v3142 = vld [vmem:[#allocation12 + $0x130] sm:$0xff]
    %v3143 = vld [vmem:[#allocation12 + $0x138] sm:$0xff]
    %v3144 = vld [vmem:[#allocation12 + $0x140] sm:$0xff]
    %v3145 = vld [vmem:[#allocation12 + $0x148] sm:$0xff]
    %v3146 = vld [vmem:[#allocation12 + $0x150] sm:$0xff]
    %v3147 = vld [vmem:[#allocation12 + $0x158] sm:$0xff]
    %v3148 = vld [vmem:[#allocation12 + $0x160] sm:$0xff]
    %v3149 = vld [vmem:[#allocation12 + $0x168] sm:$0xff]
    %v3150 = vld [vmem:[#allocation12 + $0x170] sm:$0xff]
    %v3151 = vld [vmem:[#allocation12 + $0x178] sm:$0xff]
    %3152 = vmatprep.subr.mxu0 %v3105
    %3153 = vmatpush1.msra.mxu0 %v3104
    %3154 = vmatprep.subr.mxu0 %v3108
    %3155 = vmatpush1.msra.mxu0 %v3107
    %3156 = vmatprep.subr.mxu0 %v3111
    %3157 = vmatpush1.msra.mxu0 %v3110
    %3158 = vmatprep.subr.mxu0 %v3114
    %3159 = vmatpush1.msra.mxu0 %v3113
    %3160 = vmatprep.subr.mxu0 %v3117
    %3161 = vmatpush1.msra.mxu0 %v3116
    %3162 = vmatprep.subr.mxu0 %v3120
    %3163 = vmatpush1.msra.mxu0 %v3119
    %3164 = vmatprep.subr.mxu0 %v3123
    %3165 = vmatpush1.msra.mxu0 %v3122
    %3166 = vmatprep.subr.mxu0 %v3126
    %3167 = vmatpush1.msra.mxu0 %v3125
    %3168 = vmatprep.subr.mxu0 %v3129
    %3169 = vmatpush1.msra.mxu0 %v3128
    %3170 = vmatprep.subr.mxu0 %v3132
    %3171 = vmatpush1.msra.mxu0 %v3131
    %3172 = vmatprep.subr.mxu0 %v3135
    %3173 = vmatpush1.msra.mxu0 %v3134
    %3174 = vmatprep.subr.mxu0 %v3138
    %3175 = vmatpush1.msra.mxu0 %v3137
    %3176 = vmatprep.subr.mxu0 %v3141
    %3177 = vmatpush1.msra.mxu0 %v3140
    %3178 = vmatprep.subr.mxu0 %v3144
    %3179 = vmatpush1.msra.mxu0 %v3143
    %3180 = vmatprep.subr.mxu0 %v3147
    %3181 = vmatpush1.msra.mxu0 %v3146
    %3182 = vmatprep.subr.mxu0 %v3150
    %3183 = vmatpush1.msra.mxu0 %v3149
    %3184 = vmatprep.subr.mxu0 0.0
    %3185 = vmatpush1.msra.mxu0 0.0
    %3186 = vmatprep.subr.mxu0 0.0
    %3187 = vmatpush1.msra.mxu0 0.0
    %3188 = vmatprep.subr.mxu0 0.0
    %3189 = vmatpush1.msra.mxu0 0.0
    %3190 = vmatprep.subr.mxu0 0.0
    %3191 = vmatpush1.msra.mxu0 0.0
    %3192 = vmatprep.subr.mxu0 0.0
    %3193 = vmatpush1.msra.mxu0 0.0
    %3194 = vmatprep.subr.mxu0 0.0
    %3195 = vmatpush1.msra.mxu0 0.0
    %3196 = vmatprep.subr.mxu0 0.0
    %3197 = vmatpush1.msra.mxu0 0.0
    %3198 = vmatprep.subr.mxu0 0.0
    %3199 = vmatpush1.msra.mxu0 0.0
    %3200 = vmatprep.subr.mxu0 0.0
    %3201 = vmatpush1.msra.mxu0 0.0
    %3202 = vmatprep.subr.mxu0 0.0
    %3203 = vmatpush1.msra.mxu0 0.0
    %3204 = vmatprep.subr.mxu0 0.0
    %3205 = vmatpush1.msra.mxu0 0.0
    %3206 = vmatprep.subr.mxu0 0.0
    %3207 = vmatpush1.msra.mxu0 0.0
    %3208 = vmatprep.subr.mxu0 0.0
    %3209 = vmatpush1.msra.mxu0 0.0
    %3210 = vmatprep.subr.mxu0 0.0
    %3211 = vmatpush1.msra.mxu0 0.0
    %3212 = vmatprep.subr.mxu0 0.0
    %3213 = vmatpush1.msra.mxu0 0.0
    %3214 = vmatprep.subr.mxu0 0.0
    %3215 = vmatpush1.msra.mxu0 0.0
    %3216 = vmatprep.mubr.f32.mxu0 0.0
    %3217 = vmatmul.mubr.f32.gmra.mrb[0].mxu0 %v2904
    %v3218 = vpop.f32.mrb[0].mxu0
    %v3219 = vadd.f32 0.0, %v3218
    %v3220 = vpop.f32.mrb[0].mxu0
    %v3221 = vadd.f32 0.0, %v3220
    %3222 = vdwg.mxu0
    %3223 = vmatprep.subr.mxu0 0.0
    %3224 = vmatpush1.msra.mxu0 %v3106
    %3225 = vmatprep.subr.mxu0 0.0
    %3226 = vmatpush1.msra.mxu0 %v3109
    %3227 = vmatprep.subr.mxu0 0.0
    %3228 = vmatpush1.msra.mxu0 %v3112
    %3229 = vmatprep.subr.mxu0 0.0
    %3230 = vmatpush1.msra.mxu0 %v3115
    %3231 = vmatprep.subr.mxu0 0.0
    %3232 = vmatpush1.msra.mxu0 %v3118
    %3233 = vmatprep.subr.mxu0 0.0
    %3234 = vmatpush1.msra.mxu0 %v3121
    %3235 = vmatprep.subr.mxu0 0.0
    %3236 = vmatpush1.msra.mxu0 %v3124
    %3237 = vmatprep.subr.mxu0 0.0
    %3238 = vmatpush1.msra.mxu0 %v3127
    %3239 = vmatprep.subr.mxu0 0.0
    %3240 = vmatpush1.msra.mxu0 %v3130
    %3241 = vmatprep.subr.mxu0 0.0
    %3242 = vmatpush1.msra.mxu0 %v3133
    %3243 = vmatprep.subr.mxu0 0.0
    %3244 = vmatpush1.msra.mxu0 %v3136
    %3245 = vmatprep.subr.mxu0 0.0
    %3246 = vmatpush1.msra.mxu0 %v3139
    %3247 = vmatprep.subr.mxu0 0.0
    %3248 = vmatpush1.msra.mxu0 %v3142
    %3249 = vmatprep.subr.mxu0 0.0
    %3250 = vmatpush1.msra.mxu0 %v3145
    %3251 = vmatprep.subr.mxu0 0.0
    %3252 = vmatpush1.msra.mxu0 %v3148
    %3253 = vmatprep.subr.mxu0 0.0
    %3254 = vmatpush1.msra.mxu0 %v3151
    %3255 = vmatprep.subr.mxu0 0.0
    %3256 = vmatpush1.msra.mxu0 0.0
    %3257 = vmatprep.subr.mxu0 0.0
    %3258 = vmatpush1.msra.mxu0 0.0
    %3259 = vmatprep.subr.mxu0 0.0
    %3260 = vmatpush1.msra.mxu0 0.0
    %3261 = vmatprep.subr.mxu0 0.0
    %3262 = vmatpush1.msra.mxu0 0.0
    %3263 = vmatprep.subr.mxu0 0.0
    %3264 = vmatpush1.msra.mxu0 0.0
    %3265 = vmatprep.subr.mxu0 0.0
    %3266 = vmatpush1.msra.mxu0 0.0
    %3267 = vmatprep.subr.mxu0 0.0
    %3268 = vmatpush1.msra.mxu0 0.0
    %3269 = vmatprep.subr.mxu0 0.0
    %3270 = vmatpush1.msra.mxu0 0.0
    %3271 = vmatprep.subr.mxu0 0.0
    %3272 = vmatpush1.msra.mxu0 0.0
    %3273 = vmatprep.subr.mxu0 0.0
    %3274 = vmatpush1.msra.mxu0 0.0
    %3275 = vmatprep.subr.mxu0 0.0
    %3276 = vmatpush1.msra.mxu0 0.0
    %3277 = vmatprep.subr.mxu0 0.0
    %3278 = vmatpush1.msra.mxu0 0.0
    %3279 = vmatprep.subr.mxu0 0.0
    %3280 = vmatpush1.msra.mxu0 0.0
    %3281 = vmatprep.subr.mxu0 0.0
    %3282 = vmatpush1.msra.mxu0 0.0
    %3283 = vmatprep.subr.mxu0 0.0
    %3284 = vmatpush1.msra.mxu0 0.0
    %3285 = vmatprep.subr.mxu0 0.0
    %3286 = vmatpush1.msra.mxu0 0.0
    %3287 = vmatprep.mubr.f32.mxu0 0.0
    %3288 = vmatmul.mubr.f32.gmra.mrb[0].mxu0 %v2904
    %v3289 = vpop.f32.mrb[0].mxu0
    %v3290 = vadd.f32 0.0, %v3289
    %v3291 = vpop.f32.mrb[0].mxu0
    %3292 = vdwg.mxu0
    %v3293 = vadd.f32 %v2909, %v3030
    %v3294 = vxor.u32 %v3293, 2147483648
    %v3295 = vmul.f32 %v3294, 1.442695
    %v3296 = vpow.pop %v3295
    %v3297 = vadd.f32 %v3296, 1.0
    %v3298 = vrcp.pop %v3297
    %v3299 = vmul.f32 1.0, %v3298
    %v3300 = vadd.f32 %v2910, %v3032
    %v3301 = vxor.u32 %v3300, 2147483648
    %v3302 = vmul.f32 %v3301, 1.442695
    %v3303 = vpow.pop %v3302
    %v3304 = vadd.f32 %v3303, 1.0
    %v3305 = vrcp.pop %v3304
    %v3306 = vmul.f32 1.0, %v3305
    %v3307 = vadd.f32 %v3101, %v1093
    %v3308 = vmul.f32 %v3299, %v3307
    %v3309 = vadd.f32 %v2911, %v3308
    %v3310 = vtanh.pop %v3309
    %v3311 = vsub.f32 %v2903, %v3310
    %v3312 = vmul.f32 %v3306, %v3311
    %v3313 = vadd.f32 %v3310, %v3312
    %v3314 = vadd.f32 %v2912, %v3219
    %v3315 = vxor.u32 %v3314, 2147483648
    %v3316 = vmul.f32 %v3315, 1.442695
    %v3317 = vpow.pop %v3316
    %v3318 = vadd.f32 %v3317, 1.0
    %v3319 = vrcp.pop %v3318
    %v3320 = vmul.f32 1.0, %v3319
    %v3321 = vadd.f32 %v2913, %v3221
    %v3322 = vxor.u32 %v3321, 2147483648
    %v3323 = vmul.f32 %v3322, 1.442695
    %v3324 = vpow.pop %v3323
    %v3325 = vadd.f32 %v3324, 1.0
    %v3326 = vrcp.pop %v3325
    %v3327 = vmul.f32 1.0, %v3326
    %v3328 = vadd.f32 %v3290, %v1120
    %v3329 = vmul.f32 %v3320, %v3328
    %v3330 = vadd.f32 %v2914, %v3329
    %v3331 = vtanh.pop %v3330
    %v3332 = vsub.f32 %v2904, %v3331
    %v3333 = vmul.f32 %v3327, %v3332
    %v3334 = vadd.f32 %v3331, %v3333
    %v3335 = vsel %vm2027, %v3313, %v2903
    %v3336 = vsel %vm2021, %v3334, %v2904
    %v3337 = vsel %vm2027, %v3313, 0.0
    %3338 = vst [vmem:[#allocation4 + $0x28] sm:$0xff] %v3337
    %v3339 = vsel %vm2021, %v3334, 0.0
    %3340 = vst [vmem:[#allocation5 + $0x10] sm:$0xff] %v3339
    %v3341 = vld [vmem:[#allocation2 + $0x90] sm:$0xff]
    %v3342 = vld [vmem:[#allocation2 + $0x98] sm:$0xff]
    %v3343 = vld [vmem:[#allocation2 + $0xa0] sm:$0xff]
    %v3344 = vld [vmem:[#allocation3 + $0x18] sm:$0xff]
    %v3345 = vld [vmem:[#allocation3 + $0x20] sm:$0xff]
    %v3346 = vld [vmem:[#allocation3 + $0x28] sm:$0xff]
    %v3347 = vld [vmem:[#allocation11] sm:$0xff]
    %v3348 = vld [vmem:[#allocation11 + $0x8] sm:$0xff]
    %v3349 = vld [vmem:[#allocation11 + $0x10] sm:$0xff]
    %v3350 = vld [vmem:[#allocation11 + $0x18] sm:$0xff]
    %v3351 = vld [vmem:[#allocation11 + $0x20] sm:$0xff]
    %v3352 = vld [vmem:[#allocation11 + $0x28] sm:$0xff]
    %v3353 = vld [vmem:[#allocation11 + $0x30] sm:$0xff]
    %v3354 = vld [vmem:[#allocation11 + $0x38] sm:$0xff]
    %v3355 = vld [vmem:[#allocation11 + $0x40] sm:$0xff]
    %v3356 = vld [vmem:[#allocation11 + $0x48] sm:$0xff]
    %v3357 = vld [vmem:[#allocation11 + $0x50] sm:$0xff]
    %v3358 = vld [vmem:[#allocation11 + $0x58] sm:$0xff]
    %v3359 = vld [vmem:[#allocation11 + $0x60] sm:$0xff]
    %v3360 = vld [vmem:[#allocation11 + $0x68] sm:$0xff]
    %v3361 = vld [vmem:[#allocation11 + $0x70] sm:$0xff]
    %v3362 = vld [vmem:[#allocation11 + $0x78] sm:$0xff]
    %v3363 = vld [vmem:[#allocation11 + $0x80] sm:$0xff]
    %v3364 = vld [vmem:[#allocation11 + $0x88] sm:$0xff]
    %v3365 = vld [vmem:[#allocation11 + $0x90] sm:$0xff]
    %v3366 = vld [vmem:[#allocation11 + $0x98] sm:$0xff]
    %v3367 = vld [vmem:[#allocation11 + $0xa0] sm:$0xff]
    %v3368 = vld [vmem:[#allocation11 + $0xa8] sm:$0xff]
    %v3369 = vld [vmem:[#allocation11 + $0xb0] sm:$0xff]
    %v3370 = vld [vmem:[#allocation11 + $0xb8] sm:$0xff]
    %v3371 = vld [vmem:[#allocation11 + $0xc0] sm:$0xff]
    %v3372 = vld [vmem:[#allocation11 + $0xc8] sm:$0xff]
    %v3373 = vld [vmem:[#allocation11 + $0xd0] sm:$0xff]
    %v3374 = vld [vmem:[#allocation11 + $0xd8] sm:$0xff]
    %v3375 = vld [vmem:[#allocation11 + $0xe0] sm:$0xff]
    %v3376 = vld [vmem:[#allocation11 + $0xe8] sm:$0xff]
    %v3377 = vld [vmem:[#allocation11 + $0xf0] sm:$0xff]
    %v3378 = vld [vmem:[#allocation11 + $0xf8] sm:$0xff]
    %v3379 = vld [vmem:[#allocation11 + $0x100] sm:$0xff]
    %v3380 = vld [vmem:[#allocation11 + $0x108] sm:$0xff]
    %v3381 = vld [vmem:[#allocation11 + $0x110] sm:$0xff]
    %v3382 = vld [vmem:[#allocation11 + $0x118] sm:$0xff]
    %v3383 = vld [vmem:[#allocation11 + $0x120] sm:$0xff]
    %v3384 = vld [vmem:[#allocation11 + $0x128] sm:$0xff]
    %v3385 = vld [vmem:[#allocation11 + $0x130] sm:$0xff]
    %v3386 = vld [vmem:[#allocation11 + $0x138] sm:$0xff]
    %v3387 = vld [vmem:[#allocation11 + $0x140] sm:$0xff]
    %v3388 = vld [vmem:[#allocation11 + $0x148] sm:$0xff]
    %v3389 = vld [vmem:[#allocation11 + $0x150] sm:$0xff]
    %v3390 = vld [vmem:[#allocation11 + $0x158] sm:$0xff]
    %v3391 = vld [vmem:[#allocation11 + $0x160] sm:$0xff]
    %v3392 = vld [vmem:[#allocation11 + $0x168] sm:$0xff]
    %v3393 = vld [vmem:[#allocation11 + $0x170] sm:$0xff]
    %v3394 = vld [vmem:[#allocation11 + $0x178] sm:$0xff]
    %3395 = vmatprep.subr.mxu0 %v3348
    %3396 = vmatpush1.msra.mxu0 %v3347
    %3397 = vmatprep.subr.mxu0 %v3351
    %3398 = vmatpush1.msra.mxu0 %v3350
    %3399 = vmatprep.subr.mxu0 %v3354
    %3400 = vmatpush1.msra.mxu0 %v3353
    %3401 = vmatprep.subr.mxu0 %v3357
    %3402 = vmatpush1.msra.mxu0 %v3356
    %3403 = vmatprep.subr.mxu0 %v3360
    %3404 = vmatpush1.msra.mxu0 %v3359
    %3405 = vmatprep.subr.mxu0 %v3363
    %3406 = vmatpush1.msra.mxu0 %v3362
    %3407 = vmatprep.subr.mxu0 %v3366
    %3408 = vmatpush1.msra.mxu0 %v3365
    %3409 = vmatprep.subr.mxu0 %v3369
    %3410 = vmatpush1.msra.mxu0 %v3368
    %3411 = vmatprep.subr.mxu0 %v3372
    %3412 = vmatpush1.msra.mxu0 %v3371
    %3413 = vmatprep.subr.mxu0 %v3375
    %3414 = vmatpush1.msra.mxu0 %v3374
    %3415 = vmatprep.subr.mxu0 %v3378
    %3416 = vmatpush1.msra.mxu0 %v3377
    %3417 = vmatprep.subr.mxu0 %v3381
    %3418 = vmatpush1.msra.mxu0 %v3380
    %3419 = vmatprep.subr.mxu0 %v3384
    %3420 = vmatpush1.msra.mxu0 %v3383
    %3421 = vmatprep.subr.mxu0 %v3387
    %3422 = vmatpush1.msra.mxu0 %v3386
    %3423 = vmatprep.subr.mxu0 %v3390
    %3424 = vmatpush1.msra.mxu0 %v3389
    %3425 = vmatprep.subr.mxu0 %v3393
    %3426 = vmatpush1.msra.mxu0 %v3392
    %3427 = vmatprep.subr.mxu0 0.0
    %3428 = vmatpush1.msra.mxu0 0.0
    %3429 = vmatprep.subr.mxu0 0.0
    %3430 = vmatpush1.msra.mxu0 0.0
    %3431 = vmatprep.subr.mxu0 0.0
    %3432 = vmatpush1.msra.mxu0 0.0
    %3433 = vmatprep.subr.mxu0 0.0
    %3434 = vmatpush1.msra.mxu0 0.0
    %3435 = vmatprep.subr.mxu0 0.0
    %3436 = vmatpush1.msra.mxu0 0.0
    %3437 = vmatprep.subr.mxu0 0.0
    %3438 = vmatpush1.msra.mxu0 0.0
    %3439 = vmatprep.subr.mxu0 0.0
    %3440 = vmatpush1.msra.mxu0 0.0
    %3441 = vmatprep.subr.mxu0 0.0
    %3442 = vmatpush1.msra.mxu0 0.0
    %3443 = vmatprep.subr.mxu0 0.0
    %3444 = vmatpush1.msra.mxu0 0.0
    %3445 = vmatprep.subr.mxu0 0.0
    %3446 = vmatpush1.msra.mxu0 0.0
    %3447 = vmatprep.subr.mxu0 0.0
    %3448 = vmatpush1.msra.mxu0 0.0
    %3449 = vmatprep.subr.mxu0 0.0
    %3450 = vmatpush1.msra.mxu0 0.0
    %3451 = vmatprep.subr.mxu0 0.0
    %3452 = vmatpush1.msra.mxu0 0.0
    %3453 = vmatprep.subr.mxu0 0.0
    %3454 = vmatpush1.msra.mxu0 0.0
    %3455 = vmatprep.subr.mxu0 0.0
    %3456 = vmatpush1.msra.mxu0 0.0
    %3457 = vmatprep.subr.mxu0 0.0
    %3458 = vmatpush1.msra.mxu0 0.0
    %3459 = vmatprep.mubr.f32.mxu0 0.0
    %3460 = vmatmul.mubr.f32.gmra.mrb[0].mxu0 %v3335
    %v3461 = vpop.f32.mrb[0].mxu0
    %v3462 = vadd.f32 0.0, %v3461
    %v3463 = vpop.f32.mrb[0].mxu0
    %v3464 = vadd.f32 0.0, %v3463
    %3465 = vdwg.mxu0
    %3466 = vmatprep.subr.mxu0 0.0
    %3467 = vmatpush1.msra.mxu0 %v3349
    %3468 = vmatprep.subr.mxu0 0.0
    %3469 = vmatpush1.msra.mxu0 %v3352
    %3470 = vmatprep.subr.mxu0 0.0
    %3471 = vmatpush1.msra.mxu0 %v3355
    %3472 = vmatprep.subr.mxu0 0.0
    %3473 = vmatpush1.msra.mxu0 %v3358
    %3474 = vmatprep.subr.mxu0 0.0
    %3475 = vmatpush1.msra.mxu0 %v3361
    %3476 = vmatprep.subr.mxu0 0.0
    %3477 = vmatpush1.msra.mxu0 %v3364
    %3478 = vmatprep.subr.mxu0 0.0
    %3479 = vmatpush1.msra.mxu0 %v3367
    %3480 = vmatprep.subr.mxu0 0.0
    %3481 = vmatpush1.msra.mxu0 %v3370
    %3482 = vmatprep.subr.mxu0 0.0
    %3483 = vmatpush1.msra.mxu0 %v3373
    %3484 = vmatprep.subr.mxu0 0.0
    %3485 = vmatpush1.msra.mxu0 %v3376
    %3486 = vmatprep.subr.mxu0 0.0
    %3487 = vmatpush1.msra.mxu0 %v3379
    %3488 = vmatprep.subr.mxu0 0.0
    %3489 = vmatpush1.msra.mxu0 %v3382
    %3490 = vmatprep.subr.mxu0 0.0
    %3491 = vmatpush1.msra.mxu0 %v3385
    %3492 = vmatprep.subr.mxu0 0.0
    %3493 = vmatpush1.msra.mxu0 %v3388
    %3494 = vmatprep.subr.mxu0 0.0
    %3495 = vmatpush1.msra.mxu0 %v3391
    %3496 = vmatprep.subr.mxu0 0.0
    %3497 = vmatpush1.msra.mxu0 %v3394
    %3498 = vmatprep.subr.mxu0 0.0
    %3499 = vmatpush1.msra.mxu0 0.0
    %3500 = vmatprep.subr.mxu0 0.0
    %3501 = vmatpush1.msra.mxu0 0.0
    %3502 = vmatprep.subr.mxu0 0.0
    %3503 = vmatpush1.msra.mxu0 0.0
    %3504 = vmatprep.subr.mxu0 0.0
    %3505 = vmatpush1.msra.mxu0 0.0
    %3506 = vmatprep.subr.mxu0 0.0
    %3507 = vmatpush1.msra.mxu0 0.0
    %3508 = vmatprep.subr.mxu0 0.0
    %3509 = vmatpush1.msra.mxu0 0.0
    %3510 = vmatprep.subr.mxu0 0.0
    %3511 = vmatpush1.msra.mxu0 0.0
    %3512 = vmatprep.subr.mxu0 0.0
    %3513 = vmatpush1.msra.mxu0 0.0
    %3514 = vmatprep.subr.mxu0 0.0
    %3515 = vmatpush1.msra.mxu0 0.0
    %3516 = vmatprep.subr.mxu0 0.0
    %3517 = vmatpush1.msra.mxu0 0.0
    %3518 = vmatprep.subr.mxu0 0.0
    %3519 = vmatpush1.msra.mxu0 0.0
    %3520 = vmatprep.subr.mxu0 0.0
    %3521 = vmatpush1.msra.mxu0 0.0
    %3522 = vmatprep.subr.mxu0 0.0
    %3523 = vmatpush1.msra.mxu0 0.0
    %3524 = vmatprep.subr.mxu0 0.0
    %3525 = vmatpush1.msra.mxu0 0.0
    %3526 = vmatprep.subr.mxu0 0.0
    %3527 = vmatpush1.msra.mxu0 0.0
    %3528 = vmatprep.subr.mxu0 0.0
    %3529 = vmatpush1.msra.mxu0 0.0
    %3530 = vmatprep.mubr.f32.mxu0 0.0
    %3531 = vmatmul.mubr.f32.gmra.mrb[0].mxu0 %v3335
    %v3532 = vpop.f32.mrb[0].mxu0
    %v3533 = vadd.f32 0.0, %v3532
    %v3534 = vpop.f32.mrb[0].mxu0
    %3535 = vdwg.mxu0
    %v3536 = vld [vmem:[#allocation12] sm:$0xff]
    %v3537 = vld [vmem:[#allocation12 + $0x8] sm:$0xff]
    %v3538 = vld [vmem:[#allocation12 + $0x10] sm:$0xff]
    %v3539 = vld [vmem:[#allocation12 + $0x18] sm:$0xff]
    %v3540 = vld [vmem:[#allocation12 + $0x20] sm:$0xff]
    %v3541 = vld [vmem:[#allocation12 + $0x28] sm:$0xff]
    %v3542 = vld [vmem:[#allocation12 + $0x30] sm:$0xff]
    %v3543 = vld [vmem:[#allocation12 + $0x38] sm:$0xff]
    %v3544 = vld [vmem:[#allocation12 + $0x40] sm:$0xff]
    %v3545 = vld [vmem:[#allocation12 + $0x48] sm:$0xff]
    %v3546 = vld [vmem:[#allocation12 + $0x50] sm:$0xff]
    %v3547 = vld [vmem:[#allocation12 + $0x58] sm:$0xff]
    %v3548 = vld [vmem:[#allocation12 + $0x60] sm:$0xff]
    %v3549 = vld [vmem:[#allocation12 + $0x68] sm:$0xff]
    %v3550 = vld [vmem:[#allocation12 + $0x70] sm:$0xff]
    %v3551 = vld [vmem:[#allocation12 + $0x78] sm:$0xff]
    %v3552 = vld [vmem:[#allocation12 + $0x80] sm:$0xff]
    %v3553 = vld [vmem:[#allocation12 + $0x88] sm:$0xff]
    %v3554 = vld [vmem:[#allocation12 + $0x90] sm:$0xff]
    %v3555 = vld [vmem:[#allocation12 + $0x98] sm:$0xff]
    %v3556 = vld [vmem:[#allocation12 + $0xa0] sm:$0xff]
    %v3557 = vld [vmem:[#allocation12 + $0xa8] sm:$0xff]
    %v3558 = vld [vmem:[#allocation12 + $0xb0] sm:$0xff]
    %v3559 = vld [vmem:[#allocation12 + $0xb8] sm:$0xff]
    %v3560 = vld [vmem:[#allocation12 + $0xc0] sm:$0xff]
    %v3561 = vld [vmem:[#allocation12 + $0xc8] sm:$0xff]
    %v3562 = vld [vmem:[#allocation12 + $0xd0] sm:$0xff]
    %v3563 = vld [vmem:[#allocation12 + $0xd8] sm:$0xff]
    %v3564 = vld [vmem:[#allocation12 + $0xe0] sm:$0xff]
    %v3565 = vld [vmem:[#allocation12 + $0xe8] sm:$0xff]
    %v3566 = vld [vmem:[#allocation12 + $0xf0] sm:$0xff]
    %v3567 = vld [vmem:[#allocation12 + $0xf8] sm:$0xff]
    %v3568 = vld [vmem:[#allocation12 + $0x100] sm:$0xff]
    %v3569 = vld [vmem:[#allocation12 + $0x108] sm:$0xff]
    %v3570 = vld [vmem:[#allocation12 + $0x110] sm:$0xff]
    %v3571 = vld [vmem:[#allocation12 + $0x118] sm:$0xff]
    %v3572 = vld [vmem:[#allocation12 + $0x120] sm:$0xff]
    %v3573 = vld [vmem:[#allocation12 + $0x128] sm:$0xff]
    %v3574 = vld [vmem:[#allocation12 + $0x130] sm:$0xff]
    %v3575 = vld [vmem:[#allocation12 + $0x138] sm:$0xff]
    %v3576 = vld [vmem:[#allocation12 + $0x140] sm:$0xff]
    %v3577 = vld [vmem:[#allocation12 + $0x148] sm:$0xff]
    %v3578 = vld [vmem:[#allocation12 + $0x150] sm:$0xff]
    %v3579 = vld [vmem:[#allocation12 + $0x158] sm:$0xff]
    %v3580 = vld [vmem:[#allocation12 + $0x160] sm:$0xff]
    %v3581 = vld [vmem:[#allocation12 + $0x168] sm:$0xff]
    %v3582 = vld [vmem:[#allocation12 + $0x170] sm:$0xff]
    %v3583 = vld [vmem:[#allocation12 + $0x178] sm:$0xff]
    %3584 = vmatprep.subr.mxu0 %v3537
    %3585 = vmatpush1.msra.mxu0 %v3536
    %3586 = vmatprep.subr.mxu0 %v3540
    %3587 = vmatpush1.msra.mxu0 %v3539
    %3588 = vmatprep.subr.mxu0 %v3543
    %3589 = vmatpush1.msra.mxu0 %v3542
    %3590 = vmatprep.subr.mxu0 %v3546
    %3591 = vmatpush1.msra.mxu0 %v3545
    %3592 = vmatprep.subr.mxu0 %v3549
    %3593 = vmatpush1.msra.mxu0 %v3548
    %3594 = vmatprep.subr.mxu0 %v3552
    %3595 = vmatpush1.msra.mxu0 %v3551
    %3596 = vmatprep.subr.mxu0 %v3555
    %3597 = vmatpush1.msra.mxu0 %v3554
    %3598 = vmatprep.subr.mxu0 %v3558
    %3599 = vmatpush1.msra.mxu0 %v3557
    %3600 = vmatprep.subr.mxu0 %v3561
    %3601 = vmatpush1.msra.mxu0 %v3560
    %3602 = vmatprep.subr.mxu0 %v3564
    %3603 = vmatpush1.msra.mxu0 %v3563
    %3604 = vmatprep.subr.mxu0 %v3567
    %3605 = vmatpush1.msra.mxu0 %v3566
    %3606 = vmatprep.subr.mxu0 %v3570
    %3607 = vmatpush1.msra.mxu0 %v3569
    %3608 = vmatprep.subr.mxu0 %v3573
    %3609 = vmatpush1.msra.mxu0 %v3572
    %3610 = vmatprep.subr.mxu0 %v3576
    %3611 = vmatpush1.msra.mxu0 %v3575
    %3612 = vmatprep.subr.mxu0 %v3579
    %3613 = vmatpush1.msra.mxu0 %v3578
    %3614 = vmatprep.subr.mxu0 %v3582
    %3615 = vmatpush1.msra.mxu0 %v3581
    %3616 = vmatprep.subr.mxu0 0.0
    %3617 = vmatpush1.msra.mxu0 0.0
    %3618 = vmatprep.subr.mxu0 0.0
    %3619 = vmatpush1.msra.mxu0 0.0
    %3620 = vmatprep.subr.mxu0 0.0
    %3621 = vmatpush1.msra.mxu0 0.0
    %3622 = vmatprep.subr.mxu0 0.0
    %3623 = vmatpush1.msra.mxu0 0.0
    %3624 = vmatprep.subr.mxu0 0.0
    %3625 = vmatpush1.msra.mxu0 0.0
    %3626 = vmatprep.subr.mxu0 0.0
    %3627 = vmatpush1.msra.mxu0 0.0
    %3628 = vmatprep.subr.mxu0 0.0
    %3629 = vmatpush1.msra.mxu0 0.0
    %3630 = vmatprep.subr.mxu0 0.0
    %3631 = vmatpush1.msra.mxu0 0.0
    %3632 = vmatprep.subr.mxu0 0.0
    %3633 = vmatpush1.msra.mxu0 0.0
    %3634 = vmatprep.subr.mxu0 0.0
    %3635 = vmatpush1.msra.mxu0 0.0
    %3636 = vmatprep.subr.mxu0 0.0
    %3637 = vmatpush1.msra.mxu0 0.0
    %3638 = vmatprep.subr.mxu0 0.0
    %3639 = vmatpush1.msra.mxu0 0.0
    %3640 = vmatprep.subr.mxu0 0.0
    %3641 = vmatpush1.msra.mxu0 0.0
    %3642 = vmatprep.subr.mxu0 0.0
    %3643 = vmatpush1.msra.mxu0 0.0
    %3644 = vmatprep.subr.mxu0 0.0
    %3645 = vmatpush1.msra.mxu0 0.0
    %3646 = vmatprep.subr.mxu0 0.0
    %3647 = vmatpush1.msra.mxu0 0.0
    %3648 = vmatprep.mubr.f32.mxu0 0.0
    %3649 = vmatmul.mubr.f32.gmra.mrb[0].mxu0 %v3336
    %v3650 = vpop.f32.mrb[0].mxu0
    %v3651 = vadd.f32 0.0, %v3650
    %v3652 = vpop.f32.mrb[0].mxu0
    %v3653 = vadd.f32 0.0, %v3652
    %3654 = vdwg.mxu0
    %3655 = vmatprep.subr.mxu0 0.0
    %3656 = vmatpush1.msra.mxu0 %v3538
    %3657 = vmatprep.subr.mxu0 0.0
    %3658 = vmatpush1.msra.mxu0 %v3541
    %3659 = vmatprep.subr.mxu0 0.0
    %3660 = vmatpush1.msra.mxu0 %v3544
    %3661 = vmatprep.subr.mxu0 0.0
    %3662 = vmatpush1.msra.mxu0 %v3547
    %3663 = vmatprep.subr.mxu0 0.0
    %3664 = vmatpush1.msra.mxu0 %v3550
    %3665 = vmatprep.subr.mxu0 0.0
    %3666 = vmatpush1.msra.mxu0 %v3553
    %3667 = vmatprep.subr.mxu0 0.0
    %3668 = vmatpush1.msra.mxu0 %v3556
    %3669 = vmatprep.subr.mxu0 0.0
    %3670 = vmatpush1.msra.mxu0 %v3559
    %3671 = vmatprep.subr.mxu0 0.0
    %3672 = vmatpush1.msra.mxu0 %v3562
    %3673 = vmatprep.subr.mxu0 0.0
    %3674 = vmatpush1.msra.mxu0 %v3565
    %3675 = vmatprep.subr.mxu0 0.0
    %3676 = vmatpush1.msra.mxu0 %v3568
    %3677 = vmatprep.subr.mxu0 0.0
    %3678 = vmatpush1.msra.mxu0 %v3571
    %3679 = vmatprep.subr.mxu0 0.0
    %3680 = vmatpush1.msra.mxu0 %v3574
    %3681 = vmatprep.subr.mxu0 0.0
    %3682 = vmatpush1.msra.mxu0 %v3577
    %3683 = vmatprep.subr.mxu0 0.0
    %3684 = vmatpush1.msra.mxu0 %v3580
    %3685 = vmatprep.subr.mxu0 0.0
    %3686 = vmatpush1.msra.mxu0 %v3583
    %3687 = vmatprep.subr.mxu0 0.0
    %3688 = vmatpush1.msra.mxu0 0.0
    %3689 = vmatprep.subr.mxu0 0.0
    %3690 = vmatpush1.msra.mxu0 0.0
    %3691 = vmatprep.subr.mxu0 0.0
    %3692 = vmatpush1.msra.mxu0 0.0
    %3693 = vmatprep.subr.mxu0 0.0
    %3694 = vmatpush1.msra.mxu0 0.0
    %3695 = vmatprep.subr.mxu0 0.0
    %3696 = vmatpush1.msra.mxu0 0.0
    %3697 = vmatprep.subr.mxu0 0.0
    %3698 = vmatpush1.msra.mxu0 0.0
    %3699 = vmatprep.subr.mxu0 0.0
    %3700 = vmatpush1.msra.mxu0 0.0
    %3701 = vmatprep.subr.mxu0 0.0
    %3702 = vmatpush1.msra.mxu0 0.0
    %3703 = vmatprep.subr.mxu0 0.0
    %3704 = vmatpush1.msra.mxu0 0.0
    %3705 = vmatprep.subr.mxu0 0.0
    %3706 = vmatpush1.msra.mxu0 0.0
    %3707 = vmatprep.subr.mxu0 0.0
    %3708 = vmatpush1.msra.mxu0 0.0
    %3709 = vmatprep.subr.mxu0 0.0
    %3710 = vmatpush1.msra.mxu0 0.0
    %3711 = vmatprep.subr.mxu0 0.0
    %3712 = vmatpush1.msra.mxu0 0.0
    %3713 = vmatprep.subr.mxu0 0.0
    %3714 = vmatpush1.msra.mxu0 0.0
    %3715 = vmatprep.subr.mxu0 0.0
    %3716 = vmatpush1.msra.mxu0 0.0
    %3717 = vmatprep.subr.mxu0 0.0
    %3718 = vmatpush1.msra.mxu0 0.0
    %3719 = vmatprep.mubr.f32.mxu0 0.0
    %3720 = vmatmul.mubr.f32.gmra.mrb[0].mxu0 %v3336
    %v3721 = vpop.f32.mrb[0].mxu0
    %v3722 = vadd.f32 0.0, %v3721
    %v3723 = vpop.f32.mrb[0].mxu0
    %3724 = vdwg.mxu0
    %v3725 = vadd.f32 %v3341, %v3462
    %v3726 = vxor.u32 %v3725, 2147483648
    %v3727 = vmul.f32 %v3726, 1.442695
    %v3728 = vpow.pop %v3727
    %v3729 = vadd.f32 %v3728, 1.0
    %v3730 = vrcp.pop %v3729
    %v3731 = vmul.f32 1.0, %v3730
    %v3732 = vadd.f32 %v3342, %v3464
    %v3733 = vxor.u32 %v3732, 2147483648
    %v3734 = vmul.f32 %v3733, 1.442695
    %v3735 = vpow.pop %v3734
    %v3736 = vadd.f32 %v3735, 1.0
    %v3737 = vrcp.pop %v3736
    %v3738 = vmul.f32 1.0, %v3737
    %v3739 = vadd.f32 %v3533, %v1093
    %v3740 = vmul.f32 %v3731, %v3739
    %v3741 = vadd.f32 %v3343, %v3740
    %v3742 = vtanh.pop %v3741
    %v3743 = vsub.f32 %v3335, %v3742
    %v3744 = vmul.f32 %v3738, %v3743
    %v3745 = vadd.f32 %v3742, %v3744
    %v3746 = vadd.f32 %v3344, %v3651
    %v3747 = vxor.u32 %v3746, 2147483648
    %v3748 = vmul.f32 %v3747, 1.442695
    %v3749 = vpow.pop %v3748
    %v3750 = vadd.f32 %v3749, 1.0
    %v3751 = vrcp.pop %v3750
    %v3752 = vmul.f32 1.0, %v3751
    %v3753 = vadd.f32 %v3345, %v3653
    %v3754 = vxor.u32 %v3753, 2147483648
    %v3755 = vmul.f32 %v3754, 1.442695
    %v3756 = vpow.pop %v3755
    %v3757 = vadd.f32 %v3756, 1.0
    %v3758 = vrcp.pop %v3757
    %v3759 = vmul.f32 1.0, %v3758
    %v3760 = vadd.f32 %v3722, %v1120
    %v3761 = vmul.f32 %v3752, %v3760
    %v3762 = vadd.f32 %v3346, %v3761
    %v3763 = vtanh.pop %v3762
    %v3764 = vsub.f32 %v3336, %v3763
    %v3765 = vmul.f32 %v3759, %v3764
    %v3766 = vadd.f32 %v3763, %v3765
    %v3767 = vsel %vm1583, %v3745, %v3335
    %v3768 = vsel %vm1577, %v3766, %v3336
    %v3769 = vsel %vm1583, %v3745, 0.0
    %3770 = vst [vmem:[#allocation4 + $0x30] sm:$0xff] %v3769
    %v3771 = vsel %vm1577, %v3766, 0.0
    %3772 = vst [vmem:[#allocation5 + $0x8] sm:$0xff] %v3771
    %v3773 = vld [vmem:[#allocation2 + $0xa8] sm:$0xff]
    %v3774 = vld [vmem:[#allocation2 + $0xb0] sm:$0xff]
    %v3775 = vld [vmem:[#allocation2 + $0xb8] sm:$0xff]
    %v3776 = vld [vmem:[#allocation3] sm:$0xff]
    %v3777 = vld [vmem:[#allocation3 + $0x8] sm:$0xff]
    %v3778 = vld [vmem:[#allocation3 + $0x10] sm:$0xff]
    %v3779 = vld [vmem:[#allocation11] sm:$0xff]
    %v3780 = vld [vmem:[#allocation11 + $0x8] sm:$0xff]
    %v3781 = vld [vmem:[#allocation11 + $0x10] sm:$0xff]
    %v3782 = vld [vmem:[#allocation11 + $0x18] sm:$0xff]
    %v3783 = vld [vmem:[#allocation11 + $0x20] sm:$0xff]
    %v3784 = vld [vmem:[#allocation11 + $0x28] sm:$0xff]
    %v3785 = vld [vmem:[#allocation11 + $0x30] sm:$0xff]
    %v3786 = vld [vmem:[#allocation11 + $0x38] sm:$0xff]
    %v3787 = vld [vmem:[#allocation11 + $0x40] sm:$0xff]
    %v3788 = vld [vmem:[#allocation11 + $0x48] sm:$0xff]
    %v3789 = vld [vmem:[#allocation11 + $0x50] sm:$0xff]
    %v3790 = vld [vmem:[#allocation11 + $0x58] sm:$0xff]
    %v3791 = vld [vmem:[#allocation11 + $0x60] sm:$0xff]
    %v3792 = vld [vmem:[#allocation11 + $0x68] sm:$0xff]
    %v3793 = vld [vmem:[#allocation11 + $0x70] sm:$0xff]
    %v3794 = vld [vmem:[#allocation11 + $0x78] sm:$0xff]
    %v3795 = vld [vmem:[#allocation11 + $0x80] sm:$0xff]
    %v3796 = vld [vmem:[#allocation11 + $0x88] sm:$0xff]
    %v3797 = vld [vmem:[#allocation11 + $0x90] sm:$0xff]
    %v3798 = vld [vmem:[#allocation11 + $0x98] sm:$0xff]
    %v3799 = vld [vmem:[#allocation11 + $0xa0] sm:$0xff]
    %v3800 = vld [vmem:[#allocation11 + $0xa8] sm:$0xff]
    %v3801 = vld [vmem:[#allocation11 + $0xb0] sm:$0xff]
    %v3802 = vld [vmem:[#allocation11 + $0xb8] sm:$0xff]
    %v3803 = vld [vmem:[#allocation11 + $0xc0] sm:$0xff]
    %v3804 = vld [vmem:[#allocation11 + $0xc8] sm:$0xff]
    %v3805 = vld [vmem:[#allocation11 + $0xd0] sm:$0xff]
    %v3806 = vld [vmem:[#allocation11 + $0xd8] sm:$0xff]
    %v3807 = vld [vmem:[#allocation11 + $0xe0] sm:$0xff]
    %v3808 = vld [vmem:[#allocation11 + $0xe8] sm:$0xff]
    %v3809 = vld [vmem:[#allocation11 + $0xf0] sm:$0xff]
    %v3810 = vld [vmem:[#allocation11 + $0xf8] sm:$0xff]
    %v3811 = vld [vmem:[#allocation11 + $0x100] sm:$0xff]
    %v3812 = vld [vmem:[#allocation11 + $0x108] sm:$0xff]
    %v3813 = vld [vmem:[#allocation11 + $0x110] sm:$0xff]
    %v3814 = vld [vmem:[#allocation11 + $0x118] sm:$0xff]
    %v3815 = vld [vmem:[#allocation11 + $0x120] sm:$0xff]
    %v3816 = vld [vmem:[#allocation11 + $0x128] sm:$0xff]
    %v3817 = vld [vmem:[#allocation11 + $0x130] sm:$0xff]
    %v3818 = vld [vmem:[#allocation11 + $0x138] sm:$0xff]
    %v3819 = vld [vmem:[#allocation11 + $0x140] sm:$0xff]
    %v3820 = vld [vmem:[#allocation11 + $0x148] sm:$0xff]
    %v3821 = vld [vmem:[#allocation11 + $0x150] sm:$0xff]
    %v3822 = vld [vmem:[#allocation11 + $0x158] sm:$0xff]
    %v3823 = vld [vmem:[#allocation11 + $0x160] sm:$0xff]
    %v3824 = vld [vmem:[#allocation11 + $0x168] sm:$0xff]
    %v3825 = vld [vmem:[#allocation11 + $0x170] sm:$0xff]
    %v3826 = vld [vmem:[#allocation11 + $0x178] sm:$0xff]
    %3827 = vmatprep.subr.mxu0 %v3780
    %3828 = vmatpush1.msra.mxu0 %v3779
    %3829 = vmatprep.subr.mxu0 %v3783
    %3830 = vmatpush1.msra.mxu0 %v3782
    %3831 = vmatprep.subr.mxu0 %v3786
    %3832 = vmatpush1.msra.mxu0 %v3785
    %3833 = vmatprep.subr.mxu0 %v3789
    %3834 = vmatpush1.msra.mxu0 %v3788
    %3835 = vmatprep.subr.mxu0 %v3792
    %3836 = vmatpush1.msra.mxu0 %v3791
    %3837 = vmatprep.subr.mxu0 %v3795
    %3838 = vmatpush1.msra.mxu0 %v3794
    %3839 = vmatprep.subr.mxu0 %v3798
    %3840 = vmatpush1.msra.mxu0 %v3797
    %3841 = vmatprep.subr.mxu0 %v3801
    %3842 = vmatpush1.msra.mxu0 %v3800
    %3843 = vmatprep.subr.mxu0 %v3804
    %3844 = vmatpush1.msra.mxu0 %v3803
    %3845 = vmatprep.subr.mxu0 %v3807
    %3846 = vmatpush1.msra.mxu0 %v3806
    %3847 = vmatprep.subr.mxu0 %v3810
    %3848 = vmatpush1.msra.mxu0 %v3809
    %3849 = vmatprep.subr.mxu0 %v3813
    %3850 = vmatpush1.msra.mxu0 %v3812
    %3851 = vmatprep.subr.mxu0 %v3816
    %3852 = vmatpush1.msra.mxu0 %v3815
    %3853 = vmatprep.subr.mxu0 %v3819
    %3854 = vmatpush1.msra.mxu0 %v3818
    %3855 = vmatprep.subr.mxu0 %v3822
    %3856 = vmatpush1.msra.mxu0 %v3821
    %3857 = vmatprep.subr.mxu0 %v3825
    %3858 = vmatpush1.msra.mxu0 %v3824
    %3859 = vmatprep.subr.mxu0 0.0
    %3860 = vmatpush1.msra.mxu0 0.0
    %3861 = vmatprep.subr.mxu0 0.0
    %3862 = vmatpush1.msra.mxu0 0.0
    %3863 = vmatprep.subr.mxu0 0.0
    %3864 = vmatpush1.msra.mxu0 0.0
    %3865 = vmatprep.subr.mxu0 0.0
    %3866 = vmatpush1.msra.mxu0 0.0
    %3867 = vmatprep.subr.mxu0 0.0
    %3868 = vmatpush1.msra.mxu0 0.0
    %3869 = vmatprep.subr.mxu0 0.0
    %3870 = vmatpush1.msra.mxu0 0.0
    %3871 = vmatprep.subr.mxu0 0.0
    %3872 = vmatpush1.msra.mxu0 0.0
    %3873 = vmatprep.subr.mxu0 0.0
    %3874 = vmatpush1.msra.mxu0 0.0
    %3875 = vmatprep.subr.mxu0 0.0
    %3876 = vmatpush1.msra.mxu0 0.0
    %3877 = vmatprep.subr.mxu0 0.0
    %3878 = vmatpush1.msra.mxu0 0.0
    %3879 = vmatprep.subr.mxu0 0.0
    %3880 = vmatpush1.msra.mxu0 0.0
    %3881 = vmatprep.subr.mxu0 0.0
    %3882 = vmatpush1.msra.mxu0 0.0
    %3883 = vmatprep.subr.mxu0 0.0
    %3884 = vmatpush1.msra.mxu0 0.0
    %3885 = vmatprep.subr.mxu0 0.0
    %3886 = vmatpush1.msra.mxu0 0.0
    %3887 = vmatprep.subr.mxu0 0.0
    %3888 = vmatpush1.msra.mxu0 0.0
    %3889 = vmatprep.subr.mxu0 0.0
    %3890 = vmatpush1.msra.mxu0 0.0
    %3891 = vmatprep.mubr.f32.mxu0 0.0
    %3892 = vmatmul.mubr.f32.gmra.mrb[0].mxu0 %v3767
    %v3893 = vpop.f32.mrb[0].mxu0
    %v3894 = vadd.f32 0.0, %v3893
    %v3895 = vpop.f32.mrb[0].mxu0
    %v3896 = vadd.f32 0.0, %v3895
    %3897 = vdwg.mxu0
    %3898 = vmatprep.subr.mxu0 0.0
    %3899 = vmatpush1.msra.mxu0 %v3781
    %3900 = vmatprep.subr.mxu0 0.0
    %3901 = vmatpush1.msra.mxu0 %v3784
    %3902 = vmatprep.subr.mxu0 0.0
    %3903 = vmatpush1.msra.mxu0 %v3787
    %3904 = vmatprep.subr.mxu0 0.0
    %3905 = vmatpush1.msra.mxu0 %v3790
    %3906 = vmatprep.subr.mxu0 0.0
    %3907 = vmatpush1.msra.mxu0 %v3793
    %3908 = vmatprep.subr.mxu0 0.0
    %3909 = vmatpush1.msra.mxu0 %v3796
    %3910 = vmatprep.subr.mxu0 0.0
    %3911 = vmatpush1.msra.mxu0 %v3799
    %3912 = vmatprep.subr.mxu0 0.0
    %3913 = vmatpush1.msra.mxu0 %v3802
    %3914 = vmatprep.subr.mxu0 0.0
    %3915 = vmatpush1.msra.mxu0 %v3805
    %3916 = vmatprep.subr.mxu0 0.0
    %3917 = vmatpush1.msra.mxu0 %v3808
    %3918 = vmatprep.subr.mxu0 0.0
    %3919 = vmatpush1.msra.mxu0 %v3811
    %3920 = vmatprep.subr.mxu0 0.0
    %3921 = vmatpush1.msra.mxu0 %v3814
    %3922 = vmatprep.subr.mxu0 0.0
    %3923 = vmatpush1.msra.mxu0 %v3817
    %3924 = vmatprep.subr.mxu0 0.0
    %3925 = vmatpush1.msra.mxu0 %v3820
    %3926 = vmatprep.subr.mxu0 0.0
    %3927 = vmatpush1.msra.mxu0 %v3823
    %3928 = vmatprep.subr.mxu0 0.0
    %3929 = vmatpush1.msra.mxu0 %v3826
    %3930 = vmatprep.subr.mxu0 0.0
    %3931 = vmatpush1.msra.mxu0 0.0
    %3932 = vmatprep.subr.mxu0 0.0
    %3933 = vmatpush1.msra.mxu0 0.0
    %3934 = vmatprep.subr.mxu0 0.0
    %3935 = vmatpush1.msra.mxu0 0.0
    %3936 = vmatprep.subr.mxu0 0.0
    %3937 = vmatpush1.msra.mxu0 0.0
    %3938 = vmatprep.subr.mxu0 0.0
    %3939 = vmatpush1.msra.mxu0 0.0
    %3940 = vmatprep.subr.mxu0 0.0
    %3941 = vmatpush1.msra.mxu0 0.0
    %3942 = vmatprep.subr.mxu0 0.0
    %3943 = vmatpush1.msra.mxu0 0.0
    %3944 = vmatprep.subr.mxu0 0.0
    %3945 = vmatpush1.msra.mxu0 0.0
    %3946 = vmatprep.subr.mxu0 0.0
    %3947 = vmatpush1.msra.mxu0 0.0
    %3948 = vmatprep.subr.mxu0 0.0
    %3949 = vmatpush1.msra.mxu0 0.0
    %3950 = vmatprep.subr.mxu0 0.0
    %3951 = vmatpush1.msra.mxu0 0.0
    %3952 = vmatprep.subr.mxu0 0.0
    %3953 = vmatpush1.msra.mxu0 0.0
    %3954 = vmatprep.subr.mxu0 0.0
    %3955 = vmatpush1.msra.mxu0 0.0
    %3956 = vmatprep.subr.mxu0 0.0
    %3957 = vmatpush1.msra.mxu0 0.0
    %3958 = vmatprep.subr.mxu0 0.0
    %3959 = vmatpush1.msra.mxu0 0.0
    %3960 = vmatprep.subr.mxu0 0.0
    %3961 = vmatpush1.msra.mxu0 0.0
    %3962 = vmatprep.mubr.f32.mxu0 0.0
    %3963 = vmatmul.mubr.f32.gmra.mrb[0].mxu0 %v3767
    %v3964 = vpop.f32.mrb[0].mxu0
    %v3965 = vadd.f32 0.0, %v3964
    %v3966 = vpop.f32.mrb[0].mxu0
    %3967 = vdwg.mxu0
    %v3968 = vld [vmem:[#allocation12] sm:$0xff]
    %v3969 = vld [vmem:[#allocation12 + $0x8] sm:$0xff]
    %v3970 = vld [vmem:[#allocation12 + $0x10] sm:$0xff]
    %v3971 = vld [vmem:[#allocation12 + $0x18] sm:$0xff]
    %v3972 = vld [vmem:[#allocation12 + $0x20] sm:$0xff]
    %v3973 = vld [vmem:[#allocation12 + $0x28] sm:$0xff]
    %v3974 = vld [vmem:[#allocation12 + $0x30] sm:$0xff]
    %v3975 = vld [vmem:[#allocation12 + $0x38] sm:$0xff]
    %v3976 = vld [vmem:[#allocation12 + $0x40] sm:$0xff]
    %v3977 = vld [vmem:[#allocation12 + $0x48] sm:$0xff]
    %v3978 = vld [vmem:[#allocation12 + $0x50] sm:$0xff]
    %v3979 = vld [vmem:[#allocation12 + $0x58] sm:$0xff]
    %v3980 = vld [vmem:[#allocation12 + $0x60] sm:$0xff]
    %v3981 = vld [vmem:[#allocation12 + $0x68] sm:$0xff]
    %v3982 = vld [vmem:[#allocation12 + $0x70] sm:$0xff]
    %v3983 = vld [vmem:[#allocation12 + $0x78] sm:$0xff]
    %v3984 = vld [vmem:[#allocation12 + $0x80] sm:$0xff]
    %v3985 = vld [vmem:[#allocation12 + $0x88] sm:$0xff]
    %v3986 = vld [vmem:[#allocation12 + $0x90] sm:$0xff]
    %v3987 = vld [vmem:[#allocation12 + $0x98] sm:$0xff]
    %v3988 = vld [vmem:[#allocation12 + $0xa0] sm:$0xff]
    %v3989 = vld [vmem:[#allocation12 + $0xa8] sm:$0xff]
    %v3990 = vld [vmem:[#allocation12 + $0xb0] sm:$0xff]
    %v3991 = vld [vmem:[#allocation12 + $0xb8] sm:$0xff]
    %v3992 = vld [vmem:[#allocation12 + $0xc0] sm:$0xff]
    %v3993 = vld [vmem:[#allocation12 + $0xc8] sm:$0xff]
    %v3994 = vld [vmem:[#allocation12 + $0xd0] sm:$0xff]
    %v3995 = vld [vmem:[#allocation12 + $0xd8] sm:$0xff]
    %v3996 = vld [vmem:[#allocation12 + $0xe0] sm:$0xff]
    %v3997 = vld [vmem:[#allocation12 + $0xe8] sm:$0xff]
    %v3998 = vld [vmem:[#allocation12 + $0xf0] sm:$0xff]
    %v3999 = vld [vmem:[#allocation12 + $0xf8] sm:$0xff]
    %v4000 = vld [vmem:[#allocation12 + $0x100] sm:$0xff]
    %v4001 = vld [vmem:[#allocation12 + $0x108] sm:$0xff]
    %v4002 = vld [vmem:[#allocation12 + $0x110] sm:$0xff]
    %v4003 = vld [vmem:[#allocation12 + $0x118] sm:$0xff]
    %v4004 = vld [vmem:[#allocation12 + $0x120] sm:$0xff]
    %v4005 = vld [vmem:[#allocation12 + $0x128] sm:$0xff]
    %v4006 = vld [vmem:[#allocation12 + $0x130] sm:$0xff]
    %v4007 = vld [vmem:[#allocation12 + $0x138] sm:$0xff]
    %v4008 = vld [vmem:[#allocation12 + $0x140] sm:$0xff]
    %v4009 = vld [vmem:[#allocation12 + $0x148] sm:$0xff]
    %v4010 = vld [vmem:[#allocation12 + $0x150] sm:$0xff]
    %v4011 = vld [vmem:[#allocation12 + $0x158] sm:$0xff]
    %v4012 = vld [vmem:[#allocation12 + $0x160] sm:$0xff]
    %v4013 = vld [vmem:[#allocation12 + $0x168] sm:$0xff]
    %v4014 = vld [vmem:[#allocation12 + $0x170] sm:$0xff]
    %v4015 = vld [vmem:[#allocation12 + $0x178] sm:$0xff]
    %4016 = vmatprep.subr.mxu0 %v3969
    %4017 = vmatpush1.msra.mxu0 %v3968
    %4018 = vmatprep.subr.mxu0 %v3972
    %4019 = vmatpush1.msra.mxu0 %v3971
    %4020 = vmatprep.subr.mxu0 %v3975
    %4021 = vmatpush1.msra.mxu0 %v3974
    %4022 = vmatprep.subr.mxu0 %v3978
    %4023 = vmatpush1.msra.mxu0 %v3977
    %4024 = vmatprep.subr.mxu0 %v3981
    %4025 = vmatpush1.msra.mxu0 %v3980
    %4026 = vmatprep.subr.mxu0 %v3984
    %4027 = vmatpush1.msra.mxu0 %v3983
    %4028 = vmatprep.subr.mxu0 %v3987
    %4029 = vmatpush1.msra.mxu0 %v3986
    %4030 = vmatprep.subr.mxu0 %v3990
    %4031 = vmatpush1.msra.mxu0 %v3989
    %4032 = vmatprep.subr.mxu0 %v3993
    %4033 = vmatpush1.msra.mxu0 %v3992
    %4034 = vmatprep.subr.mxu0 %v3996
    %4035 = vmatpush1.msra.mxu0 %v3995
    %4036 = vmatprep.subr.mxu0 %v3999
    %4037 = vmatpush1.msra.mxu0 %v3998
    %4038 = vmatprep.subr.mxu0 %v4002
    %4039 = vmatpush1.msra.mxu0 %v4001
    %4040 = vmatprep.subr.mxu0 %v4005
    %4041 = vmatpush1.msra.mxu0 %v4004
    %4042 = vmatprep.subr.mxu0 %v4008
    %4043 = vmatpush1.msra.mxu0 %v4007
    %4044 = vmatprep.subr.mxu0 %v4011
    %4045 = vmatpush1.msra.mxu0 %v4010
    %4046 = vmatprep.subr.mxu0 %v4014
    %4047 = vmatpush1.msra.mxu0 %v4013
    %4048 = vmatprep.subr.mxu0 0.0
    %4049 = vmatpush1.msra.mxu0 0.0
    %4050 = vmatprep.subr.mxu0 0.0
    %4051 = vmatpush1.msra.mxu0 0.0
    %4052 = vmatprep.subr.mxu0 0.0
    %4053 = vmatpush1.msra.mxu0 0.0
    %4054 = vmatprep.subr.mxu0 0.0
    %4055 = vmatpush1.msra.mxu0 0.0
    %4056 = vmatprep.subr.mxu0 0.0
    %4057 = vmatpush1.msra.mxu0 0.0
    %4058 = vmatprep.subr.mxu0 0.0
    %4059 = vmatpush1.msra.mxu0 0.0
    %4060 = vmatprep.subr.mxu0 0.0
    %4061 = vmatpush1.msra.mxu0 0.0
    %4062 = vmatprep.subr.mxu0 0.0
    %4063 = vmatpush1.msra.mxu0 0.0
    %4064 = vmatprep.subr.mxu0 0.0
    %4065 = vmatpush1.msra.mxu0 0.0
    %4066 = vmatprep.subr.mxu0 0.0
    %4067 = vmatpush1.msra.mxu0 0.0
    %4068 = vmatprep.subr.mxu0 0.0
    %4069 = vmatpush1.msra.mxu0 0.0
    %4070 = vmatprep.subr.mxu0 0.0
    %4071 = vmatpush1.msra.mxu0 0.0
    %4072 = vmatprep.subr.mxu0 0.0
    %4073 = vmatpush1.msra.mxu0 0.0
    %4074 = vmatprep.subr.mxu0 0.0
    %4075 = vmatpush1.msra.mxu0 0.0
    %4076 = vmatprep.subr.mxu0 0.0
    %4077 = vmatpush1.msra.mxu0 0.0
    %4078 = vmatprep.subr.mxu0 0.0
    %4079 = vmatpush1.msra.mxu0 0.0
    %4080 = vmatprep.mubr.f32.mxu0 0.0
    %4081 = vmatmul.mubr.f32.gmra.mrb[0].mxu0 %v3768
    %v4082 = vpop.f32.mrb[0].mxu0
    %v4083 = vadd.f32 0.0, %v4082
    %v4084 = vpop.f32.mrb[0].mxu0
    %v4085 = vadd.f32 0.0, %v4084
    %4086 = vdwg.mxu0
    %4087 = vmatprep.subr.mxu0 0.0
    %4088 = vmatpush1.msra.mxu0 %v3970
    %4089 = vmatprep.subr.mxu0 0.0
    %4090 = vmatpush1.msra.mxu0 %v3973
    %4091 = vmatprep.subr.mxu0 0.0
    %4092 = vmatpush1.msra.mxu0 %v3976
    %4093 = vmatprep.subr.mxu0 0.0
    %4094 = vmatpush1.msra.mxu0 %v3979
    %4095 = vmatprep.subr.mxu0 0.0
    %4096 = vmatpush1.msra.mxu0 %v3982
    %4097 = vmatprep.subr.mxu0 0.0
    %4098 = vmatpush1.msra.mxu0 %v3985
    %4099 = vmatprep.subr.mxu0 0.0
    %4100 = vmatpush1.msra.mxu0 %v3988
    %4101 = vmatprep.subr.mxu0 0.0
    %4102 = vmatpush1.msra.mxu0 %v3991
    %4103 = vmatprep.subr.mxu0 0.0
    %4104 = vmatpush1.msra.mxu0 %v3994
    %4105 = vmatprep.subr.mxu0 0.0
    %4106 = vmatpush1.msra.mxu0 %v3997
    %4107 = vmatprep.subr.mxu0 0.0
    %4108 = vmatpush1.msra.mxu0 %v4000
    %4109 = vmatprep.subr.mxu0 0.0
    %4110 = vmatpush1.msra.mxu0 %v4003
    %4111 = vmatprep.subr.mxu0 0.0
    %4112 = vmatpush1.msra.mxu0 %v4006
    %4113 = vmatprep.subr.mxu0 0.0
    %4114 = vmatpush1.msra.mxu0 %v4009
    %4115 = vmatprep.subr.mxu0 0.0
    %4116 = vmatpush1.msra.mxu0 %v4012
    %4117 = vmatprep.subr.mxu0 0.0
    %4118 = vmatpush1.msra.mxu0 %v4015
    %4119 = vmatprep.subr.mxu0 0.0
    %4120 = vmatpush1.msra.mxu0 0.0
    %4121 = vmatprep.subr.mxu0 0.0
    %4122 = vmatpush1.msra.mxu0 0.0
    %4123 = vmatprep.subr.mxu0 0.0
    %4124 = vmatpush1.msra.mxu0 0.0
    %4125 = vmatprep.subr.mxu0 0.0
    %4126 = vmatpush1.msra.mxu0 0.0
    %4127 = vmatprep.subr.mxu0 0.0
    %4128 = vmatpush1.msra.mxu0 0.0
    %4129 = vmatprep.subr.mxu0 0.0
    %4130 = vmatpush1.msra.mxu0 0.0
    %4131 = vmatprep.subr.mxu0 0.0
    %4132 = vmatpush1.msra.mxu0 0.0
    %4133 = vmatprep.subr.mxu0 0.0
    %4134 = vmatpush1.msra.mxu0 0.0
    %4135 = vmatprep.subr.mxu0 0.0
    %4136 = vmatpush1.msra.mxu0 0.0
    %4137 = vmatprep.subr.mxu0 0.0
    %4138 = vmatpush1.msra.mxu0 0.0
    %4139 = vmatprep.subr.mxu0 0.0
    %4140 = vmatpush1.msra.mxu0 0.0
    %4141 = vmatprep.subr.mxu0 0.0
    %4142 = vmatpush1.msra.mxu0 0.0
    %4143 = vmatprep.subr.mxu0 0.0
    %4144 = vmatpush1.msra.mxu0 0.0
    %4145 = vmatprep.subr.mxu0 0.0
    %4146 = vmatpush1.msra.mxu0 0.0
    %4147 = vmatprep.subr.mxu0 0.0
    %4148 = vmatpush1.msra.mxu0 0.0
    %4149 = vmatprep.subr.mxu0 0.0
    %4150 = vmatpush1.msra.mxu0 0.0
    %4151 = vmatprep.mubr.f32.mxu0 0.0
    %4152 = vmatmul.mubr.f32.gmra.mrb[0].mxu0 %v3768
    %v4153 = vpop.f32.mrb[0].mxu0
    %v4154 = vadd.f32 0.0, %v4153
    %v4155 = vpop.f32.mrb[0].mxu0
    %4156 = vdwg.mxu0
    %v4157 = vadd.f32 %v3773, %v3894
    %v4158 = vxor.u32 %v4157, 2147483648
    %v4159 = vmul.f32 %v4158, 1.442695
    %v4160 = vpow.pop %v4159
    %v4161 = vadd.f32 %v4160, 1.0
    %v4162 = vrcp.pop %v4161
    %v4163 = vmul.f32 1.0, %v4162
    %v4164 = vadd.f32 %v3774, %v3896
    %v4165 = vxor.u32 %v4164, 2147483648
    %v4166 = vmul.f32 %v4165, 1.442695
    %v4167 = vpow.pop %v4166
    %v4168 = vadd.f32 %v4167, 1.0
    %v4169 = vrcp.pop %v4168
    %v4170 = vmul.f32 1.0, %v4169
    %v4171 = vadd.f32 %v3965, %v1093
    %v4172 = vmul.f32 %v4163, %v4171
    %v4173 = vadd.f32 %v3775, %v4172
    %v4174 = vtanh.pop %v4173
    %v4175 = vsub.f32 %v3767, %v4174
    %v4176 = vmul.f32 %v4170, %v4175
    %v4177 = vadd.f32 %v4174, %v4176
    %v4178 = vadd.f32 %v3776, %v4083
    %v4179 = vxor.u32 %v4178, 2147483648
    %v4180 = vmul.f32 %v4179, 1.442695
    %v4181 = vpow.pop %v4180
    %v4182 = vadd.f32 %v4181, 1.0
    %v4183 = vrcp.pop %v4182
    %v4184 = vmul.f32 1.0, %v4183
    %v4185 = vadd.f32 %v3777, %v4085
    %v4186 = vxor.u32 %v4185, 2147483648
    %v4187 = vmul.f32 %v4186, 1.442695
    %v4188 = vpow.pop %v4187
    %v4189 = vadd.f32 %v4188, 1.0
    %v4190 = vrcp.pop %v4189
    %v4191 = vmul.f32 1.0, %v4190
    %v4192 = vadd.f32 %v4154, %v1120
    %v4193 = vmul.f32 %v4184, %v4192
    %v4194 = vadd.f32 %v3778, %v4193
    %v4195 = vtanh.pop %v4194
    %v4196 = vsub.f32 %v3768, %v4195
    %v4197 = vmul.f32 %v4191, %v4196
    %v4198 = vadd.f32 %v4195, %v4197
    %v4199 = vsel %vm1141, %v4177, 0.0
    %4200 = vst [vmem:[#allocation4 + $0x38] sm:$0xff] %v4199
    %v4201 = vsel %vm1135, %v4198, 0.0
    %4202 = vst [vmem:[#allocation5] sm:$0xff] %v4201
    %v4203 = vld [vmem:[#allocation4] sm:$0xff]
    %v4204 = vld [vmem:[#allocation4 + $0x8] sm:$0xff]
    %v4205 = vld [vmem:[#allocation4 + $0x10] sm:$0xff]
    %v4206 = vld [vmem:[#allocation4 + $0x18] sm:$0xff]
    %v4207 = vld [vmem:[#allocation4 + $0x20] sm:$0xff]
    %v4208 = vld [vmem:[#allocation4 + $0x28] sm:$0xff]
    %v4209 = vld [vmem:[#allocation4 + $0x30] sm:$0xff]
    %v4210 = vld [vmem:[#allocation4 + $0x38] sm:$0xff]
    %v4211 = vld [vmem:[%s10] sm:$0xff]
    %v4212 = vld [vmem:[%s10 + $0x8] sm:$0xff]
    %v4213 = vld [vmem:[%s10 + $0x10] sm:$0xff]
    %v4214 = vld [vmem:[%s10 + $0x18] sm:$0xff]
    %v4215 = vld [vmem:[%s10 + $0x20] sm:$0xff]
    %v4216 = vld [vmem:[%s10 + $0x28] sm:$0xff]
    %v4217 = vld [vmem:[%s10 + $0x30] sm:$0xff]
    %v4218 = vld [vmem:[%s10 + $0x38] sm:$0xff]
    %v4219 = vld [vmem:[%s10 + $0x40] sm:$0xff]
    %v4220 = vld [vmem:[%s10 + $0x48] sm:$0xff]
    %v4221 = vld [vmem:[%s10 + $0x50] sm:$0xff]
    %v4222 = vld [vmem:[%s10 + $0x58] sm:$0xff]
    %v4223 = vld [vmem:[%s10 + $0x60] sm:$0xff]
    %v4224 = vld [vmem:[%s10 + $0x68] sm:$0xff]
    %v4225 = vld [vmem:[%s10 + $0x70] sm:$0xff]
    %v4226 = vld [vmem:[%s10 + $0x78] sm:$0xff]
    %v4227 = vld [vmem:[#allocation5] sm:$0xff]
    %v4228 = vld [vmem:[#allocation5 + $0x8] sm:$0xff]
    %v4229 = vld [vmem:[#allocation5 + $0x10] sm:$0xff]
    %v4230 = vld [vmem:[#allocation5 + $0x18] sm:$0xff]
    %v4231 = vld [vmem:[#allocation5 + $0x20] sm:$0xff]
    %v4232 = vld [vmem:[#allocation5 + $0x28] sm:$0xff]
    %v4233 = vld [vmem:[#allocation5 + $0x30] sm:$0xff]
    %v4234 = vld [vmem:[#allocation5 + $0x38] sm:$0xff]
    %v4235 = vld [vmem:[#allocation14] sm:$0xff]
    %v4236 = vld [vmem:[#allocation14 + $0x8] sm:$0xff]
    %v4237 = vld [vmem:[#allocation14 + $0x10] sm:$0xff]
    %v4238 = vld [vmem:[#allocation14 + $0x18] sm:$0xff]
    %v4239 = vld [vmem:[#allocation14 + $0x20] sm:$0xff]
    %v4240 = vld [vmem:[#allocation14 + $0x28] sm:$0xff]
    %v4241 = vld [vmem:[#allocation14 + $0x30] sm:$0xff]
    %v4242 = vld [vmem:[#allocation14 + $0x38] sm:$0xff]
    %v4243 = vld [vmem:[#allocation14 + $0x40] sm:$0xff]
    %v4244 = vld [vmem:[#allocation14 + $0x48] sm:$0xff]
    %v4245 = vld [vmem:[#allocation14 + $0x50] sm:$0xff]
    %v4246 = vld [vmem:[#allocation14 + $0x58] sm:$0xff]
    %v4247 = vld [vmem:[#allocation14 + $0x60] sm:$0xff]
    %v4248 = vld [vmem:[#allocation14 + $0x68] sm:$0xff]
    %v4249 = vld [vmem:[#allocation14 + $0x70] sm:$0xff]
    %v4250 = vld [vmem:[#allocation14 + $0x78] sm:$0xff]
    %4251 = vmatprep.subr.mxu0 0.0
    %4252 = vmatpush1.msra.mxu0 %v4235
    %4253 = vmatprep.subr.mxu0 0.0
    %4254 = vmatpush1.msra.mxu0 %v4236
    %4255 = vmatprep.subr.mxu0 0.0
    %4256 = vmatpush1.msra.mxu0 %v4237
    %4257 = vmatprep.subr.mxu0 0.0
    %4258 = vmatpush1.msra.mxu0 %v4238
    %4259 = vmatprep.subr.mxu0 0.0
    %4260 = vmatpush1.msra.mxu0 %v4239
    %4261 = vmatprep.subr.mxu0 0.0
    %4262 = vmatpush1.msra.mxu0 %v4240
    %4263 = vmatprep.subr.mxu0 0.0
    %4264 = vmatpush1.msra.mxu0 %v4241
    %4265 = vmatprep.subr.mxu0 0.0
    %4266 = vmatpush1.msra.mxu0 %v4242
    %4267 = vmatprep.subr.mxu0 0.0
    %4268 = vmatpush1.msra.mxu0 %v4243
    %4269 = vmatprep.subr.mxu0 0.0
    %4270 = vmatpush1.msra.mxu0 %v4244
    %4271 = vmatprep.subr.mxu0 0.0
    %4272 = vmatpush1.msra.mxu0 %v4245
    %4273 = vmatprep.subr.mxu0 0.0
    %4274 = vmatpush1.msra.mxu0 %v4246
    %4275 = vmatprep.subr.mxu0 0.0
    %4276 = vmatpush1.msra.mxu0 %v4247
    %4277 = vmatprep.subr.mxu0 0.0
    %4278 = vmatpush1.msra.mxu0 %v4248
    %4279 = vmatprep.subr.mxu0 0.0
    %4280 = vmatpush1.msra.mxu0 %v4249
    %4281 = vmatprep.subr.mxu0 0.0
    %4282 = vmatpush1.msra.mxu0 %v4250
    %4283 = vmatprep.subr.mxu0 0.0
    %4284 = vmatpush1.msra.mxu0 0.0
    %4285 = vmatprep.subr.mxu0 0.0
    %4286 = vmatpush1.msra.mxu0 0.0
    %4287 = vmatprep.subr.mxu0 0.0
    %4288 = vmatpush1.msra.mxu0 0.0
    %4289 = vmatprep.subr.mxu0 0.0
    %4290 = vmatpush1.msra.mxu0 0.0
    %4291 = vmatprep.subr.mxu0 0.0
    %4292 = vmatpush1.msra.mxu0 0.0
    %4293 = vmatprep.subr.mxu0 0.0
    %4294 = vmatpush1.msra.mxu0 0.0
    %4295 = vmatprep.subr.mxu0 0.0
    %4296 = vmatpush1.msra.mxu0 0.0
    %4297 = vmatprep.subr.mxu0 0.0
    %4298 = vmatpush1.msra.mxu0 0.0
    %4299 = vmatprep.subr.mxu0 0.0
    %4300 = vmatpush1.msra.mxu0 0.0
    %4301 = vmatprep.subr.mxu0 0.0
    %4302 = vmatpush1.msra.mxu0 0.0
    %4303 = vmatprep.subr.mxu0 0.0
    %4304 = vmatpush1.msra.mxu0 0.0
    %4305 = vmatprep.subr.mxu0 0.0
    %4306 = vmatpush1.msra.mxu0 0.0
    %4307 = vmatprep.subr.mxu0 0.0
    %4308 = vmatpush1.msra.mxu0 0.0
    %4309 = vmatprep.subr.mxu0 0.0
    %4310 = vmatpush1.msra.mxu0 0.0
    %4311 = vmatprep.subr.mxu0 0.0
    %4312 = vmatpush1.msra.mxu0 0.0
    %4313 = vmatprep.subr.mxu0 0.0
    %4314 = vmatpush1.msra.mxu0 0.0
    %4315 = vmatprep.mubr.f32.mxu0 0.0
    %4316 = vmatmul.mubr.f32.gmra.mrb[0].mxu0 %v4227
    %v4317 = vpop.f32.mrb[0].mxu0
    %v4318 = vadd.f32 0.0, %v4317
    %v4319 = vpop.f32.mrb[0].mxu0
    %4320 = vmatprep.mubr.f32.mxu0 0.0
    %4321 = vmatmul.mubr.f32.gmra.mrb[0].mxu0 %v4228
    %v4322 = vpop.f32.mrb[0].mxu0
    %v4323 = vadd.f32 0.0, %v4322
    %v4324 = vpop.f32.mrb[0].mxu0
    %4325 = vmatprep.mubr.f32.mxu0 0.0
    %4326 = vmatmul.mubr.f32.gmra.mrb[0].mxu0 %v4229
    %v4327 = vpop.f32.mrb[0].mxu0
    %v4328 = vadd.f32 0.0, %v4327
    %v4329 = vpop.f32.mrb[0].mxu0
    %4330 = vmatprep.mubr.f32.mxu0 0.0
    %4331 = vmatmul.mubr.f32.gmra.mrb[0].mxu0 %v4230
    %v4332 = vpop.f32.mrb[0].mxu0
    %v4333 = vadd.f32 0.0, %v4332
    %v4334 = vpop.f32.mrb[0].mxu0
    %4335 = vmatprep.mubr.f32.mxu0 0.0
    %4336 = vmatmul.mubr.f32.gmra.mrb[0].mxu0 %v4231
    %v4337 = vpop.f32.mrb[0].mxu0
    %v4338 = vadd.f32 0.0, %v4337
    %v4339 = vpop.f32.mrb[0].mxu0
    %4340 = vmatprep.mubr.f32.mxu0 0.0
    %4341 = vmatmul.mubr.f32.gmra.mrb[0].mxu0 %v4232
    %v4342 = vpop.f32.mrb[0].mxu0
    %v4343 = vadd.f32 0.0, %v4342
    %v4344 = vpop.f32.mrb[0].mxu0
    %4345 = vmatprep.mubr.f32.mxu0 0.0
    %4346 = vmatmul.mubr.f32.gmra.mrb[0].mxu0 %v4233
    %v4347 = vpop.f32.mrb[0].mxu0
    %v4348 = vadd.f32 0.0, %v4347
    %v4349 = vpop.f32.mrb[0].mxu0
    %4350 = vmatprep.mubr.f32.mxu0 0.0
    %4351 = vmatmul.mubr.f32.gmra.mrb[0].mxu0 %v4234
    %v4352 = vpop.f32.mrb[0].mxu0
    %v4353 = vadd.f32 0.0, %v4352
    %v4354 = vpop.f32.mrb[0].mxu0
    %4355 = vdwg.mxu0
    %4356 = vmatprep.subr.mxu0 0.0
    %4357 = vmatpush1.msra.mxu0 %v4211
    %4358 = vmatprep.subr.mxu0 0.0
    %4359 = vmatpush1.msra.mxu0 %v4212
    %4360 = vmatprep.subr.mxu0 0.0
    %4361 = vmatpush1.msra.mxu0 %v4213
    %4362 = vmatprep.subr.mxu0 0.0
    %4363 = vmatpush1.msra.mxu0 %v4214
    %4364 = vmatprep.subr.mxu0 0.0
    %4365 = vmatpush1.msra.mxu0 %v4215
    %4366 = vmatprep.subr.mxu0 0.0
    %4367 = vmatpush1.msra.mxu0 %v4216
    %4368 = vmatprep.subr.mxu0 0.0
    %4369 = vmatpush1.msra.mxu0 %v4217
    %4370 = vmatprep.subr.mxu0 0.0
    %4371 = vmatpush1.msra.mxu0 %v4218
    %4372 = vmatprep.subr.mxu0 0.0
    %4373 = vmatpush1.msra.mxu0 %v4219
    %4374 = vmatprep.subr.mxu0 0.0
    %4375 = vmatpush1.msra.mxu0 %v4220
    %4376 = vmatprep.subr.mxu0 0.0
    %4377 = vmatpush1.msra.mxu0 %v4221
    %4378 = vmatprep.subr.mxu0 0.0
    %4379 = vmatpush1.msra.mxu0 %v4222
    %4380 = vmatprep.subr.mxu0 0.0
    %4381 = vmatpush1.msra.mxu0 %v4223
    %4382 = vmatprep.subr.mxu0 0.0
    %4383 = vmatpush1.msra.mxu0 %v4224
    %4384 = vmatprep.subr.mxu0 0.0
    %4385 = vmatpush1.msra.mxu0 %v4225
    %4386 = vmatprep.subr.mxu0 0.0
    %4387 = vmatpush1.msra.mxu0 %v4226
    %4388 = vmatprep.subr.mxu0 0.0
    %4389 = vmatpush1.msra.mxu0 0.0
    %4390 = vmatprep.subr.mxu0 0.0
    %4391 = vmatpush1.msra.mxu0 0.0
    %4392 = vmatprep.subr.mxu0 0.0
    %4393 = vmatpush1.msra.mxu0 0.0
    %4394 = vmatprep.subr.mxu0 0.0
    %4395 = vmatpush1.msra.mxu0 0.0
    %4396 = vmatprep.subr.mxu0 0.0
    %4397 = vmatpush1.msra.mxu0 0.0
    %4398 = vmatprep.subr.mxu0 0.0
    %4399 = vmatpush1.msra.mxu0 0.0
    %4400 = vmatprep.subr.mxu0 0.0
    %4401 = vmatpush1.msra.mxu0 0.0
    %4402 = vmatprep.subr.mxu0 0.0
    %4403 = vmatpush1.msra.mxu0 0.0
    %4404 = vmatprep.subr.mxu0 0.0
    %4405 = vmatpush1.msra.mxu0 0.0
    %4406 = vmatprep.subr.mxu0 0.0
    %4407 = vmatpush1.msra.mxu0 0.0
    %4408 = vmatprep.subr.mxu0 0.0
    %4409 = vmatpush1.msra.mxu0 0.0
    %4410 = vmatprep.subr.mxu0 0.0
    %4411 = vmatpush1.msra.mxu0 0.0
    %4412 = vmatprep.subr.mxu0 0.0
    %4413 = vmatpush1.msra.mxu0 0.0
    %4414 = vmatprep.subr.mxu0 0.0
    %4415 = vmatpush1.msra.mxu0 0.0
    %4416 = vmatprep.subr.mxu0 0.0
    %4417 = vmatpush1.msra.mxu0 0.0
    %4418 = vmatprep.subr.mxu0 0.0
    %4419 = vmatpush1.msra.mxu0 0.0
    %4420 = vmatprep.mubr.f32.mxu0 0.0
    %4421 = vmatmul.mubr.f32.gmra.mrb[0].mxu0 %v4203
    %v4422 = vpop.f32.mrb[0].mxu0
    %v4423 = vadd.f32 %v4318, %v4422
    %v4424 = vpop.f32.mrb[0].mxu0
    %4425 = vmatprep.mubr.f32.mxu0 0.0
    %4426 = vmatmul.mubr.f32.gmra.mrb[0].mxu0 %v4204
    %v4427 = vpop.f32.mrb[0].mxu0
    %v4428 = vadd.f32 %v4323, %v4427
    %v4429 = vpop.f32.mrb[0].mxu0
    %4430 = vmatprep.mubr.f32.mxu0 0.0
    %4431 = vmatmul.mubr.f32.gmra.mrb[0].mxu0 %v4205
    %v4432 = vpop.f32.mrb[0].mxu0
    %v4433 = vadd.f32 %v4328, %v4432
    %v4434 = vpop.f32.mrb[0].mxu0
    %4435 = vmatprep.mubr.f32.mxu0 0.0
    %4436 = vmatmul.mubr.f32.gmra.mrb[0].mxu0 %v4206
    %v4437 = vpop.f32.mrb[0].mxu0
    %v4438 = vadd.f32 %v4333, %v4437
    %v4439 = vpop.f32.mrb[0].mxu0
    %4440 = vmatprep.mubr.f32.mxu0 0.0
    %4441 = vmatmul.mubr.f32.gmra.mrb[0].mxu0 %v4207
    %v4442 = vpop.f32.mrb[0].mxu0
    %v4443 = vadd.f32 %v4338, %v4442
    %v4444 = vpop.f32.mrb[0].mxu0
    %4445 = vmatprep.mubr.f32.mxu0 0.0
    %4446 = vmatmul.mubr.f32.gmra.mrb[0].mxu0 %v4208
    %v4447 = vpop.f32.mrb[0].mxu0
    %v4448 = vadd.f32 %v4343, %v4447
    %v4449 = vpop.f32.mrb[0].mxu0
    %4450 = vmatprep.mubr.f32.mxu0 0.0
    %4451 = vmatmul.mubr.f32.gmra.mrb[0].mxu0 %v4209
    %v4452 = vpop.f32.mrb[0].mxu0
    %v4453 = vadd.f32 %v4348, %v4452
    %v4454 = vpop.f32.mrb[0].mxu0
    %4455 = vmatprep.mubr.f32.mxu0 0.0
    %4456 = vmatmul.mubr.f32.gmra.mrb[0].mxu0 %v4210
    %v4457 = vpop.f32.mrb[0].mxu0
    %v4458 = vadd.f32 %v4353, %v4457
    %v4459 = vpop.f32.mrb[0].mxu0
    %4460 = vdwg.mxu0
    %v4461 = vld [vmem:[%s12] sm:$0x1]
    %v4463 = vlaneseq
    %v4464 = vshrl.u32 %v4463, 7
    %v4465 = vsub.s32 0, %v4464
    %v4466 = vrot.slane %v4461, %v4465
    %v4468 = vadd.f32 %v4423, %v4466
    %v4469 = vadd.f32 %v4428, %v4466
    %v4470 = vadd.f32 %v4433, %v4466
    %v4471 = vadd.f32 %v4438, %v4466
    %v4472 = vadd.f32 %v4443, %v4466
    %v4473 = vadd.f32 %v4448, %v4466
    %v4474 = vadd.f32 %v4453, %v4466
    %v4475 = vadd.f32 %v4458, %v4466
    %4476 = vmax.xlane.f32.xlu0 %v4468
    %v4477 = vpop.xlane.xlu0 %4476
    %4478 = vmax.xlane.f32.xlu0 %v4469
    %v4479 = vpop.xlane.xlu0 %4478
    %4480 = vmax.xlane.f32.xlu0 %v4470
    %v4481 = vpop.xlane.xlu0 %4480
    %4482 = vmax.xlane.f32.xlu0 %v4471
    %v4483 = vpop.xlane.xlu0 %4482
    %4484 = vmax.xlane.f32.xlu0 %v4472
    %v4485 = vpop.xlane.xlu0 %4484
    %4486 = vmax.xlane.f32.xlu0 %v4473
    %v4487 = vpop.xlane.xlu0 %4486
    %4488 = vmax.xlane.f32.xlu0 %v4474
    %v4489 = vpop.xlane.xlu0 %4488
    %4490 = vmax.xlane.f32.xlu0 %v4475
    %v4491 = vpop.xlane.xlu0 %4490
    %v4492 = vsub.f32 %v4468, %v4477
    %v4493 = vsub.f32 %v4469, %v4479
    %v4494 = vsub.f32 %v4470, %v4481
    %v4495 = vsub.f32 %v4471, %v4483
    %v4496 = vsub.f32 %v4472, %v4485
    %v4497 = vsub.f32 %v4473, %v4487
    %v4498 = vsub.f32 %v4474, %v4489
    %v4499 = vsub.f32 %v4475, %v4491
    %v4500 = vmul.f32 %v4492, 1.442695
    %v4501 = vpow.pop %v4500
    %v4502 = vmul.f32 %v4493, 1.442695
    %v4503 = vpow.pop %v4502
    %v4504 = vmul.f32 %v4494, 1.442695
    %v4505 = vpow.pop %v4504
    %v4506 = vmul.f32 %v4495, 1.442695
    %v4507 = vpow.pop %v4506
    %v4508 = vmul.f32 %v4496, 1.442695
    %v4509 = vpow.pop %v4508
    %v4510 = vmul.f32 %v4497, 1.442695
    %v4511 = vpow.pop %v4510
    %v4512 = vmul.f32 %v4498, 1.442695
    %v4513 = vpow.pop %v4512
    %v4514 = vmul.f32 %v4499, 1.442695
    %v4515 = vpow.pop %v4514
    %4516 = vadd.xlane.f32.xlu0 %v4501
    %v4517 = vpop.xlane.xlu0 %4516
    %4518 = vadd.xlane.f32.xlu0 %v4503
    %v4519 = vpop.xlane.xlu0 %4518
    %4520 = vadd.xlane.f32.xlu0 %v4505
    %v4521 = vpop.xlane.xlu0 %4520
    %4522 = vadd.xlane.f32.xlu0 %v4507
    %v4523 = vpop.xlane.xlu0 %4522
    %4524 = vadd.xlane.f32.xlu0 %v4509
    %v4525 = vpop.xlane.xlu0 %4524
    %4526 = vadd.xlane.f32.xlu0 %v4511
    %v4527 = vpop.xlane.xlu0 %4526
    %4528 = vadd.xlane.f32.xlu0 %v4513
    %v4529 = vpop.xlane.xlu0 %4528
    %4530 = vadd.xlane.f32.xlu0 %v4515
    %v4531 = vpop.xlane.xlu0 %4530
    %v4532 = vlog2.pop %v4517
    %v4533 = vmul.f32 %v4532, 0.6931472
    %v4534 = vlog2.pop %v4519
    %v4535 = vmul.f32 %v4534, 0.6931472
    %v4536 = vlog2.pop %v4521
    %v4537 = vmul.f32 %v4536, 0.6931472
    %v4538 = vlog2.pop %v4523
    %v4539 = vmul.f32 %v4538, 0.6931472
    %v4540 = vlog2.pop %v4525
    %v4541 = vmul.f32 %v4540, 0.6931472
    %v4542 = vlog2.pop %v4527
    %v4543 = vmul.f32 %v4542, 0.6931472
    %v4544 = vlog2.pop %v4529
    %v4545 = vmul.f32 %v4544, 0.6931472
    %v4546 = vlog2.pop %v4531
    %v4547 = vmul.f32 %v4546, 0.6931472
    %v4548 = vsub.f32 %v4492, %v4533
    %v4549 = vsub.f32 %v4493, %v4535
    %v4550 = vsub.f32 %v4494, %v4537
    %v4551 = vsub.f32 %v4495, %v4539
    %v4552 = vsub.f32 %v4496, %v4541
    %v4553 = vsub.f32 %v4497, %v4543
    %v4554 = vsub.f32 %v4498, %v4545
    %v4555 = vsub.f32 %v4499, %v4547
    %4556 = vst [vmem:[#allocation15] sm:$0xff] %v4548
    %4557 = vst [vmem:[#allocation15 + $0x8] sm:$0xff] %v4549
    %4558 = vst [vmem:[#allocation15 + $0x10] sm:$0xff] %v4550
    %4559 = vst [vmem:[#allocation15 + $0x18] sm:$0xff] %v4551
    %4560 = vst [vmem:[#allocation15 + $0x20] sm:$0xff] %v4552
    %4561 = vst [vmem:[#allocation15 + $0x28] sm:$0xff] %v4553
    %4562 = vst [vmem:[#allocation15 + $0x30] sm:$0xff] %v4554
    %4563 = vst [vmem:[#allocation15 + $0x38] sm:$0xff] %v4555
    // Predicated region
    $region74: #{tpu_custom_call.1} parent=1 // pred_check
      _
    $region75: #{tpu_custom_call.1} parent=1 // pred_check_branch
      %4565 = sbr.rel (0) target = $region77
    $region76: #{tpu_custom_call.1} parent=1 // pred_region
      %s4567 = ssub.s32 1024, 1024
      %4568 = vsyncadd [#allocation8], %s4567
      %s4569 = sshll.u32 [#allocation15], 4
      %s4570 = int_to_ptr.vmem [resolvable:$true] %s4569
      %4575 = dma.vmem_to_hbm [thread:$0]  %s4570, 1024, %s13, [#allocation8], 128, 128, 8
    $region77: #{tpu_custom_call.1} parent=1 // pred_fallthru
      _
    // Predicated region
    $region78: #{tpu_custom_call.1} parent=1 // pred_check
      _
    $region79: #{tpu_custom_call.1} parent=1 // pred_check_branch
      %4577 = sbr.rel (0) target = $region81
    $region80: #{tpu_custom_call.1} parent=1 // pred_region
      %4578 = dma.done [#allocation8], 1024
    $region81: #{tpu_custom_call.1} parent=1 // pred_fallthru
      _
    %4579 = vsyncpa [#allocation7], 1
    %4580 = vsyncpa [#allocation10], 1
    %4581 = vsyncpa [#allocation13], 1
    %4582 = vsyncpa [#allocation8], 1

</llo_original>
